<compile_context>
chip_gen: v7x
topology: tpu7x:2x2x1
jax: 0.10.0
libtpu: 0.0.40
codegen_flags: <defaults>
</compile_context>

<pallas_src>
import functools

import numpy as np
import jax
import jax.numpy as jnp
from jax.experimental import pallas as pl
from jax.experimental.pallas import tpu as pltpu


def _round_up(x, m):
    return (x + m - 1) // m * m


# ---------------------------------------------------------------------------
# Pallas kernels
# ---------------------------------------------------------------------------
def _mm_bn_act_kernel(p_ref, w_ref, s_ref, b_ref, o_ref, *, act):
    # p: (tm, K) bf16   w: (K, Cp) bf16   s, b: (1, Cp) f32   o: (tm, Cp) f32
    acc = jnp.dot(p_ref[...], w_ref[...], preferred_element_type=jnp.float32)
    y = acc * s_ref[...] + b_ref[...]
    if act == "relu":
        y = jnp.maximum(y, 0.0)
    elif act == "sigmoid":
        y = jax.nn.sigmoid(y)
    o_ref[...] = y


def _matmul_bn_act(patches, layer, cout, act, *, tile_m=512):
    """Fused (im2col-patches @ prepacked-weights) * bn_scale + bn_bias -> act."""
    M, K = patches.shape
    w_bf, scale2, bias2 = layer["w"], layer["scale"], layer["bias"]
    cout_p = w_bf.shape[1]                       # already padded to 128 lanes

    # Row tiling: biggest tile that keeps the pipeline well under the VMEM
    # budget on every generation (v7x has only 64 MiB physical / 32 MiB scoped).
    tm = min(tile_m, _round_up(M, 8))
    M_p = _round_up(M, tm)
    if M_p != M:
        patches = jnp.pad(patches, ((0, M_p - M), (0, 0)))
    patches_bf = patches.astype(jnp.bfloat16)    # fast MXU operand path

    kernel = functools.partial(_mm_bn_act_kernel, act=act)
    out = pl.pallas_call(
        kernel,
        out_shape=jax.ShapeDtypeStruct((M_p, cout_p), jnp.float32),
        grid_spec=pltpu.PrefetchScalarGridSpec(
            num_scalar_prefetch=0,
            grid=(M_p // tm,),
            in_specs=[
                pl.BlockSpec((tm, K), lambda i: (i, 0)),      # row tile, pipelined
                pl.BlockSpec((K, cout_p), lambda i: (0, 0)),  # weights resident
                pl.BlockSpec((1, cout_p), lambda i: (0, 0)),  # bn scale resident
                pl.BlockSpec((1, cout_p), lambda i: (0, 0)),  # bn bias resident
            ],
            out_specs=pl.BlockSpec((tm, cout_p), lambda i: (i, 0)),
        ),
        compiler_params=pltpu.CompilerParams(
            dimension_semantics=("parallel",),   # shard row tiles across TCs (v7x)
            vmem_limit_bytes=32 * 1024 * 1024,   # explicit, safe on v5e/v6e/v7x
        ),
    )(patches_bf, w_bf, scale2, bias2)
    return out[:M, :cout]


def _bilinear_kernel(x_ref, ah_ref, awbd_ref, o_ref):
    # x: (Hi, N*Wi)  ah: (Ho, Hi)  awbd: (N*Wi, N*Wo) block-diag  o: (Ho, N*Wo)
    t = jnp.dot(ah_ref[...], x_ref[...], preferred_element_type=jnp.float32)
    o_ref[...] = jnp.dot(t, awbd_ref[...], preferred_element_type=jnp.float32)


def _bilinear_resize(x, out_h, out_w):
    # x: (N, Hi, Wi, 1) -> (N, out_h, out_w, 1), PyTorch align_corners=False.
    # One matmul pair; batch folded into the lane axis via a block-diagonal
    # width-resize matrix -> single launch, no per-batch mini-matmuls.
    N, Hi, Wi, _ = x.shape
    ah = jnp.asarray(_bilinear_matrix(out_h, Hi))                     # (Ho, Hi)
    aw = _bilinear_matrix(out_w, Wi)                                  # (Wo, Wi)
    aw_bd = jnp.asarray(np.kron(np.eye(N, dtype=np.float32), aw.T))   # (N*Wi, N*Wo)

    x2 = jnp.transpose(x.reshape(N, Hi, Wi), (1, 0, 2)).reshape(Hi, N * Wi)
    out = pl.pallas_call(
        _bilinear_kernel,
        out_shape=jax.ShapeDtypeStruct((out_h, N * out_w), jnp.float32),
        in_specs=[pl.BlockSpec(memory_space=pltpu.MemorySpace.VMEM)] * 3,
        out_specs=pl.BlockSpec(memory_space=pltpu.MemorySpace.VMEM),
    )(x2, ah, aw_bd)
    out = jnp.transpose(out.reshape(out_h, N, out_w), (1, 0, 2))
    return out.reshape(N, out_h, out_w, 1)


# ---------------------------------------------------------------------------
# Plain-JAX glue: im2col + layer wrappers
# ---------------------------------------------------------------------------
# TODO(synk): im2col is still materialized by XLA in HBM and consecutive SPP
# layers are separate pallas_calls; folding im2col into the kernel (tap grid
# with accumulator) and fusing spp1->spp2->spp3 in VMEM would cut HBM traffic
# and launch overhead further.
def _im2col(x, k, stride, pad):
    # x: (N, H, W, C) -> (N*Ho*Wo, k*k*C), K ordered (kh, kw, cin)
    N, H, W, C = x.shape
    xp = jnp.pad(x, ((0, 0), (pad, pad), (pad, pad), (0, 0)))
    Ho = (H + 2 * pad - k) // stride + 1
    Wo = (W + 2 * pad - k) // stride + 1
    cols = []
    for kh in range(k):
        for kw in range(k):
            cols.append(
                xp[:, kh:kh + (Ho - 1) * stride + 1:stride,
                      kw:kw + (Wo - 1) * stride + 1:stride, :])
    patches = jnp.concatenate(cols, axis=-1)
    return patches.reshape(N * Ho * Wo, k * k * C), N, Ho, Wo


def conv2d_bn_act(x, layer, cout, *, k, stride, pad, act):
    patches, N, Ho, Wo = _im2col(x, k, stride, pad)
    out = _matmul_bn_act(patches, layer, cout, act)
    return out.reshape(N, Ho, Wo, cout)


def convT2d_bn_act(x, layer, cout, *, act):
    # 4x4 / stride-2 / pad-1 transposed conv as ONE 3x3 stride-1 sub-pixel conv
    # (combined weight prepacked in prepare_params).
    N, H, W, _ = x.shape
    patches, _, _, _ = _im2col(x, 3, 1, 1)                   # (N*H*W, 9*cin)
    out = _matmul_bn_act(patches, layer, 4 * cout, act)      # (N*H*W, 4*cout)
    out = out.reshape(N, H, W, 2, 2, cout)
    out = jnp.transpose(out, (0, 1, 3, 2, 4, 5)).reshape(N, 2 * H, 2 * W, cout)
    return out


def _bilinear_matrix(out_size, in_size):
    scale = in_size / out_size
    j = np.arange(out_size, dtype=np.float64)
    src = np.maximum((j + 0.5) * scale - 0.5, 0.0)
    i0 = np.minimum(np.floor(src).astype(np.int64), in_size - 1)
    i1 = np.minimum(i0 + 1, in_size - 1)
    frac = src - i0
    A = np.zeros((out_size, in_size), dtype=np.float32)
    A[np.arange(out_size), i0] += (1.0 - frac)
    A[np.arange(out_size), i1] += frac
    return A


# ---------------------------------------------------------------------------
# Parameter init (PyTorch layout, eval-mode BN folded) + kernel-ready packing
# ---------------------------------------------------------------------------
def _fold_bn(conv_b, gamma, beta, mean, var, eps=1e-5):
    s = gamma / jnp.sqrt(var + eps)
    b = beta + (conv_b - mean) * s
    return s, b


def _conv_params(key, cin, cout, k, bn=True, transposed=False):
    kw_, kb, kg, kbe, km, kv = jax.random.split(key, 6)
    shape = (cin, cout, k, k) if transposed else (cout, cin, k, k)
    w = jax.random.normal(kw_, shape, jnp.float32) * 0.1
    b = jax.random.normal(kb, (cout,), jnp.float32) * 0.05
    if bn:
        gamma = 1.0 + 0.1 * jax.random.normal(kg, (cout,), jnp.float32)
        beta = 0.05 * jax.random.normal(kbe, (cout,), jnp.float32)
        mean = 0.05 * jax.random.normal(km, (cout,), jnp.float32)
        var = 0.5 + 0.2 * jnp.abs(jax.random.normal(kv, (cout,), jnp.float32))
        s, bias = _fold_bn(b, gamma, beta, mean, var)
    else:
        s = jnp.ones((cout,), jnp.float32)
        bias = b
    return {"w": w, "scale": s, "bias": bias}


def init_params(key, in_channels=1, out_channels=1):
    ks = jax.random.split(key, 9)
    return {
        "enc1": _conv_params(ks[0], in_channels, 16, 3),
        "enc2": _conv_params(ks[1], 16, 32, 3),
        "enc3": _conv_params(ks[2], 32, 64, 3),
        "dec1": _conv_params(ks[3], 64, 32, 4, transposed=True),
        "dec2": _conv_params(ks[4], 32, 16, 4, transposed=True),
        "dec3": _conv_params(ks[5], 16, out_channels, 3, bn=False),
        "spp1": _conv_params(ks[6], 64, 32, 3),
        "spp2": _conv_params(ks[7], 32, 16, 3),
        "spp3": _conv_params(ks[8], 16, 1, 3, bn=False),
    }


def _pack_layer(w2d, scale, bias):
    # Pad Cout to a lane-dense multiple of 128; bf16 weights, f32 BN terms.
    K, cout = w2d.shape
    cout_p = _round_up(cout, 128)
    if cout_p != cout:
        w2d = jnp.pad(w2d, ((0, 0), (0, cout_p - cout)))
        scale = jnp.pad(scale, (0, cout_p - cout))
        bias = jnp.pad(bias, (0, cout_p - cout))
    return {"w": w2d.astype(jnp.bfloat16),
            "scale": scale.reshape(1, cout_p).astype(jnp.float32),
            "bias": bias.reshape(1, cout_p).astype(jnp.float32)}


def _prep_conv(p):
    # PyTorch Conv2d weight (Cout, Cin, k, k) -> im2col weight (k*k*Cin, Cout).
    w = p["w"]
    cout, cin, k, _ = w.shape
    w2d = jnp.transpose(w, (2, 3, 1, 0)).reshape(k * k * cin, cout)
    return _pack_layer(w2d, p["scale"], p["bias"])


# Sub-pixel decomposition of the 4x4 / stride-2 / pad-1 transposed conv:
# output row 2m+rh only touches input rows {m-1, m} (rh=0) or {m, m+1} (rh=1);
# 3x3 stride-1 window offsets dh map onto transposed-kernel rows kh:
_SUBPIX_KH = {0: {0: 3, 1: 1}, 1: {1: 2, 2: 0}}  # parity -> {window offset: kh}


def _prep_convT(p):
    # PyTorch ConvTranspose2d weight (Cin, Cout, 4, 4) -> combined 3x3 weight
    # (9*Cin, 4*Cout) with output columns ordered (rh, rw, cout).
    w = np.asarray(p["w"])
    cin, cout, k, _ = w.shape
    assert k == 4
    w_comb = np.zeros((3, 3, cin, 2, 2, cout), np.float32)
    for rh in (0, 1):
        for rw in (0, 1):
            for dh, kh in _SUBPIX_KH[rh].items():
                for dw, kw_ in _SUBPIX_KH[rw].items():
                    w_comb[dh, dw, :, rh, rw, :] = w[:, :, kh, kw_]
    w2d = jnp.asarray(w_comb.reshape(9 * cin, 4 * cout))
    s4 = jnp.tile(p["scale"], 4)
    b4 = jnp.tile(p["bias"], 4)
    return _pack_layer(w2d, s4, b4)


def prepare_params(params):
    """One-time (outside jit) repack of all weights into kernel-ready form."""
    out = {}
    for name in ("enc1", "enc2", "enc3", "dec3", "spp1", "spp2", "spp3"):
        out[name] = _prep_conv(params[name])
    for name in ("dec1", "dec2"):
        out[name] = _prep_convT(params[name])
    return out


# ---------------------------------------------------------------------------
# Forward pass (matches SE_SPP_Net.forward, BatchNorm in eval mode)
# ---------------------------------------------------------------------------
@jax.jit
def se_spp_net_forward(x_nchw, kp):
    x = jnp.transpose(x_nchw, (0, 2, 3, 1))  # NCHW -> NHWC

    # encoder
    e = conv2d_bn_act(x, kp["enc1"], 16, k=3, stride=1, pad=1, act="relu")
    e = conv2d_bn_act(e, kp["enc2"], 32, k=3, stride=2, pad=1, act="relu")
    enc = conv2d_bn_act(e, kp["enc3"], 64, k=3, stride=2, pad=1, act="relu")

    # decoder
    d = convT2d_bn_act(enc, kp["dec1"], 32, act="relu")
    d = convT2d_bn_act(d, kp["dec2"], 16, act="relu")
    dec_out = conv2d_bn_act(d, kp["dec3"], 1, k=3, stride=1, pad=1, act="sigmoid")

    # spp branch + bilinear upsample to decoder resolution
    s = conv2d_bn_act(enc, kp["spp1"], 32, k=3, stride=1, pad=1, act="relu")
    s = conv2d_bn_act(s, kp["spp2"], 16, k=3, stride=1, pad=1, act="relu")
    s = conv2d_bn_act(s, kp["spp3"], 1, k=3, stride=1, pad=1, act="sigmoid")
    spp_out = _bilinear_resize(s, dec_out.shape[1], dec_out.shape[2])

    # back to NCHW
    return (jnp.transpose(dec_out, (0, 3, 1, 2)),
            jnp.transpose(spp_out, (0, 3, 1, 2)))


if __name__ == "__main__":
    root = jax.random.PRNGKey(0)
    kparam, kx = jax.random.split(root)
    raw_params = init_params(kparam, in_channels=1, out_channels=1)
    kernel_params = prepare_params(raw_params)      # one-time, outside jit
    x = jax.random.normal(kx, (2, 1, 16, 16), jnp.float32)

    dec_out, spp_out = se_spp_net_forward(x, kernel_params)
    dec_out = jax.block_until_ready(dec_out)
    spp_out = jax.block_until_ready(spp_out)

    assert dec_out.shape == (2, 1, 16, 16), dec_out.shape
    assert spp_out.shape == (2, 1, 16, 16), spp_out.shape
    assert bool(jnp.all(jnp.isfinite(dec_out))) and bool(jnp.all(jnp.isfinite(spp_out)))
    # sigmoid outputs must lie in [0, 1]
    assert bool(jnp.all((dec_out >= 0) & (dec_out <= 1)))
    assert bool(jnp.all((spp_out >= 0) & (spp_out <= 1)))
    print("KERNEL_OK")
</pallas_src>

<mosaic_0001>
module attributes {stable_mosaic.version = 11 : i64} {
  func.func @_mm_bn_act_kernel(%arg0: i32, %arg1: memref<512x9xbf16, #tpu.memory_space<vmem>>, %arg2: memref<9x128xbf16, #tpu.memory_space<vmem>>, %arg3: memref<1x128xf32, #tpu.memory_space<vmem>>, %arg4: memref<1x128xf32, #tpu.memory_space<vmem>>, %arg5: memref<512x128xf32, #tpu.memory_space<vmem>>) attributes {dimension_semantics = [#tpu.dimension_semantics<parallel>], iteration_bounds = array<i64: 1>, scalar_prefetch = 0 : i64, scratch_operands = 0 : i64, tpu.core_type = #tpu.core_type<tc>, window_params = [{transform_indices = @transform_0, window_bounds = array<i64: 512, 9>}, {pipeline_mode = #tpu.pipeline_mode<synchronous>, transform_indices = @transform_1, window_bounds = array<i64: 9, 128>}, {pipeline_mode = #tpu.pipeline_mode<synchronous>, transform_indices = @transform_2, window_bounds = array<i64: 1, 128>}, {pipeline_mode = #tpu.pipeline_mode<synchronous>, transform_indices = @transform_3, window_bounds = array<i64: 1, 128>}, {transform_indices = @transform_4, window_bounds = array<i64: 512, 128>}]} {
    %c0 = arith.constant 0 : index
    %c0_0 = arith.constant 0 : index
    %0 = vector.load %arg1[%c0, %c0_0] : memref<512x9xbf16, #tpu.memory_space<vmem>>, vector<512x9xbf16>
    %c0_1 = arith.constant 0 : index
    %c0_2 = arith.constant 0 : index
    %1 = vector.load %arg2[%c0_1, %c0_2] : memref<9x128xbf16, #tpu.memory_space<vmem>>, vector<9x128xbf16>
    %cst = arith.constant dense<0.000000e+00> : vector<512x128xf32>
    %2 = tpu.matmul %0, %1, %cst {dimension_numbers = #tpu.dot_dimension_numbers<[1], [0], [0], [1], [0, 0, 1, 1], [], []>} : vector<512x9xbf16>, vector<9x128xbf16>, vector<512x128xf32> -> vector<512x128xf32>
    %c0_3 = arith.constant 0 : index
    %c0_4 = arith.constant 0 : index
    %3 = vector.load %arg3[%c0_3, %c0_4] : memref<1x128xf32, #tpu.memory_space<vmem>>, vector<1x128xf32>
    %4 = vector.broadcast %3 : vector<1x128xf32> to vector<512x128xf32>
    %5 = arith.mulf %2, %4 : vector<512x128xf32>
    %c0_5 = arith.constant 0 : index
    %c0_6 = arith.constant 0 : index
    %6 = vector.load %arg4[%c0_5, %c0_6] : memref<1x128xf32, #tpu.memory_space<vmem>>, vector<1x128xf32>
    %7 = vector.broadcast %6 : vector<1x128xf32> to vector<512x128xf32>
    %8 = arith.addf %5, %7 : vector<512x128xf32>
    %cst_7 = arith.constant 0.000000e+00 : f32
    %9 = vector.broadcast %cst_7 : f32 to vector<512x128xf32>
    %10 = arith.maximumf %8, %9 : vector<512x128xf32>
    %c0_8 = arith.constant 0 : index
    %c0_9 = arith.constant 0 : index
    %11 = vector.load %arg5[%c0_8, %c0_9] : memref<512x128xf32, #tpu.memory_space<vmem>>, vector<512x128xf32>
    tpu.vector_store %arg5[%c0_8, %c0_9], %10 {strides = array<i32>} : memref<512x128xf32, #tpu.memory_space<vmem>>, vector<512x128xf32>,
    return
  }
  func.func @transform_0(%arg0: i32) -> (i32, i32) {
    %c0_i32 = arith.constant 0 : i32
    %c0_i32_0 = arith.constant 0 : i32
    return %arg0, %c0_i32 : i32, i32
  }
  func.func @transform_1(%arg0: i32) -> (i32, i32) {
    %c0_i32 = arith.constant 0 : i32
    %c0_i32_0 = arith.constant 0 : i32
    %c0_i32_1 = arith.constant 0 : i32
    return %c0_i32, %c0_i32_0 : i32, i32
  }
  func.func @transform_2(%arg0: i32) -> (i32, i32) {
    %c0_i32 = arith.constant 0 : i32
    %c0_i32_0 = arith.constant 0 : i32
    %c0_i32_1 = arith.constant 0 : i32
    return %c0_i32, %c0_i32_0 : i32, i32
  }
  func.func @transform_3(%arg0: i32) -> (i32, i32) {
    %c0_i32 = arith.constant 0 : i32
    %c0_i32_0 = arith.constant 0 : i32
    %c0_i32_1 = arith.constant 0 : i32
    return %c0_i32, %c0_i32_0 : i32, i32
  }
  func.func @transform_4(%arg0: i32) -> (i32, i32) {
    %c0_i32 = arith.constant 0 : i32
    %c0_i32_0 = arith.constant 0 : i32
    return %arg0, %c0_i32 : i32, i32
  }
}

module attributes {stable_mosaic.version = 11 : i64} {
  func.func @_mm_bn_act_kernel(%arg0: i32, %arg1: memref<128x144xbf16, #tpu.memory_space<vmem>>, %arg2: memref<144x128xbf16, #tpu.memory_space<vmem>>, %arg3: memref<1x128xf32, #tpu.memory_space<vmem>>, %arg4: memref<1x128xf32, #tpu.memory_space<vmem>>, %arg5: memref<128x128xf32, #tpu.memory_space<vmem>>) attributes {dimension_semantics = [#tpu.dimension_semantics<parallel>], iteration_bounds = array<i64: 1>, scalar_prefetch = 0 : i64, scratch_operands = 0 : i64, tpu.core_type = #tpu.core_type<tc>, window_params = [{transform_indices = @transform_0, window_bounds = array<i64: 128, 144>}, {pipeline_mode = #tpu.pipeline_mode<synchronous>, transform_indices = @transform_1, window_bounds = array<i64: 144, 128>}, {pipeline_mode = #tpu.pipeline_mode<synchronous>, transform_indices = @transform_2, window_bounds = array<i64: 1, 128>}, {pipeline_mode = #tpu.pipeline_mode<synchronous>, transform_indices = @transform_3, window_bounds = array<i64: 1, 128>}, {transform_indices = @transform_4, window_bounds = array<i64: 128, 128>}]} {
    %c0 = arith.constant 0 : index
    %c0_0 = arith.constant 0 : index
    %0 = vector.load %arg1[%c0, %c0_0] : memref<128x144xbf16, #tpu.memory_space<vmem>>, vector<128x144xbf16>
    %c0_1 = arith.constant 0 : index
    %c0_2 = arith.constant 0 : index
    %1 = vector.load %arg2[%c0_1, %c0_2] : memref<144x128xbf16, #tpu.memory_space<vmem>>, vector<144x128xbf16>
    %cst = arith.constant dense<0.000000e+00> : vector<128x128xf32>
    %2 = tpu.matmul %0, %1, %cst {dimension_numbers = #tpu.dot_dimension_numbers<[1], [0], [0], [1], [0, 0, 1, 1], [], []>} : vector<128x144xbf16>, vector<144x128xbf16>, vector<128x128xf32> -> vector<128x128xf32>
    %c0_3 = arith.constant 0 : index
    %c0_4 = arith.constant 0 : index
    %3 = vector.load %arg3[%c0_3, %c0_4] : memref<1x128xf32, #tpu.memory_space<vmem>>, vector<1x128xf32>
    %4 = vector.broadcast %3 : vector<1x128xf32> to vector<128x128xf32>
    %5 = arith.mulf %2, %4 : vector<128x128xf32>
    %c0_5 = arith.constant 0 : index
    %c0_6 = arith.constant 0 : index
    %6 = vector.load %arg4[%c0_5, %c0_6] : memref<1x128xf32, #tpu.memory_space<vmem>>, vector<1x128xf32>
    %7 = vector.broadcast %6 : vector<1x128xf32> to vector<128x128xf32>
    %8 = arith.addf %5, %7 : vector<128x128xf32>
    %cst_7 = arith.constant 0.000000e+00 : f32
    %9 = vector.broadcast %cst_7 : f32 to vector<128x128xf32>
    %10 = arith.maximumf %8, %9 : vector<128x128xf32>
    %c0_8 = arith.constant 0 : index
    %c0_9 = arith.constant 0 : index
    %11 = vector.load %arg5[%c0_8, %c0_9] : memref<128x128xf32, #tpu.memory_space<vmem>>, vector<128x128xf32>
    tpu.vector_store %arg5[%c0_8, %c0_9], %10 {strides = array<i32>} : memref<128x128xf32, #tpu.memory_space<vmem>>, vector<128x128xf32>,
    return
  }
  func.func @transform_0(%arg0: i32) -> (i32, i32) {
    %c0_i32 = arith.constant 0 : i32
    %c0_i32_0 = arith.constant 0 : i32
    return %arg0, %c0_i32 : i32, i32
  }
  func.func @transform_1(%arg0: i32) -> (i32, i32) {
    %c0_i32 = arith.constant 0 : i32
    %c0_i32_0 = arith.constant 0 : i32
    %c0_i32_1 = arith.constant 0 : i32
    return %c0_i32, %c0_i32_0 : i32, i32
  }
  func.func @transform_2(%arg0: i32) -> (i32, i32) {
    %c0_i32 = arith.constant 0 : i32
    %c0_i32_0 = arith.constant 0 : i32
    %c0_i32_1 = arith.constant 0 : i32
    return %c0_i32, %c0_i32_0 : i32, i32
  }
  func.func @transform_3(%arg0: i32) -> (i32, i32) {
    %c0_i32 = arith.constant 0 : i32
    %c0_i32_0 = arith.constant 0 : i32
    %c0_i32_1 = arith.constant 0 : i32
    return %c0_i32, %c0_i32_0 : i32, i32
  }
  func.func @transform_4(%arg0: i32) -> (i32, i32) {
    %c0_i32 = arith.constant 0 : i32
    %c0_i32_0 = arith.constant 0 : i32
    return %arg0, %c0_i32 : i32, i32
  }
}

module attributes {stable_mosaic.version = 11 : i64} {
  func.func @_mm_bn_act_kernel(%arg0: i32, %arg1: memref<32x288xbf16, #tpu.memory_space<vmem>>, %arg2: memref<288x128xbf16, #tpu.memory_space<vmem>>, %arg3: memref<1x128xf32, #tpu.memory_space<vmem>>, %arg4: memref<1x128xf32, #tpu.memory_space<vmem>>, %arg5: memref<32x128xf32, #tpu.memory_space<vmem>>) attributes {dimension_semantics = [#tpu.dimension_semantics<parallel>], iteration_bounds = array<i64: 1>, scalar_prefetch = 0 : i64, scratch_operands = 0 : i64, tpu.core_type = #tpu.core_type<tc>, window_params = [{transform_indices = @transform_0, window_bounds = array<i64: 32, 288>}, {pipeline_mode = #tpu.pipeline_mode<synchronous>, transform_indices = @transform_1, window_bounds = array<i64: 288, 128>}, {pipeline_mode = #tpu.pipeline_mode<synchronous>, transform_indices = @transform_2, window_bounds = array<i64: 1, 128>}, {pipeline_mode = #tpu.pipeline_mode<synchronous>, transform_indices = @transform_3, window_bounds = array<i64: 1, 128>}, {transform_indices = @transform_4, window_bounds = array<i64: 32, 128>}]} {
    %c0 = arith.constant 0 : index
    %c0_0 = arith.constant 0 : index
    %0 = vector.load %arg1[%c0, %c0_0] : memref<32x288xbf16, #tpu.memory_space<vmem>>, vector<32x288xbf16>
    %c0_1 = arith.constant 0 : index
    %c0_2 = arith.constant 0 : index
    %1 = vector.load %arg2[%c0_1, %c0_2] : memref<288x128xbf16, #tpu.memory_space<vmem>>, vector<288x128xbf16>
    %cst = arith.constant dense<0.000000e+00> : vector<32x128xf32>
    %2 = tpu.matmul %0, %1, %cst {dimension_numbers = #tpu.dot_dimension_numbers<[1], [0], [0], [1], [0, 0, 1, 1], [], []>} : vector<32x288xbf16>, vector<288x128xbf16>, vector<32x128xf32> -> vector<32x128xf32>
    %c0_3 = arith.constant 0 : index
    %c0_4 = arith.constant 0 : index
    %3 = vector.load %arg3[%c0_3, %c0_4] : memref<1x128xf32, #tpu.memory_space<vmem>>, vector<1x128xf32>
    %4 = vector.broadcast %3 : vector<1x128xf32> to vector<32x128xf32>
    %5 = arith.mulf %2, %4 : vector<32x128xf32>
    %c0_5 = arith.constant 0 : index
    %c0_6 = arith.constant 0 : index
    %6 = vector.load %arg4[%c0_5, %c0_6] : memref<1x128xf32, #tpu.memory_space<vmem>>, vector<1x128xf32>
    %7 = vector.broadcast %6 : vector<1x128xf32> to vector<32x128xf32>
    %8 = arith.addf %5, %7 : vector<32x128xf32>
    %cst_7 = arith.constant 0.000000e+00 : f32
    %9 = vector.broadcast %cst_7 : f32 to vector<32x128xf32>
    %10 = arith.maximumf %8, %9 : vector<32x128xf32>
    %c0_8 = arith.constant 0 : index
    %c0_9 = arith.constant 0 : index
    %11 = vector.load %arg5[%c0_8, %c0_9] : memref<32x128xf32, #tpu.memory_space<vmem>>, vector<32x128xf32>
    tpu.vector_store %arg5[%c0_8, %c0_9], %10 {strides = array<i32>} : memref<32x128xf32, #tpu.memory_space<vmem>>, vector<32x128xf32>,
    return
  }
  func.func @transform_0(%arg0: i32) -> (i32, i32) {
    %c0_i32 = arith.constant 0 : i32
    %c0_i32_0 = arith.constant 0 : i32
    return %arg0, %c0_i32 : i32, i32
  }
  func.func @transform_1(%arg0: i32) -> (i32, i32) {
    %c0_i32 = arith.constant 0 : i32
    %c0_i32_0 = arith.constant 0 : i32
    %c0_i32_1 = arith.constant 0 : i32
    return %c0_i32, %c0_i32_0 : i32, i32
  }
  func.func @transform_2(%arg0: i32) -> (i32, i32) {
    %c0_i32 = arith.constant 0 : i32
    %c0_i32_0 = arith.constant 0 : i32
    %c0_i32_1 = arith.constant 0 : i32
    return %c0_i32, %c0_i32_0 : i32, i32
  }
  func.func @transform_3(%arg0: i32) -> (i32, i32) {
    %c0_i32 = arith.constant 0 : i32
    %c0_i32_0 = arith.constant 0 : i32
    %c0_i32_1 = arith.constant 0 : i32
    return %c0_i32, %c0_i32_0 : i32, i32
  }
  func.func @transform_4(%arg0: i32) -> (i32, i32) {
    %c0_i32 = arith.constant 0 : i32
    %c0_i32_0 = arith.constant 0 : i32
    return %arg0, %c0_i32 : i32, i32
  }
}

module attributes {stable_mosaic.version = 11 : i64} {
  func.func @_mm_bn_act_kernel(%arg0: i32, %arg1: memref<32x576xbf16, #tpu.memory_space<vmem>>, %arg2: memref<576x128xbf16, #tpu.memory_space<vmem>>, %arg3: memref<1x128xf32, #tpu.memory_space<vmem>>, %arg4: memref<1x128xf32, #tpu.memory_space<vmem>>, %arg5: memref<32x128xf32, #tpu.memory_space<vmem>>) attributes {dimension_semantics = [#tpu.dimension_semantics<parallel>], iteration_bounds = array<i64: 1>, scalar_prefetch = 0 : i64, scratch_operands = 0 : i64, tpu.core_type = #tpu.core_type<tc>, window_params = [{transform_indices = @transform_0, window_bounds = array<i64: 32, 576>}, {pipeline_mode = #tpu.pipeline_mode<synchronous>, transform_indices = @transform_1, window_bounds = array<i64: 576, 128>}, {pipeline_mode = #tpu.pipeline_mode<synchronous>, transform_indices = @transform_2, window_bounds = array<i64: 1, 128>}, {pipeline_mode = #tpu.pipeline_mode<synchronous>, transform_indices = @transform_3, window_bounds = array<i64: 1, 128>}, {transform_indices = @transform_4, window_bounds = array<i64: 32, 128>}]} {
    %c0 = arith.constant 0 : index
    %c0_0 = arith.constant 0 : index
    %0 = vector.load %arg1[%c0, %c0_0] : memref<32x576xbf16, #tpu.memory_space<vmem>>, vector<32x576xbf16>
    %c0_1 = arith.constant 0 : index
    %c0_2 = arith.constant 0 : index
    %1 = vector.load %arg2[%c0_1, %c0_2] : memref<576x128xbf16, #tpu.memory_space<vmem>>, vector<576x128xbf16>
    %cst = arith.constant dense<0.000000e+00> : vector<32x128xf32>
    %2 = tpu.matmul %0, %1, %cst {dimension_numbers = #tpu.dot_dimension_numbers<[1], [0], [0], [1], [0, 0, 1, 1], [], []>} : vector<32x576xbf16>, vector<576x128xbf16>, vector<32x128xf32> -> vector<32x128xf32>
    %c0_3 = arith.constant 0 : index
    %c0_4 = arith.constant 0 : index
    %3 = vector.load %arg3[%c0_3, %c0_4] : memref<1x128xf32, #tpu.memory_space<vmem>>, vector<1x128xf32>
    %4 = vector.broadcast %3 : vector<1x128xf32> to vector<32x128xf32>
    %5 = arith.mulf %2, %4 : vector<32x128xf32>
    %c0_5 = arith.constant 0 : index
    %c0_6 = arith.constant 0 : index
    %6 = vector.load %arg4[%c0_5, %c0_6] : memref<1x128xf32, #tpu.memory_space<vmem>>, vector<1x128xf32>
    %7 = vector.broadcast %6 : vector<1x128xf32> to vector<32x128xf32>
    %8 = arith.addf %5, %7 : vector<32x128xf32>
    %cst_7 = arith.constant 0.000000e+00 : f32
    %9 = vector.broadcast %cst_7 : f32 to vector<32x128xf32>
    %10 = arith.maximumf %8, %9 : vector<32x128xf32>
    %c0_8 = arith.constant 0 : index
    %c0_9 = arith.constant 0 : index
    %11 = vector.load %arg5[%c0_8, %c0_9] : memref<32x128xf32, #tpu.memory_space<vmem>>, vector<32x128xf32>
    tpu.vector_store %arg5[%c0_8, %c0_9], %10 {strides = array<i32>} : memref<32x128xf32, #tpu.memory_space<vmem>>, vector<32x128xf32>,
    return
  }
  func.func @transform_0(%arg0: i32) -> (i32, i32) {
    %c0_i32 = arith.constant 0 : i32
    %c0_i32_0 = arith.constant 0 : i32
    return %arg0, %c0_i32 : i32, i32
  }
  func.func @transform_1(%arg0: i32) -> (i32, i32) {
    %c0_i32 = arith.constant 0 : i32
    %c0_i32_0 = arith.constant 0 : i32
    %c0_i32_1 = arith.constant 0 : i32
    return %c0_i32, %c0_i32_0 : i32, i32
  }
  func.func @transform_2(%arg0: i32) -> (i32, i32) {
    %c0_i32 = arith.constant 0 : i32
    %c0_i32_0 = arith.constant 0 : i32
    %c0_i32_1 = arith.constant 0 : i32
    return %c0_i32, %c0_i32_0 : i32, i32
  }
  func.func @transform_3(%arg0: i32) -> (i32, i32) {
    %c0_i32 = arith.constant 0 : i32
    %c0_i32_0 = arith.constant 0 : i32
    %c0_i32_1 = arith.constant 0 : i32
    return %c0_i32, %c0_i32_0 : i32, i32
  }
  func.func @transform_4(%arg0: i32) -> (i32, i32) {
    %c0_i32 = arith.constant 0 : i32
    %c0_i32_0 = arith.constant 0 : i32
    return %arg0, %c0_i32 : i32, i32
  }
}

module attributes {stable_mosaic.version = 11 : i64} {
  func.func @_mm_bn_act_kernel(%arg0: i32, %arg1: memref<32x144xbf16, #tpu.memory_space<vmem>>, %arg2: memref<144x128xbf16, #tpu.memory_space<vmem>>, %arg3: memref<1x128xf32, #tpu.memory_space<vmem>>, %arg4: memref<1x128xf32, #tpu.memory_space<vmem>>, %arg5: memref<32x128xf32, #tpu.memory_space<vmem>>) attributes {dimension_semantics = [#tpu.dimension_semantics<parallel>], iteration_bounds = array<i64: 1>, scalar_prefetch = 0 : i64, scratch_operands = 0 : i64, tpu.core_type = #tpu.core_type<tc>, window_params = [{transform_indices = @transform_0, window_bounds = array<i64: 32, 144>}, {pipeline_mode = #tpu.pipeline_mode<synchronous>, transform_indices = @transform_1, window_bounds = array<i64: 144, 128>}, {pipeline_mode = #tpu.pipeline_mode<synchronous>, transform_indices = @transform_2, window_bounds = array<i64: 1, 128>}, {pipeline_mode = #tpu.pipeline_mode<synchronous>, transform_indices = @transform_3, window_bounds = array<i64: 1, 128>}, {transform_indices = @transform_4, window_bounds = array<i64: 32, 128>}]} {
    %c0 = arith.constant 0 : index
    %c0_0 = arith.constant 0 : index
    %0 = vector.load %arg1[%c0, %c0_0] : memref<32x144xbf16, #tpu.memory_space<vmem>>, vector<32x144xbf16>
    %c0_1 = arith.constant 0 : index
    %c0_2 = arith.constant 0 : index
    %1 = vector.load %arg2[%c0_1, %c0_2] : memref<144x128xbf16, #tpu.memory_space<vmem>>, vector<144x128xbf16>
    %cst = arith.constant dense<0.000000e+00> : vector<32x128xf32>
    %2 = tpu.matmul %0, %1, %cst {dimension_numbers = #tpu.dot_dimension_numbers<[1], [0], [0], [1], [0, 0, 1, 1], [], []>} : vector<32x144xbf16>, vector<144x128xbf16>, vector<32x128xf32> -> vector<32x128xf32>
    %c0_3 = arith.constant 0 : index
    %c0_4 = arith.constant 0 : index
    %3 = vector.load %arg3[%c0_3, %c0_4] : memref<1x128xf32, #tpu.memory_space<vmem>>, vector<1x128xf32>
    %4 = vector.broadcast %3 : vector<1x128xf32> to vector<32x128xf32>
    %5 = arith.mulf %2, %4 : vector<32x128xf32>
    %c0_5 = arith.constant 0 : index
    %c0_6 = arith.constant 0 : index
    %6 = vector.load %arg4[%c0_5, %c0_6] : memref<1x128xf32, #tpu.memory_space<vmem>>, vector<1x128xf32>
    %7 = vector.broadcast %6 : vector<1x128xf32> to vector<32x128xf32>
    %8 = arith.addf %5, %7 : vector<32x128xf32>
    %9 = arith.negf %8 : vector<32x128xf32>
    %10 = math.exp %9 : vector<32x128xf32>
    %cst_7 = arith.constant 1.000000e+00 : f32
    %11 = vector.broadcast %cst_7 : f32 to vector<32x128xf32>
    %12 = arith.addf %11, %10 : vector<32x128xf32>
    %13 = arith.divf %11, %12 : vector<32x128xf32>
    %c0_8 = arith.constant 0 : index
    %c0_9 = arith.constant 0 : index
    %14 = vector.load %arg5[%c0_8, %c0_9] : memref<32x128xf32, #tpu.memory_space<vmem>>, vector<32x128xf32>
    tpu.vector_store %arg5[%c0_8, %c0_9], %13 {strides = array<i32>} : memref<32x128xf32, #tpu.memory_space<vmem>>, vector<32x128xf32>,
    return
  }
  func.func @transform_0(%arg0: i32) -> (i32, i32) {
    %c0_i32 = arith.constant 0 : i32
    %c0_i32_0 = arith.constant 0 : i32
    return %arg0, %c0_i32 : i32, i32
  }
  func.func @transform_1(%arg0: i32) -> (i32, i32) {
    %c0_i32 = arith.constant 0 : i32
    %c0_i32_0 = arith.constant 0 : i32
    %c0_i32_1 = arith.constant 0 : i32
    return %c0_i32, %c0_i32_0 : i32, i32
  }
  func.func @transform_2(%arg0: i32) -> (i32, i32) {
    %c0_i32 = arith.constant 0 : i32
    %c0_i32_0 = arith.constant 0 : i32
    %c0_i32_1 = arith.constant 0 : i32
    return %c0_i32, %c0_i32_0 : i32, i32
  }
  func.func @transform_3(%arg0: i32) -> (i32, i32) {
    %c0_i32 = arith.constant 0 : i32
    %c0_i32_0 = arith.constant 0 : i32
    %c0_i32_1 = arith.constant 0 : i32
    return %c0_i32, %c0_i32_0 : i32, i32
  }
  func.func @transform_4(%arg0: i32) -> (i32, i32) {
    %c0_i32 = arith.constant 0 : i32
    %c0_i32_0 = arith.constant 0 : i32
    return %arg0, %c0_i32 : i32, i32
  }
}

module attributes {stable_mosaic.version = 11 : i64} {
  func.func @_bilinear_kernel(%arg0: memref<4x8xf32, #tpu.memory_space<vmem>>, %arg1: memref<16x4xf32, #tpu.memory_space<vmem>>, %arg2: memref<8x32xf32, #tpu.memory_space<vmem>>, %arg3: memref<16x32xf32, #tpu.memory_space<vmem>>) attributes {dimension_semantics = [], scalar_prefetch = 0 : i64, scratch_operands = 0 : i64, tpu.core_type = #tpu.core_type<tc>} {
    %c0 = arith.constant 0 : index
    %c0_0 = arith.constant 0 : index
    %0 = vector.load %arg1[%c0, %c0_0] : memref<16x4xf32, #tpu.memory_space<vmem>>, vector<16x4xf32>
    %c0_1 = arith.constant 0 : index
    %c0_2 = arith.constant 0 : index
    %1 = vector.load %arg0[%c0_1, %c0_2] : memref<4x8xf32, #tpu.memory_space<vmem>>, vector<4x8xf32>
    %cst = arith.constant dense<0.000000e+00> : vector<16x8xf32>
    %2 = tpu.matmul %0, %1, %cst {dimension_numbers = #tpu.dot_dimension_numbers<[1], [0], [0], [1], [0, 0, 1, 1], [], []>} : vector<16x4xf32>, vector<4x8xf32>, vector<16x8xf32> -> vector<16x8xf32>
    %c0_3 = arith.constant 0 : index
    %c0_4 = arith.constant 0 : index
    %3 = vector.load %arg2[%c0_3, %c0_4] : memref<8x32xf32, #tpu.memory_space<vmem>>, vector<8x32xf32>
    %cst_5 = arith.constant dense<0.000000e+00> : vector<16x32xf32>
    %4 = tpu.matmul %2, %3, %cst_5 {dimension_numbers = #tpu.dot_dimension_numbers<[1], [0], [0], [1], [0, 0, 1, 1], [], []>} : vector<16x8xf32>, vector<8x32xf32>, vector<16x32xf32> -> vector<16x32xf32>
    %c0_6 = arith.constant 0 : index
    %c0_7 = arith.constant 0 : index
    %5 = vector.load %arg3[%c0_6, %c0_7] : memref<16x32xf32, #tpu.memory_space<vmem>>, vector<16x32xf32>
    tpu.vector_store %arg3[%c0_6, %c0_7], %4 {strides = array<i32>} : memref<16x32xf32, #tpu.memory_space<vmem>>, vector<16x32xf32>,
    return
  }
}

module attributes {stable_mosaic.version = 11 : i64} {
  func.func @_mm_bn_act_kernel(%arg0: i32, %arg1: memref<128x288xbf16, #tpu.memory_space<vmem>>, %arg2: memref<288x128xbf16, #tpu.memory_space<vmem>>, %arg3: memref<1x128xf32, #tpu.memory_space<vmem>>, %arg4: memref<1x128xf32, #tpu.memory_space<vmem>>, %arg5: memref<128x128xf32, #tpu.memory_space<vmem>>) attributes {dimension_semantics = [#tpu.dimension_semantics<parallel>], iteration_bounds = array<i64: 1>, scalar_prefetch = 0 : i64, scratch_operands = 0 : i64, tpu.core_type = #tpu.core_type<tc>, window_params = [{transform_indices = @transform_0, window_bounds = array<i64: 128, 288>}, {pipeline_mode = #tpu.pipeline_mode<synchronous>, transform_indices = @transform_1, window_bounds = array<i64: 288, 128>}, {pipeline_mode = #tpu.pipeline_mode<synchronous>, transform_indices = @transform_2, window_bounds = array<i64: 1, 128>}, {pipeline_mode = #tpu.pipeline_mode<synchronous>, transform_indices = @transform_3, window_bounds = array<i64: 1, 128>}, {transform_indices = @transform_4, window_bounds = array<i64: 128, 128>}]} {
    %c0 = arith.constant 0 : index
    %c0_0 = arith.constant 0 : index
    %0 = vector.load %arg1[%c0, %c0_0] : memref<128x288xbf16, #tpu.memory_space<vmem>>, vector<128x288xbf16>
    %c0_1 = arith.constant 0 : index
    %c0_2 = arith.constant 0 : index
    %1 = vector.load %arg2[%c0_1, %c0_2] : memref<288x128xbf16, #tpu.memory_space<vmem>>, vector<288x128xbf16>
    %cst = arith.constant dense<0.000000e+00> : vector<128x128xf32>
    %2 = tpu.matmul %0, %1, %cst {dimension_numbers = #tpu.dot_dimension_numbers<[1], [0], [0], [1], [0, 0, 1, 1], [], []>} : vector<128x288xbf16>, vector<288x128xbf16>, vector<128x128xf32> -> vector<128x128xf32>
    %c0_3 = arith.constant 0 : index
    %c0_4 = arith.constant 0 : index
    %3 = vector.load %arg3[%c0_3, %c0_4] : memref<1x128xf32, #tpu.memory_space<vmem>>, vector<1x128xf32>
    %4 = vector.broadcast %3 : vector<1x128xf32> to vector<128x128xf32>
    %5 = arith.mulf %2, %4 : vector<128x128xf32>
    %c0_5 = arith.constant 0 : index
    %c0_6 = arith.constant 0 : index
    %6 = vector.load %arg4[%c0_5, %c0_6] : memref<1x128xf32, #tpu.memory_space<vmem>>, vector<1x128xf32>
    %7 = vector.broadcast %6 : vector<1x128xf32> to vector<128x128xf32>
    %8 = arith.addf %5, %7 : vector<128x128xf32>
    %cst_7 = arith.constant 0.000000e+00 : f32
    %9 = vector.broadcast %cst_7 : f32 to vector<128x128xf32>
    %10 = arith.maximumf %8, %9 : vector<128x128xf32>
    %c0_8 = arith.constant 0 : index
    %c0_9 = arith.constant 0 : index
    %11 = vector.load %arg5[%c0_8, %c0_9] : memref<128x128xf32, #tpu.memory_space<vmem>>, vector<128x128xf32>
    tpu.vector_store %arg5[%c0_8, %c0_9], %10 {strides = array<i32>} : memref<128x128xf32, #tpu.memory_space<vmem>>, vector<128x128xf32>,
    return
  }
  func.func @transform_0(%arg0: i32) -> (i32, i32) {
    %c0_i32 = arith.constant 0 : i32
    %c0_i32_0 = arith.constant 0 : i32
    return %arg0, %c0_i32 : i32, i32
  }
  func.func @transform_1(%arg0: i32) -> (i32, i32) {
    %c0_i32 = arith.constant 0 : i32
    %c0_i32_0 = arith.constant 0 : i32
    %c0_i32_1 = arith.constant 0 : i32
    return %c0_i32, %c0_i32_0 : i32, i32
  }
  func.func @transform_2(%arg0: i32) -> (i32, i32) {
    %c0_i32 = arith.constant 0 : i32
    %c0_i32_0 = arith.constant 0 : i32
    %c0_i32_1 = arith.constant 0 : i32
    return %c0_i32, %c0_i32_0 : i32, i32
  }
  func.func @transform_3(%arg0: i32) -> (i32, i32) {
    %c0_i32 = arith.constant 0 : i32
    %c0_i32_0 = arith.constant 0 : i32
    %c0_i32_1 = arith.constant 0 : i32
    return %c0_i32, %c0_i32_0 : i32, i32
  }
  func.func @transform_4(%arg0: i32) -> (i32, i32) {
    %c0_i32 = arith.constant 0 : i32
    %c0_i32_0 = arith.constant 0 : i32
    return %arg0, %c0_i32 : i32, i32
  }
}

module attributes {stable_mosaic.version = 11 : i64} {
  func.func @_mm_bn_act_kernel(%arg0: i32, %arg1: memref<512x144xbf16, #tpu.memory_space<vmem>>, %arg2: memref<144x128xbf16, #tpu.memory_space<vmem>>, %arg3: memref<1x128xf32, #tpu.memory_space<vmem>>, %arg4: memref<1x128xf32, #tpu.memory_space<vmem>>, %arg5: memref<512x128xf32, #tpu.memory_space<vmem>>) attributes {dimension_semantics = [#tpu.dimension_semantics<parallel>], iteration_bounds = array<i64: 1>, scalar_prefetch = 0 : i64, scratch_operands = 0 : i64, tpu.core_type = #tpu.core_type<tc>, window_params = [{transform_indices = @transform_0, window_bounds = array<i64: 512, 144>}, {pipeline_mode = #tpu.pipeline_mode<synchronous>, transform_indices = @transform_1, window_bounds = array<i64: 144, 128>}, {pipeline_mode = #tpu.pipeline_mode<synchronous>, transform_indices = @transform_2, window_bounds = array<i64: 1, 128>}, {pipeline_mode = #tpu.pipeline_mode<synchronous>, transform_indices = @transform_3, window_bounds = array<i64: 1, 128>}, {transform_indices = @transform_4, window_bounds = array<i64: 512, 128>}]} {
    %c0 = arith.constant 0 : index
    %c0_0 = arith.constant 0 : index
    %0 = vector.load %arg1[%c0, %c0_0] : memref<512x144xbf16, #tpu.memory_space<vmem>>, vector<512x144xbf16>
    %c0_1 = arith.constant 0 : index
    %c0_2 = arith.constant 0 : index
    %1 = vector.load %arg2[%c0_1, %c0_2] : memref<144x128xbf16, #tpu.memory_space<vmem>>, vector<144x128xbf16>
    %cst = arith.constant dense<0.000000e+00> : vector<512x128xf32>
    %2 = tpu.matmul %0, %1, %cst {dimension_numbers = #tpu.dot_dimension_numbers<[1], [0], [0], [1], [0, 0, 1, 1], [], []>} : vector<512x144xbf16>, vector<144x128xbf16>, vector<512x128xf32> -> vector<512x128xf32>
    %c0_3 = arith.constant 0 : index
    %c0_4 = arith.constant 0 : index
    %3 = vector.load %arg3[%c0_3, %c0_4] : memref<1x128xf32, #tpu.memory_space<vmem>>, vector<1x128xf32>
    %4 = vector.broadcast %3 : vector<1x128xf32> to vector<512x128xf32>
    %5 = arith.mulf %2, %4 : vector<512x128xf32>
    %c0_5 = arith.constant 0 : index
    %c0_6 = arith.constant 0 : index
    %6 = vector.load %arg4[%c0_5, %c0_6] : memref<1x128xf32, #tpu.memory_space<vmem>>, vector<1x128xf32>
    %7 = vector.broadcast %6 : vector<1x128xf32> to vector<512x128xf32>
    %8 = arith.addf %5, %7 : vector<512x128xf32>
    %9 = arith.negf %8 : vector<512x128xf32>
    %10 = math.exp %9 : vector<512x128xf32>
    %cst_7 = arith.constant 1.000000e+00 : f32
    %11 = vector.broadcast %cst_7 : f32 to vector<512x128xf32>
    %12 = arith.addf %11, %10 : vector<512x128xf32>
    %13 = arith.divf %11, %12 : vector<512x128xf32>
    %c0_8 = arith.constant 0 : index
    %c0_9 = arith.constant 0 : index
    %14 = vector.load %arg5[%c0_8, %c0_9] : memref<512x128xf32, #tpu.memory_space<vmem>>, vector<512x128xf32>
    tpu.vector_store %arg5[%c0_8, %c0_9], %13 {strides = array<i32>} : memref<512x128xf32, #tpu.memory_space<vmem>>, vector<512x128xf32>,
    return
  }
  func.func @transform_0(%arg0: i32) -> (i32, i32) {
    %c0_i32 = arith.constant 0 : i32
    %c0_i32_0 = arith.constant 0 : i32
    return %arg0, %c0_i32 : i32, i32
  }
  func.func @transform_1(%arg0: i32) -> (i32, i32) {
    %c0_i32 = arith.constant 0 : i32
    %c0_i32_0 = arith.constant 0 : i32
    %c0_i32_1 = arith.constant 0 : i32
    return %c0_i32, %c0_i32_0 : i32, i32
  }
  func.func @transform_2(%arg0: i32) -> (i32, i32) {
    %c0_i32 = arith.constant 0 : i32
    %c0_i32_0 = arith.constant 0 : i32
    %c0_i32_1 = arith.constant 0 : i32
    return %c0_i32, %c0_i32_0 : i32, i32
  }
  func.func @transform_3(%arg0: i32) -> (i32, i32) {
    %c0_i32 = arith.constant 0 : i32
    %c0_i32_0 = arith.constant 0 : i32
    %c0_i32_1 = arith.constant 0 : i32
    return %c0_i32, %c0_i32_0 : i32, i32
  }
  func.func @transform_4(%arg0: i32) -> (i32, i32) {
    %c0_i32 = arith.constant 0 : i32
    %c0_i32_0 = arith.constant 0 : i32
    return %arg0, %c0_i32 : i32, i32
  }
}

</mosaic_0001>

<llo_original>
// kernel: se_spp_net_forward.11
$region0: #{se_spp_net_forward.11}
  #allocation0 [shape = 'u32[]', space=smem, size = 0x4, offset = 0x4, fixed_abs, tag = 'smem constant byte address 0x4 - core index']
  #allocation1 [shape = 'u32[144,128]{1,0:T(1,128)}', space=vmem, size = 0x12000, scoped, tag = 'internal scratch']
  %s0 = inlined_call_operand.vmem [shape: bf16[128,144], index: 0, kind: input, shape index: {}]
  %s1 = inlined_call_operand.vmem [shape: bf16[144,128], index: 1, kind: input, shape index: {}]
  %s2 = inlined_call_operand.vmem [shape: f32[1,128], index: 2, kind: input, shape index: {}]
  %s3 = inlined_call_operand.vmem [shape: f32[1,128], index: 3, kind: input, shape index: {}]
  %s4 = inlined_call_operand.vmem [shape: f32[128,128], index: 4, kind: output, shape index: {}]
  %s5 = sld [smem:[#allocation0]]
  $region26: #{se_spp_net_forward.11} parent=0
    _
  %s7 = ssub.s32 1, %s5
  %s8 = scalar_select 0, %s7, %s5
  // Predicated region
  $region2: #{se_spp_net_forward.11} parent=0 // pred_check
    _
  $region3: #{se_spp_net_forward.11} parent=0 // pred_check_branch
    %10 = sbr.rel (0) target = $region5
  $region4: #{se_spp_net_forward.11} parent=0 // pred_region
    _
  $region5: #{se_spp_net_forward.11} parent=0 // pred_fallthru
    _
  // Predicated region
  $region6: #{se_spp_net_forward.11} parent=0 // pred_check
    _
  $region7: #{se_spp_net_forward.11} parent=0 // pred_check_branch
    %12 = sbr.rel (0) target = $region9
  $region8: #{se_spp_net_forward.11} parent=0 // pred_region
    _
  $region9: #{se_spp_net_forward.11} parent=0 // pred_fallthru
    _
  // Predicated region
  $region10: #{se_spp_net_forward.11} parent=0 // pred_check
    _
  $region11: #{se_spp_net_forward.11} parent=0 // pred_check_branch
    %14 = sbr.rel (0) target = $region13
  $region12: #{se_spp_net_forward.11} parent=0 // pred_region
    _
  $region13: #{se_spp_net_forward.11} parent=0 // pred_fallthru
    _
  // Predicated region
  $region14: #{se_spp_net_forward.11} parent=0 // pred_check
    _
  $region15: #{se_spp_net_forward.11} parent=0 // pred_check_branch
    %16 = sbr.rel (0) target = $region17
  $region16: #{se_spp_net_forward.11} parent=0 // pred_region
    _
  $region17: #{se_spp_net_forward.11} parent=0 // pred_fallthru
    _
  %v18 = vld [vmem:[%s0] sm:$0xff]
  %v19 = vld [vmem:[%s0 + $0x8] sm:$0xff]
  %v20 = vld [vmem:[%s0 + $0x10] sm:$0xff]
  %v21 = vld [vmem:[%s0 + $0x18] sm:$0xff]
  %v22 = vld [vmem:[%s0 + $0x20] sm:$0xff]
  %v23 = vld [vmem:[%s0 + $0x28] sm:$0xff]
  %v24 = vld [vmem:[%s0 + $0x30] sm:$0xff]
  %v25 = vld [vmem:[%s0 + $0x38] sm:$0xff]
  %v26 = vld [vmem:[%s0 + $0x40] sm:$0xff]
  %v27 = vld [vmem:[%s0 + $0x48] sm:$0xff]
  %v28 = vld [vmem:[%s0 + $0x50] sm:$0xff]
  %v29 = vld [vmem:[%s0 + $0x58] sm:$0xff]
  %v30 = vld [vmem:[%s0 + $0x60] sm:$0xff]
  %v31 = vld [vmem:[%s0 + $0x68] sm:$0xff]
  %v32 = vld [vmem:[%s0 + $0x70] sm:$0xff]
  %v33 = vld [vmem:[%s0 + $0x78] sm:$0xff]
  %v34 = vld [vmem:[%s1] sm:$0xf]
  %v35 = vld [vmem:[%s1 + $0x4] sm:$0xf]
  %v36 = vld [vmem:[%s1 + $0x8] sm:$0xf]
  %v37 = vld [vmem:[%s1 + $0xc] sm:$0xf]
  %v38 = vld [vmem:[%s1 + $0x10] sm:$0xf]
  %v39 = vld [vmem:[%s1 + $0x14] sm:$0xf]
  %v40 = vld [vmem:[%s1 + $0x18] sm:$0xf]
  %v41 = vld [vmem:[%s1 + $0x1c] sm:$0xf]
  %v42 = vld [vmem:[%s1 + $0x20] sm:$0xf]
  %v43 = vld [vmem:[%s1 + $0x24] sm:$0xf]
  %v44 = vld [vmem:[%s1 + $0x28] sm:$0xf]
  %v45 = vld [vmem:[%s1 + $0x2c] sm:$0xf]
  %v46 = vld [vmem:[%s1 + $0x30] sm:$0xf]
  %v47 = vld [vmem:[%s1 + $0x34] sm:$0xf]
  %v48 = vld [vmem:[%s1 + $0x38] sm:$0xf]
  %v49 = vld [vmem:[%s1 + $0x3c] sm:$0xf]
  %v50 = vld [vmem:[%s1 + $0x40] sm:$0xf]
  %v51 = vld [vmem:[%s1 + $0x44] sm:$0xf]
  %v68 = vunpack.c.l.b16 %v18
  %v69 = vunpack.c.h.b16 %v18
  %v70 = vunpack.c.l.b16 %v19
  %v71 = vunpack.c.h.b16 %v19
  %v72 = vunpack.c.l.b16 %v20
  %v73 = vunpack.c.h.b16 %v20
  %v74 = vunpack.c.l.b16 %v21
  %v75 = vunpack.c.h.b16 %v21
  %v76 = vunpack.c.l.b16 %v22
  %v77 = vunpack.c.h.b16 %v22
  %v78 = vunpack.c.l.b16 %v23
  %v79 = vunpack.c.h.b16 %v23
  %v80 = vunpack.c.l.b16 %v24
  %v81 = vunpack.c.h.b16 %v24
  %v82 = vunpack.c.l.b16 %v25
  %v83 = vunpack.c.h.b16 %v25
  %v84 = vunpack.c.l.b16 %v26
  %v85 = vunpack.c.h.b16 %v26
  %v86 = vunpack.c.l.b16 %v27
  %v87 = vunpack.c.h.b16 %v27
  %v88 = vunpack.c.l.b16 %v28
  %v89 = vunpack.c.h.b16 %v28
  %v90 = vunpack.c.l.b16 %v29
  %v91 = vunpack.c.h.b16 %v29
  %v92 = vunpack.c.l.b16 %v30
  %v93 = vunpack.c.h.b16 %v30
  %v94 = vunpack.c.l.b16 %v31
  %v95 = vunpack.c.h.b16 %v31
  %v96 = vunpack.c.l.b16 %v32
  %v97 = vunpack.c.h.b16 %v32
  %v98 = vunpack.c.l.b16 %v33
  %v99 = vunpack.c.h.b16 %v33
  %v100 = vpack.c.b16 %v70, %v68
  %v101 = vpack.c.b16 %v71, %v69
  %v102 = vpack.c.b16 %v74, %v72
  %v103 = vpack.c.b16 %v75, %v73
  %v104 = vpack.c.b16 %v78, %v76
  %v105 = vpack.c.b16 %v79, %v77
  %v106 = vpack.c.b16 %v82, %v80
  %v107 = vpack.c.b16 %v83, %v81
  %v108 = vpack.c.b16 %v86, %v84
  %v109 = vpack.c.b16 %v87, %v85
  %v110 = vpack.c.b16 %v90, %v88
  %v111 = vpack.c.b16 %v91, %v89
  %v112 = vpack.c.b16 %v94, %v92
  %v113 = vpack.c.b16 %v95, %v93
  %v114 = vpack.c.b16 %v98, %v96
  %v115 = vpack.c.b16 %v99, %v97
  %v142 = vunpack.c.l.b16 %v34
  %v143 = vunpack.c.l.b16 %v35
  %v144 = vunpack.c.l.b16 %v36
  %v145 = vunpack.c.l.b16 %v37
  %v146 = vunpack.c.l.b16 %v38
  %v147 = vunpack.c.l.b16 %v39
  %v148 = vunpack.c.l.b16 %v40
  %v149 = vunpack.c.l.b16 %v41
  %v150 = vunpack.c.l.b16 %v42
  %v151 = vunpack.c.l.b16 %v43
  %v152 = vunpack.c.l.b16 %v44
  %v153 = vunpack.c.l.b16 %v45
  %v154 = vunpack.c.l.b16 %v46
  %v155 = vunpack.c.l.b16 %v47
  %v156 = vunpack.c.l.b16 %v48
  %v157 = vunpack.c.l.b16 %v49
  %v158 = vunpack.c.l.b16 %v50
  %v159 = vunpack.c.l.b16 %v51
  %v160 = vpack.c.b16 %v143, %v142
  %v161 = vpack.c.b16 %v145, %v144
  %v162 = vpack.c.b16 %v147, %v146
  %v163 = vpack.c.b16 %v149, %v148
  %v164 = vpack.c.b16 %v151, %v150
  %v165 = vpack.c.b16 %v153, %v152
  %v166 = vpack.c.b16 %v155, %v154
  %v167 = vpack.c.b16 %v157, %v156
  %v168 = vpack.c.b16 %v159, %v158
  %vm178 = vcmask 130048
  %v180 = vsel %vm178, %v101, 0
  %v183 = vsel %vm178, %v103, 0
  %v186 = vsel %vm178, %v105, 0
  %v189 = vsel %vm178, %v107, 0
  %v192 = vsel %vm178, %v109, 0
  %v195 = vsel %vm178, %v111, 0
  %v198 = vsel %vm178, %v113, 0
  %v201 = vsel %vm178, %v115, 0
  %203 = vmatprep.subr.bf16.mxu0 0
  %204 = vmatpush1.bf16.msra.mxu0 %v160
  %205 = vmatprep.subr.bf16.mxu0 0
  %206 = vmatpush1.bf16.msra.mxu0 %v161
  %207 = vmatprep.subr.bf16.mxu0 0
  %208 = vmatpush1.bf16.msra.mxu0 %v162
  %209 = vmatprep.subr.bf16.mxu0 0
  %210 = vmatpush1.bf16.msra.mxu0 %v163
  %211 = vmatprep.subr.bf16.mxu0 0
  %212 = vmatpush1.bf16.msra.mxu0 %v164
  %213 = vmatprep.subr.bf16.mxu0 0
  %214 = vmatpush1.bf16.msra.mxu0 %v165
  %215 = vmatprep.subr.bf16.mxu0 0
  %216 = vmatpush1.bf16.msra.mxu0 %v166
  %217 = vmatprep.subr.bf16.mxu0 0
  %218 = vmatpush1.bf16.msra.mxu0 %v167
  %219 = vmatprep.subr.bf16.mxu0 0
  %220 = vmatpush1.bf16.msra.mxu0 %v168
  %221 = vmatprep.subr.bf16.mxu0 0
  %222 = vmatpush1.bf16.msra.mxu0 0
  %223 = vmatprep.subr.bf16.mxu0 0
  %224 = vmatpush1.bf16.msra.mxu0 0
  %225 = vmatprep.subr.bf16.mxu0 0
  %226 = vmatpush1.bf16.msra.mxu0 0
  %227 = vmatprep.subr.bf16.mxu0 0
  %228 = vmatpush1.bf16.msra.mxu0 0
  %229 = vmatprep.subr.bf16.mxu0 0
  %230 = vmatpush1.bf16.msra.mxu0 0
  %231 = vmatprep.subr.bf16.mxu0 0
  %232 = vmatpush1.bf16.msra.mxu0 0
  %233 = vmatprep.subr.bf16.mxu0 0
  %234 = vmatpush1.bf16.msra.mxu0 0
  %235 = vmatprep.mubr.bf16.mxu0 %v180
  %236 = vmatmul.mubr.bf16.gmra.mrb[0].mxu0 %v100
  %v237 = vpop.f32.mrb[0].mxu0
  %v238 = vadd.f32 0.0, %v237
  %v239 = vpop.f32.mrb[0].mxu0
  %v240 = vpop.f32.mrb[0].mxu0
  %v241 = vadd.f32 0.0, %v240
  %v242 = vpop.f32.mrb[0].mxu0
  %243 = vmatprep.mubr.bf16.mxu0 %v183
  %244 = vmatmul.mubr.bf16.gmra.mrb[0].mxu0 %v102
  %v245 = vpop.f32.mrb[0].mxu0
  %v246 = vadd.f32 0.0, %v245
  %v247 = vpop.f32.mrb[0].mxu0
  %v248 = vpop.f32.mrb[0].mxu0
  %v249 = vadd.f32 0.0, %v248
  %v250 = vpop.f32.mrb[0].mxu0
  %251 = vmatprep.mubr.bf16.mxu0 %v186
  %252 = vmatmul.mubr.bf16.gmra.mrb[0].mxu0 %v104
  %v253 = vpop.f32.mrb[0].mxu0
  %v254 = vadd.f32 0.0, %v253
  %v255 = vpop.f32.mrb[0].mxu0
  %v256 = vpop.f32.mrb[0].mxu0
  %v257 = vadd.f32 0.0, %v256
  %v258 = vpop.f32.mrb[0].mxu0
  %259 = vmatprep.mubr.bf16.mxu0 %v189
  %260 = vmatmul.mubr.bf16.gmra.mrb[0].mxu0 %v106
  %v261 = vpop.f32.mrb[0].mxu0
  %v262 = vadd.f32 0.0, %v261
  %v263 = vpop.f32.mrb[0].mxu0
  %v264 = vpop.f32.mrb[0].mxu0
  %v265 = vadd.f32 0.0, %v264
  %v266 = vpop.f32.mrb[0].mxu0
  %267 = vmatprep.mubr.bf16.mxu0 %v192
  %268 = vmatmul.mubr.bf16.gmra.mrb[0].mxu0 %v108
  %v269 = vpop.f32.mrb[0].mxu0
  %v270 = vadd.f32 0.0, %v269
  %v271 = vpop.f32.mrb[0].mxu0
  %v272 = vpop.f32.mrb[0].mxu0
  %v273 = vadd.f32 0.0, %v272
  %v274 = vpop.f32.mrb[0].mxu0
  %275 = vmatprep.mubr.bf16.mxu0 %v195
  %276 = vmatmul.mubr.bf16.gmra.mrb[0].mxu0 %v110
  %v277 = vpop.f32.mrb[0].mxu0
  %v278 = vadd.f32 0.0, %v277
  %v279 = vpop.f32.mrb[0].mxu0
  %v280 = vpop.f32.mrb[0].mxu0
  %v281 = vadd.f32 0.0, %v280
  %v282 = vpop.f32.mrb[0].mxu0
  %283 = vmatprep.mubr.bf16.mxu0 %v198
  %284 = vmatmul.mubr.bf16.gmra.mrb[0].mxu0 %v112
  %v285 = vpop.f32.mrb[0].mxu0
  %v286 = vadd.f32 0.0, %v285
  %v287 = vpop.f32.mrb[0].mxu0
  %v288 = vpop.f32.mrb[0].mxu0
  %v289 = vadd.f32 0.0, %v288
  %v290 = vpop.f32.mrb[0].mxu0
  %291 = vmatprep.mubr.bf16.mxu0 %v201
  %292 = vmatmul.mubr.bf16.gmra.mrb[0].mxu0 %v114
  %v293 = vpop.f32.mrb[0].mxu0
  %v294 = vadd.f32 0.0, %v293
  %v295 = vpop.f32.mrb[0].mxu0
  %v296 = vpop.f32.mrb[0].mxu0
  %v297 = vadd.f32 0.0, %v296
  %v298 = vpop.f32.mrb[0].mxu0
  %299 = vdwg.mxu0
  %v300 = vld [vmem:[%s2] sm:$0x1]
  %v302 = vlaneseq
  %v303 = vshrl.u32 %v302, 7
  %v304 = vsub.s32 0, %v303
  %v305 = vrot.slane %v300, %v304
  %v307 = vmul.f32 %v238, %v305
  %v308 = vmul.f32 %v241, %v305
  %v309 = vmul.f32 %v246, %v305
  %v310 = vmul.f32 %v249, %v305
  %v311 = vmul.f32 %v254, %v305
  %v312 = vmul.f32 %v257, %v305
  %v313 = vmul.f32 %v262, %v305
  %v314 = vmul.f32 %v265, %v305
  %v315 = vmul.f32 %v270, %v305
  %v316 = vmul.f32 %v273, %v305
  %v317 = vmul.f32 %v278, %v305
  %v318 = vmul.f32 %v281, %v305
  %v319 = vmul.f32 %v286, %v305
  %v320 = vmul.f32 %v289, %v305
  %v321 = vmul.f32 %v294, %v305
  %v322 = vmul.f32 %v297, %v305
  %v323 = vld [vmem:[%s3] sm:$0x1]
  %v325 = vlaneseq
  %v326 = vshrl.u32 %v325, 7
  %v327 = vsub.s32 0, %v326
  %v328 = vrot.slane %v323, %v327
  %v330 = vadd.f32 %v307, %v328
  %v331 = vadd.f32 %v308, %v328
  %v332 = vadd.f32 %v309, %v328
  %v333 = vadd.f32 %v310, %v328
  %v334 = vadd.f32 %v311, %v328
  %v335 = vadd.f32 %v312, %v328
  %v336 = vadd.f32 %v313, %v328
  %v337 = vadd.f32 %v314, %v328
  %v338 = vadd.f32 %v315, %v328
  %v339 = vadd.f32 %v316, %v328
  %v340 = vadd.f32 %v317, %v328
  %v341 = vadd.f32 %v318, %v328
  %v342 = vadd.f32 %v319, %v328
  %v343 = vadd.f32 %v320, %v328
  %v344 = vadd.f32 %v321, %v328
  %v345 = vadd.f32 %v322, %v328
  %v346 = vmax.f32 %v330, 0.0
  %v347 = vmax.f32 %v331, 0.0
  %v348 = vmax.f32 %v332, 0.0
  %v349 = vmax.f32 %v333, 0.0
  %v350 = vmax.f32 %v334, 0.0
  %v351 = vmax.f32 %v335, 0.0
  %v352 = vmax.f32 %v336, 0.0
  %v353 = vmax.f32 %v337, 0.0
  %v354 = vmax.f32 %v338, 0.0
  %v355 = vmax.f32 %v339, 0.0
  %v356 = vmax.f32 %v340, 0.0
  %v357 = vmax.f32 %v341, 0.0
  %v358 = vmax.f32 %v342, 0.0
  %v359 = vmax.f32 %v343, 0.0
  %v360 = vmax.f32 %v344, 0.0
  %v361 = vmax.f32 %v345, 0.0
  %362 = vst [vmem:[%s4] sm:$0xff] %v346
  %363 = vst [vmem:[%s4 + $0x8] sm:$0xff] %v347
  %364 = vst [vmem:[%s4 + $0x10] sm:$0xff] %v348
  %365 = vst [vmem:[%s4 + $0x18] sm:$0xff] %v349
  %366 = vst [vmem:[%s4 + $0x20] sm:$0xff] %v350
  %367 = vst [vmem:[%s4 + $0x28] sm:$0xff] %v351
  %368 = vst [vmem:[%s4 + $0x30] sm:$0xff] %v352
  %369 = vst [vmem:[%s4 + $0x38] sm:$0xff] %v353
  %370 = vst [vmem:[%s4 + $0x40] sm:$0xff] %v354
  %371 = vst [vmem:[%s4 + $0x48] sm:$0xff] %v355
  %372 = vst [vmem:[%s4 + $0x50] sm:$0xff] %v356
  %373 = vst [vmem:[%s4 + $0x58] sm:$0xff] %v357
  %374 = vst [vmem:[%s4 + $0x60] sm:$0xff] %v358
  %375 = vst [vmem:[%s4 + $0x68] sm:$0xff] %v359
  %376 = vst [vmem:[%s4 + $0x70] sm:$0xff] %v360
  %377 = vst [vmem:[%s4 + $0x78] sm:$0xff] %v361
  // Predicated region
  $region18: #{se_spp_net_forward.11} parent=0 // pred_check
    _
  $region19: #{se_spp_net_forward.11} parent=0 // pred_check_branch
    %379 = sbr.rel (0) target = $region21
  $region20: #{se_spp_net_forward.11} parent=0 // pred_region
    _
  $region21: #{se_spp_net_forward.11} parent=0 // pred_fallthru
    _
  // Predicated region
  $region22: #{se_spp_net_forward.11} parent=0 // pred_check
    _
  $region23: #{se_spp_net_forward.11} parent=0 // pred_check_branch
    %381 = sbr.rel (0) target = $region25
  $region24: #{se_spp_net_forward.11} parent=0 // pred_region
    _
  $region25: #{se_spp_net_forward.11} parent=0 // pred_fallthru
    _

// kernel: se_spp_net_forward.10
$region0: #{se_spp_net_forward.10}
  #allocation0 [shape = 'u32[]', space=smem, size = 0x4, offset = 0x4, fixed_abs, tag = 'smem constant byte address 0x4 - core index']
  #allocation1 [shape = 'u32[144,128]{1,0:T(1,128)}', space=vmem, size = 0x12000, scoped, tag = 'internal scratch']
  %s0 = inlined_call_operand.vmem [shape: bf16[512,9], index: 0, kind: input, shape index: {}]
  %s1 = inlined_call_operand.vmem [shape: bf16[9,128], index: 1, kind: input, shape index: {}]
  %s2 = inlined_call_operand.vmem [shape: f32[1,128], index: 2, kind: input, shape index: {}]
  %s3 = inlined_call_operand.vmem [shape: f32[1,128], index: 3, kind: input, shape index: {}]
  %s4 = inlined_call_operand.vmem [shape: f32[512,128], index: 4, kind: output, shape index: {}]
  %s5 = sld [smem:[#allocation0]]
  $region26: #{se_spp_net_forward.10} parent=0
    _
  %s7 = ssub.s32 1, %s5
  %s8 = scalar_select 0, %s7, %s5
  // Predicated region
  $region2: #{se_spp_net_forward.10} parent=0 // pred_check
    _
  $region3: #{se_spp_net_forward.10} parent=0 // pred_check_branch
    %10 = sbr.rel (0) target = $region5
  $region4: #{se_spp_net_forward.10} parent=0 // pred_region
    _
  $region5: #{se_spp_net_forward.10} parent=0 // pred_fallthru
    _
  // Predicated region
  $region6: #{se_spp_net_forward.10} parent=0 // pred_check
    _
  $region7: #{se_spp_net_forward.10} parent=0 // pred_check_branch
    %12 = sbr.rel (0) target = $region9
  $region8: #{se_spp_net_forward.10} parent=0 // pred_region
    _
  $region9: #{se_spp_net_forward.10} parent=0 // pred_fallthru
    _
  // Predicated region
  $region10: #{se_spp_net_forward.10} parent=0 // pred_check
    _
  $region11: #{se_spp_net_forward.10} parent=0 // pred_check_branch
    %14 = sbr.rel (0) target = $region13
  $region12: #{se_spp_net_forward.10} parent=0 // pred_region
    _
  $region13: #{se_spp_net_forward.10} parent=0 // pred_fallthru
    _
  // Predicated region
  $region14: #{se_spp_net_forward.10} parent=0 // pred_check
    _
  $region15: #{se_spp_net_forward.10} parent=0 // pred_check_branch
    %16 = sbr.rel (0) target = $region17
  $region16: #{se_spp_net_forward.10} parent=0 // pred_region
    _
  $region17: #{se_spp_net_forward.10} parent=0 // pred_fallthru
    _
  %v18 = vld [vmem:[%s0] sm:$0xf]
  %v19 = vld [vmem:[%s0 + $0x4] sm:$0xf]
  %v20 = vld [vmem:[%s0 + $0x8] sm:$0xf]
  %v21 = vld [vmem:[%s0 + $0xc] sm:$0xf]
  %v22 = vld [vmem:[%s0 + $0x10] sm:$0xf]
  %v23 = vld [vmem:[%s0 + $0x14] sm:$0xf]
  %v24 = vld [vmem:[%s0 + $0x18] sm:$0xf]
  %v25 = vld [vmem:[%s0 + $0x1c] sm:$0xf]
  %v26 = vld [vmem:[%s0 + $0x20] sm:$0xf]
  %v27 = vld [vmem:[%s0 + $0x24] sm:$0xf]
  %v28 = vld [vmem:[%s0 + $0x28] sm:$0xf]
  %v29 = vld [vmem:[%s0 + $0x2c] sm:$0xf]
  %v30 = vld [vmem:[%s0 + $0x30] sm:$0xf]
  %v31 = vld [vmem:[%s0 + $0x34] sm:$0xf]
  %v32 = vld [vmem:[%s0 + $0x38] sm:$0xf]
  %v33 = vld [vmem:[%s0 + $0x3c] sm:$0xf]
  %v34 = vld [vmem:[%s0 + $0x40] sm:$0xf]
  %v35 = vld [vmem:[%s0 + $0x44] sm:$0xf]
  %v36 = vld [vmem:[%s0 + $0x48] sm:$0xf]
  %v37 = vld [vmem:[%s0 + $0x4c] sm:$0xf]
  %v38 = vld [vmem:[%s0 + $0x50] sm:$0xf]
  %v39 = vld [vmem:[%s0 + $0x54] sm:$0xf]
  %v40 = vld [vmem:[%s0 + $0x58] sm:$0xf]
  %v41 = vld [vmem:[%s0 + $0x5c] sm:$0xf]
  %v42 = vld [vmem:[%s0 + $0x60] sm:$0xf]
  %v43 = vld [vmem:[%s0 + $0x64] sm:$0xf]
  %v44 = vld [vmem:[%s0 + $0x68] sm:$0xf]
  %v45 = vld [vmem:[%s0 + $0x6c] sm:$0xf]
  %v46 = vld [vmem:[%s0 + $0x70] sm:$0xf]
  %v47 = vld [vmem:[%s0 + $0x74] sm:$0xf]
  %v48 = vld [vmem:[%s0 + $0x78] sm:$0xf]
  %v49 = vld [vmem:[%s0 + $0x7c] sm:$0xf]
  %v50 = vld [vmem:[%s0 + $0x80] sm:$0xf]
  %v51 = vld [vmem:[%s0 + $0x84] sm:$0xf]
  %v52 = vld [vmem:[%s0 + $0x88] sm:$0xf]
  %v53 = vld [vmem:[%s0 + $0x8c] sm:$0xf]
  %v54 = vld [vmem:[%s0 + $0x90] sm:$0xf]
  %v55 = vld [vmem:[%s0 + $0x94] sm:$0xf]
  %v56 = vld [vmem:[%s0 + $0x98] sm:$0xf]
  %v57 = vld [vmem:[%s0 + $0x9c] sm:$0xf]
  %v58 = vld [vmem:[%s0 + $0xa0] sm:$0xf]
  %v59 = vld [vmem:[%s0 + $0xa4] sm:$0xf]
  %v60 = vld [vmem:[%s0 + $0xa8] sm:$0xf]
  %v61 = vld [vmem:[%s0 + $0xac] sm:$0xf]
  %v62 = vld [vmem:[%s0 + $0xb0] sm:$0xf]
  %v63 = vld [vmem:[%s0 + $0xb4] sm:$0xf]
  %v64 = vld [vmem:[%s0 + $0xb8] sm:$0xf]
  %v65 = vld [vmem:[%s0 + $0xbc] sm:$0xf]
  %v66 = vld [vmem:[%s0 + $0xc0] sm:$0xf]
  %v67 = vld [vmem:[%s0 + $0xc4] sm:$0xf]
  %v68 = vld [vmem:[%s0 + $0xc8] sm:$0xf]
  %v69 = vld [vmem:[%s0 + $0xcc] sm:$0xf]
  %v70 = vld [vmem:[%s0 + $0xd0] sm:$0xf]
  %v71 = vld [vmem:[%s0 + $0xd4] sm:$0xf]
  %v72 = vld [vmem:[%s0 + $0xd8] sm:$0xf]
  %v73 = vld [vmem:[%s0 + $0xdc] sm:$0xf]
  %v74 = vld [vmem:[%s0 + $0xe0] sm:$0xf]
  %v75 = vld [vmem:[%s0 + $0xe4] sm:$0xf]
  %v76 = vld [vmem:[%s0 + $0xe8] sm:$0xf]
  %v77 = vld [vmem:[%s0 + $0xec] sm:$0xf]
  %v78 = vld [vmem:[%s0 + $0xf0] sm:$0xf]
  %v79 = vld [vmem:[%s0 + $0xf4] sm:$0xf]
  %v80 = vld [vmem:[%s0 + $0xf8] sm:$0xf]
  %v81 = vld [vmem:[%s0 + $0xfc] sm:$0xf]
  %v82 = vld [vmem:[%s1] sm:$0xf]
  %v83 = vld [vmem:[%s1 + $0x4] sm:$0x1]
  %v148 = vunpack.c.l.b16 %v18
  %v149 = vunpack.c.l.b16 %v19
  %v150 = vunpack.c.l.b16 %v20
  %v151 = vunpack.c.l.b16 %v21
  %v152 = vunpack.c.l.b16 %v22
  %v153 = vunpack.c.l.b16 %v23
  %v154 = vunpack.c.l.b16 %v24
  %v155 = vunpack.c.l.b16 %v25
  %v156 = vunpack.c.l.b16 %v26
  %v157 = vunpack.c.l.b16 %v27
  %v158 = vunpack.c.l.b16 %v28
  %v159 = vunpack.c.l.b16 %v29
  %v160 = vunpack.c.l.b16 %v30
  %v161 = vunpack.c.l.b16 %v31
  %v162 = vunpack.c.l.b16 %v32
  %v163 = vunpack.c.l.b16 %v33
  %v164 = vunpack.c.l.b16 %v34
  %v165 = vunpack.c.l.b16 %v35
  %v166 = vunpack.c.l.b16 %v36
  %v167 = vunpack.c.l.b16 %v37
  %v168 = vunpack.c.l.b16 %v38
  %v169 = vunpack.c.l.b16 %v39
  %v170 = vunpack.c.l.b16 %v40
  %v171 = vunpack.c.l.b16 %v41
  %v172 = vunpack.c.l.b16 %v42
  %v173 = vunpack.c.l.b16 %v43
  %v174 = vunpack.c.l.b16 %v44
  %v175 = vunpack.c.l.b16 %v45
  %v176 = vunpack.c.l.b16 %v46
  %v177 = vunpack.c.l.b16 %v47
  %v178 = vunpack.c.l.b16 %v48
  %v179 = vunpack.c.l.b16 %v49
  %v180 = vunpack.c.l.b16 %v50
  %v181 = vunpack.c.l.b16 %v51
  %v182 = vunpack.c.l.b16 %v52
  %v183 = vunpack.c.l.b16 %v53
  %v184 = vunpack.c.l.b16 %v54
  %v185 = vunpack.c.l.b16 %v55
  %v186 = vunpack.c.l.b16 %v56
  %v187 = vunpack.c.l.b16 %v57
  %v188 = vunpack.c.l.b16 %v58
  %v189 = vunpack.c.l.b16 %v59
  %v190 = vunpack.c.l.b16 %v60
  %v191 = vunpack.c.l.b16 %v61
  %v192 = vunpack.c.l.b16 %v62
  %v193 = vunpack.c.l.b16 %v63
  %v194 = vunpack.c.l.b16 %v64
  %v195 = vunpack.c.l.b16 %v65
  %v196 = vunpack.c.l.b16 %v66
  %v197 = vunpack.c.l.b16 %v67
  %v198 = vunpack.c.l.b16 %v68
  %v199 = vunpack.c.l.b16 %v69
  %v200 = vunpack.c.l.b16 %v70
  %v201 = vunpack.c.l.b16 %v71
  %v202 = vunpack.c.l.b16 %v72
  %v203 = vunpack.c.l.b16 %v73
  %v204 = vunpack.c.l.b16 %v74
  %v205 = vunpack.c.l.b16 %v75
  %v206 = vunpack.c.l.b16 %v76
  %v207 = vunpack.c.l.b16 %v77
  %v208 = vunpack.c.l.b16 %v78
  %v209 = vunpack.c.l.b16 %v79
  %v210 = vunpack.c.l.b16 %v80
  %v211 = vunpack.c.l.b16 %v81
  %v212 = vpack.c.b16 %v149, %v148
  %v213 = vpack.c.b16 %v151, %v150
  %v214 = vpack.c.b16 %v153, %v152
  %v215 = vpack.c.b16 %v155, %v154
  %v216 = vpack.c.b16 %v157, %v156
  %v217 = vpack.c.b16 %v159, %v158
  %v218 = vpack.c.b16 %v161, %v160
  %v219 = vpack.c.b16 %v163, %v162
  %v220 = vpack.c.b16 %v165, %v164
  %v221 = vpack.c.b16 %v167, %v166
  %v222 = vpack.c.b16 %v169, %v168
  %v223 = vpack.c.b16 %v171, %v170
  %v224 = vpack.c.b16 %v173, %v172
  %v225 = vpack.c.b16 %v175, %v174
  %v226 = vpack.c.b16 %v177, %v176
  %v227 = vpack.c.b16 %v179, %v178
  %v228 = vpack.c.b16 %v181, %v180
  %v229 = vpack.c.b16 %v183, %v182
  %v230 = vpack.c.b16 %v185, %v184
  %v231 = vpack.c.b16 %v187, %v186
  %v232 = vpack.c.b16 %v189, %v188
  %v233 = vpack.c.b16 %v191, %v190
  %v234 = vpack.c.b16 %v193, %v192
  %v235 = vpack.c.b16 %v195, %v194
  %v236 = vpack.c.b16 %v197, %v196
  %v237 = vpack.c.b16 %v199, %v198
  %v238 = vpack.c.b16 %v201, %v200
  %v239 = vpack.c.b16 %v203, %v202
  %v240 = vpack.c.b16 %v205, %v204
  %v241 = vpack.c.b16 %v207, %v206
  %v242 = vpack.c.b16 %v209, %v208
  %v243 = vpack.c.b16 %v211, %v210
  %v246 = vunpack.c.l.b16 %v82
  %v247 = vunpack.c.l.b16 %v83
  %v248 = vpack.c.b16 %v247, %v246
  %vm249 = vcmask 72704
  %v251 = vsel %vm249, %v212, 0
  %v254 = vsel %vm249, %v213, 0
  %v257 = vsel %vm249, %v214, 0
  %v260 = vsel %vm249, %v215, 0
  %v263 = vsel %vm249, %v216, 0
  %v266 = vsel %vm249, %v217, 0
  %v269 = vsel %vm249, %v218, 0
  %v272 = vsel %vm249, %v219, 0
  %v275 = vsel %vm249, %v220, 0
  %v278 = vsel %vm249, %v221, 0
  %v281 = vsel %vm249, %v222, 0
  %v284 = vsel %vm249, %v223, 0
  %v287 = vsel %vm249, %v224, 0
  %v290 = vsel %vm249, %v225, 0
  %v293 = vsel %vm249, %v226, 0
  %v296 = vsel %vm249, %v227, 0
  %v299 = vsel %vm249, %v228, 0
  %v302 = vsel %vm249, %v229, 0
  %v305 = vsel %vm249, %v230, 0
  %v308 = vsel %vm249, %v231, 0
  %v311 = vsel %vm249, %v232, 0
  %v314 = vsel %vm249, %v233, 0
  %v317 = vsel %vm249, %v234, 0
  %v320 = vsel %vm249, %v235, 0
  %v323 = vsel %vm249, %v236, 0
  %v326 = vsel %vm249, %v237, 0
  %v329 = vsel %vm249, %v238, 0
  %v332 = vsel %vm249, %v239, 0
  %v335 = vsel %vm249, %v240, 0
  %v338 = vsel %vm249, %v241, 0
  %v341 = vsel %vm249, %v242, 0
  %v344 = vsel %vm249, %v243, 0
  %vm346 = vcmask 1043456
  %vm347 = vcmask 1044480
  %v348 = vsel %vm346, 4294967295, 65535
  %v349 = vsel %vm347, %v348, 0
  %v351 = vand.u32 %v248, %v349
  %353 = vmatprep.subr.bf16.mxu0 0
  %354 = vmatpush1.bf16.msra.mxu0 %v351
  %355 = vmatprep.subr.bf16.mxu0 0
  %356 = vmatpush1.bf16.msra.mxu0 0
  %357 = vmatprep.subr.bf16.mxu0 0
  %358 = vmatpush1.bf16.msra.mxu0 0
  %359 = vmatprep.subr.bf16.mxu0 0
  %360 = vmatpush1.bf16.msra.mxu0 0
  %361 = vmatprep.subr.bf16.mxu0 0
  %362 = vmatpush1.bf16.msra.mxu0 0
  %363 = vmatprep.subr.bf16.mxu0 0
  %364 = vmatpush1.bf16.msra.mxu0 0
  %365 = vmatprep.subr.bf16.mxu0 0
  %366 = vmatpush1.bf16.msra.mxu0 0
  %367 = vmatprep.subr.bf16.mxu0 0
  %368 = vmatpush1.bf16.msra.mxu0 0
  %369 = vmatprep.subr.bf16.mxu0 0
  %370 = vmatpush1.bf16.msra.mxu0 0
  %371 = vmatprep.subr.bf16.mxu0 0
  %372 = vmatpush1.bf16.msra.mxu0 0
  %373 = vmatprep.subr.bf16.mxu0 0
  %374 = vmatpush1.bf16.msra.mxu0 0
  %375 = vmatprep.subr.bf16.mxu0 0
  %376 = vmatpush1.bf16.msra.mxu0 0
  %377 = vmatprep.subr.bf16.mxu0 0
  %378 = vmatpush1.bf16.msra.mxu0 0
  %379 = vmatprep.subr.bf16.mxu0 0
  %380 = vmatpush1.bf16.msra.mxu0 0
  %381 = vmatprep.subr.bf16.mxu0 0
  %382 = vmatpush1.bf16.msra.mxu0 0
  %383 = vmatprep.subr.bf16.mxu0 0
  %384 = vmatpush1.bf16.msra.mxu0 0
  %385 = vmatprep.mubr.bf16.mxu0 0
  %386 = vmatmul.mubr.bf16.gmra.mrb[0].mxu0 %v251
  %v387 = vpop.f32.mrb[0].mxu0
  %v388 = vadd.f32 0.0, %v387
  %v389 = vpop.f32.mrb[0].mxu0
  %v390 = vpop.f32.mrb[0].mxu0
  %v391 = vadd.f32 0.0, %v390
  %v392 = vpop.f32.mrb[0].mxu0
  %393 = vmatprep.mubr.bf16.mxu0 0
  %394 = vmatmul.mubr.bf16.gmra.mrb[0].mxu0 %v254
  %v395 = vpop.f32.mrb[0].mxu0
  %v396 = vadd.f32 0.0, %v395
  %v397 = vpop.f32.mrb[0].mxu0
  %v398 = vpop.f32.mrb[0].mxu0
  %v399 = vadd.f32 0.0, %v398
  %v400 = vpop.f32.mrb[0].mxu0
  %401 = vmatprep.mubr.bf16.mxu0 0
  %402 = vmatmul.mubr.bf16.gmra.mrb[0].mxu0 %v257
  %v403 = vpop.f32.mrb[0].mxu0
  %v404 = vadd.f32 0.0, %v403
  %v405 = vpop.f32.mrb[0].mxu0
  %v406 = vpop.f32.mrb[0].mxu0
  %v407 = vadd.f32 0.0, %v406
  %v408 = vpop.f32.mrb[0].mxu0
  %409 = vmatprep.mubr.bf16.mxu0 0
  %410 = vmatmul.mubr.bf16.gmra.mrb[0].mxu0 %v260
  %v411 = vpop.f32.mrb[0].mxu0
  %v412 = vadd.f32 0.0, %v411
  %v413 = vpop.f32.mrb[0].mxu0
  %v414 = vpop.f32.mrb[0].mxu0
  %v415 = vadd.f32 0.0, %v414
  %v416 = vpop.f32.mrb[0].mxu0
  %417 = vmatprep.mubr.bf16.mxu0 0
  %418 = vmatmul.mubr.bf16.gmra.mrb[0].mxu0 %v263
  %v419 = vpop.f32.mrb[0].mxu0
  %v420 = vadd.f32 0.0, %v419
  %v421 = vpop.f32.mrb[0].mxu0
  %v422 = vpop.f32.mrb[0].mxu0
  %v423 = vadd.f32 0.0, %v422
  %v424 = vpop.f32.mrb[0].mxu0
  %425 = vmatprep.mubr.bf16.mxu0 0
  %426 = vmatmul.mubr.bf16.gmra.mrb[0].mxu0 %v266
  %v427 = vpop.f32.mrb[0].mxu0
  %v428 = vadd.f32 0.0, %v427
  %v429 = vpop.f32.mrb[0].mxu0
  %v430 = vpop.f32.mrb[0].mxu0
  %v431 = vadd.f32 0.0, %v430
  %v432 = vpop.f32.mrb[0].mxu0
  %433 = vmatprep.mubr.bf16.mxu0 0
  %434 = vmatmul.mubr.bf16.gmra.mrb[0].mxu0 %v269
  %v435 = vpop.f32.mrb[0].mxu0
  %v436 = vadd.f32 0.0, %v435
  %v437 = vpop.f32.mrb[0].mxu0
  %v438 = vpop.f32.mrb[0].mxu0
  %v439 = vadd.f32 0.0, %v438
  %v440 = vpop.f32.mrb[0].mxu0
  %441 = vmatprep.mubr.bf16.mxu0 0
  %442 = vmatmul.mubr.bf16.gmra.mrb[0].mxu0 %v272
  %v443 = vpop.f32.mrb[0].mxu0
  %v444 = vadd.f32 0.0, %v443
  %v445 = vpop.f32.mrb[0].mxu0
  %v446 = vpop.f32.mrb[0].mxu0
  %v447 = vadd.f32 0.0, %v446
  %v448 = vpop.f32.mrb[0].mxu0
  %449 = vmatprep.mubr.bf16.mxu0 0
  %450 = vmatmul.mubr.bf16.gmra.mrb[0].mxu0 %v275
  %v451 = vpop.f32.mrb[0].mxu0
  %v452 = vadd.f32 0.0, %v451
  %v453 = vpop.f32.mrb[0].mxu0
  %v454 = vpop.f32.mrb[0].mxu0
  %v455 = vadd.f32 0.0, %v454
  %v456 = vpop.f32.mrb[0].mxu0
  %457 = vmatprep.mubr.bf16.mxu0 0
  %458 = vmatmul.mubr.bf16.gmra.mrb[0].mxu0 %v278
  %v459 = vpop.f32.mrb[0].mxu0
  %v460 = vadd.f32 0.0, %v459
  %v461 = vpop.f32.mrb[0].mxu0
  %v462 = vpop.f32.mrb[0].mxu0
  %v463 = vadd.f32 0.0, %v462
  %v464 = vpop.f32.mrb[0].mxu0
  %465 = vmatprep.mubr.bf16.mxu0 0
  %466 = vmatmul.mubr.bf16.gmra.mrb[0].mxu0 %v281
  %v467 = vpop.f32.mrb[0].mxu0
  %v468 = vadd.f32 0.0, %v467
  %v469 = vpop.f32.mrb[0].mxu0
  %v470 = vpop.f32.mrb[0].mxu0
  %v471 = vadd.f32 0.0, %v470
  %v472 = vpop.f32.mrb[0].mxu0
  %473 = vmatprep.mubr.bf16.mxu0 0
  %474 = vmatmul.mubr.bf16.gmra.mrb[0].mxu0 %v284
  %v475 = vpop.f32.mrb[0].mxu0
  %v476 = vadd.f32 0.0, %v475
  %v477 = vpop.f32.mrb[0].mxu0
  %v478 = vpop.f32.mrb[0].mxu0
  %v479 = vadd.f32 0.0, %v478
  %v480 = vpop.f32.mrb[0].mxu0
  %481 = vmatprep.mubr.bf16.mxu0 0
  %482 = vmatmul.mubr.bf16.gmra.mrb[0].mxu0 %v287
  %v483 = vpop.f32.mrb[0].mxu0
  %v484 = vadd.f32 0.0, %v483
  %v485 = vpop.f32.mrb[0].mxu0
  %v486 = vpop.f32.mrb[0].mxu0
  %v487 = vadd.f32 0.0, %v486
  %v488 = vpop.f32.mrb[0].mxu0
  %489 = vmatprep.mubr.bf16.mxu0 0
  %490 = vmatmul.mubr.bf16.gmra.mrb[0].mxu0 %v290
  %v491 = vpop.f32.mrb[0].mxu0
  %v492 = vadd.f32 0.0, %v491
  %v493 = vpop.f32.mrb[0].mxu0
  %v494 = vpop.f32.mrb[0].mxu0
  %v495 = vadd.f32 0.0, %v494
  %v496 = vpop.f32.mrb[0].mxu0
  %497 = vmatprep.mubr.bf16.mxu0 0
  %498 = vmatmul.mubr.bf16.gmra.mrb[0].mxu0 %v293
  %v499 = vpop.f32.mrb[0].mxu0
  %v500 = vadd.f32 0.0, %v499
  %v501 = vpop.f32.mrb[0].mxu0
  %v502 = vpop.f32.mrb[0].mxu0
  %v503 = vadd.f32 0.0, %v502
  %v504 = vpop.f32.mrb[0].mxu0
  %505 = vmatprep.mubr.bf16.mxu0 0
  %506 = vmatmul.mubr.bf16.gmra.mrb[0].mxu0 %v296
  %v507 = vpop.f32.mrb[0].mxu0
  %v508 = vadd.f32 0.0, %v507
  %v509 = vpop.f32.mrb[0].mxu0
  %v510 = vpop.f32.mrb[0].mxu0
  %v511 = vadd.f32 0.0, %v510
  %v512 = vpop.f32.mrb[0].mxu0
  %513 = vmatprep.mubr.bf16.mxu0 0
  %514 = vmatmul.mubr.bf16.gmra.mrb[0].mxu0 %v299
  %v515 = vpop.f32.mrb[0].mxu0
  %v516 = vadd.f32 0.0, %v515
  %v517 = vpop.f32.mrb[0].mxu0
  %v518 = vpop.f32.mrb[0].mxu0
  %v519 = vadd.f32 0.0, %v518
  %v520 = vpop.f32.mrb[0].mxu0
  %521 = vmatprep.mubr.bf16.mxu0 0
  %522 = vmatmul.mubr.bf16.gmra.mrb[0].mxu0 %v302
  %v523 = vpop.f32.mrb[0].mxu0
  %v524 = vadd.f32 0.0, %v523
  %v525 = vpop.f32.mrb[0].mxu0
  %v526 = vpop.f32.mrb[0].mxu0
  %v527 = vadd.f32 0.0, %v526
  %v528 = vpop.f32.mrb[0].mxu0
  %529 = vmatprep.mubr.bf16.mxu0 0
  %530 = vmatmul.mubr.bf16.gmra.mrb[0].mxu0 %v305
  %v531 = vpop.f32.mrb[0].mxu0
  %v532 = vadd.f32 0.0, %v531
  %v533 = vpop.f32.mrb[0].mxu0
  %v534 = vpop.f32.mrb[0].mxu0
  %v535 = vadd.f32 0.0, %v534
  %v536 = vpop.f32.mrb[0].mxu0
  %537 = vmatprep.mubr.bf16.mxu0 0
  %538 = vmatmul.mubr.bf16.gmra.mrb[0].mxu0 %v308
  %v539 = vpop.f32.mrb[0].mxu0
  %v540 = vadd.f32 0.0, %v539
  %v541 = vpop.f32.mrb[0].mxu0
  %v542 = vpop.f32.mrb[0].mxu0
  %v543 = vadd.f32 0.0, %v542
  %v544 = vpop.f32.mrb[0].mxu0
  %545 = vmatprep.mubr.bf16.mxu0 0
  %546 = vmatmul.mubr.bf16.gmra.mrb[0].mxu0 %v311
  %v547 = vpop.f32.mrb[0].mxu0
  %v548 = vadd.f32 0.0, %v547
  %v549 = vpop.f32.mrb[0].mxu0
  %v550 = vpop.f32.mrb[0].mxu0
  %v551 = vadd.f32 0.0, %v550
  %v552 = vpop.f32.mrb[0].mxu0
  %553 = vmatprep.mubr.bf16.mxu0 0
  %554 = vmatmul.mubr.bf16.gmra.mrb[0].mxu0 %v314
  %v555 = vpop.f32.mrb[0].mxu0
  %v556 = vadd.f32 0.0, %v555
  %v557 = vpop.f32.mrb[0].mxu0
  %v558 = vpop.f32.mrb[0].mxu0
  %v559 = vadd.f32 0.0, %v558
  %v560 = vpop.f32.mrb[0].mxu0
  %561 = vmatprep.mubr.bf16.mxu0 0
  %562 = vmatmul.mubr.bf16.gmra.mrb[0].mxu0 %v317
  %v563 = vpop.f32.mrb[0].mxu0
  %v564 = vadd.f32 0.0, %v563
  %v565 = vpop.f32.mrb[0].mxu0
  %v566 = vpop.f32.mrb[0].mxu0
  %v567 = vadd.f32 0.0, %v566
  %v568 = vpop.f32.mrb[0].mxu0
  %569 = vmatprep.mubr.bf16.mxu0 0
  %570 = vmatmul.mubr.bf16.gmra.mrb[0].mxu0 %v320
  %v571 = vpop.f32.mrb[0].mxu0
  %v572 = vadd.f32 0.0, %v571
  %v573 = vpop.f32.mrb[0].mxu0
  %v574 = vpop.f32.mrb[0].mxu0
  %v575 = vadd.f32 0.0, %v574
  %v576 = vpop.f32.mrb[0].mxu0
  %577 = vmatprep.mubr.bf16.mxu0 0
  %578 = vmatmul.mubr.bf16.gmra.mrb[0].mxu0 %v323
  %v579 = vpop.f32.mrb[0].mxu0
  %v580 = vadd.f32 0.0, %v579
  %v581 = vpop.f32.mrb[0].mxu0
  %v582 = vpop.f32.mrb[0].mxu0
  %v583 = vadd.f32 0.0, %v582
  %v584 = vpop.f32.mrb[0].mxu0
  %585 = vmatprep.mubr.bf16.mxu0 0
  %586 = vmatmul.mubr.bf16.gmra.mrb[0].mxu0 %v326
  %v587 = vpop.f32.mrb[0].mxu0
  %v588 = vadd.f32 0.0, %v587
  %v589 = vpop.f32.mrb[0].mxu0
  %v590 = vpop.f32.mrb[0].mxu0
  %v591 = vadd.f32 0.0, %v590
  %v592 = vpop.f32.mrb[0].mxu0
  %593 = vmatprep.mubr.bf16.mxu0 0
  %594 = vmatmul.mubr.bf16.gmra.mrb[0].mxu0 %v329
  %v595 = vpop.f32.mrb[0].mxu0
  %v596 = vadd.f32 0.0, %v595
  %v597 = vpop.f32.mrb[0].mxu0
  %v598 = vpop.f32.mrb[0].mxu0
  %v599 = vadd.f32 0.0, %v598
  %v600 = vpop.f32.mrb[0].mxu0
  %601 = vmatprep.mubr.bf16.mxu0 0
  %602 = vmatmul.mubr.bf16.gmra.mrb[0].mxu0 %v332
  %v603 = vpop.f32.mrb[0].mxu0
  %v604 = vadd.f32 0.0, %v603
  %v605 = vpop.f32.mrb[0].mxu0
  %v606 = vpop.f32.mrb[0].mxu0
  %v607 = vadd.f32 0.0, %v606
  %v608 = vpop.f32.mrb[0].mxu0
  %609 = vmatprep.mubr.bf16.mxu0 0
  %610 = vmatmul.mubr.bf16.gmra.mrb[0].mxu0 %v335
  %v611 = vpop.f32.mrb[0].mxu0
  %v612 = vadd.f32 0.0, %v611
  %v613 = vpop.f32.mrb[0].mxu0
  %v614 = vpop.f32.mrb[0].mxu0
  %v615 = vadd.f32 0.0, %v614
  %v616 = vpop.f32.mrb[0].mxu0
  %617 = vmatprep.mubr.bf16.mxu0 0
  %618 = vmatmul.mubr.bf16.gmra.mrb[0].mxu0 %v338
  %v619 = vpop.f32.mrb[0].mxu0
  %v620 = vadd.f32 0.0, %v619
  %v621 = vpop.f32.mrb[0].mxu0
  %v622 = vpop.f32.mrb[0].mxu0
  %v623 = vadd.f32 0.0, %v622
  %v624 = vpop.f32.mrb[0].mxu0
  %625 = vmatprep.mubr.bf16.mxu0 0
  %626 = vmatmul.mubr.bf16.gmra.mrb[0].mxu0 %v341
  %v627 = vpop.f32.mrb[0].mxu0
  %v628 = vadd.f32 0.0, %v627
  %v629 = vpop.f32.mrb[0].mxu0
  %v630 = vpop.f32.mrb[0].mxu0
  %v631 = vadd.f32 0.0, %v630
  %v632 = vpop.f32.mrb[0].mxu0
  %633 = vmatprep.mubr.bf16.mxu0 0
  %634 = vmatmul.mubr.bf16.gmra.mrb[0].mxu0 %v344
  %v635 = vpop.f32.mrb[0].mxu0
  %v636 = vadd.f32 0.0, %v635
  %v637 = vpop.f32.mrb[0].mxu0
  %v638 = vpop.f32.mrb[0].mxu0
  %v639 = vadd.f32 0.0, %v638
  %v640 = vpop.f32.mrb[0].mxu0
  %641 = vdwg.mxu0
  %v642 = vld [vmem:[%s2] sm:$0x1]
  %v644 = vlaneseq
  %v645 = vshrl.u32 %v644, 7
  %v646 = vsub.s32 0, %v645
  %v647 = vrot.slane %v642, %v646
  %v649 = vmul.f32 %v388, %v647
  %v650 = vmul.f32 %v391, %v647
  %v651 = vmul.f32 %v396, %v647
  %v652 = vmul.f32 %v399, %v647
  %v653 = vmul.f32 %v404, %v647
  %v654 = vmul.f32 %v407, %v647
  %v655 = vmul.f32 %v412, %v647
  %v656 = vmul.f32 %v415, %v647
  %v657 = vmul.f32 %v420, %v647
  %v658 = vmul.f32 %v423, %v647
  %v659 = vmul.f32 %v428, %v647
  %v660 = vmul.f32 %v431, %v647
  %v661 = vmul.f32 %v436, %v647
  %v662 = vmul.f32 %v439, %v647
  %v663 = vmul.f32 %v444, %v647
  %v664 = vmul.f32 %v447, %v647
  %v665 = vmul.f32 %v452, %v647
  %v666 = vmul.f32 %v455, %v647
  %v667 = vmul.f32 %v460, %v647
  %v668 = vmul.f32 %v463, %v647
  %v669 = vmul.f32 %v468, %v647
  %v670 = vmul.f32 %v471, %v647
  %v671 = vmul.f32 %v476, %v647
  %v672 = vmul.f32 %v479, %v647
  %v673 = vmul.f32 %v484, %v647
  %v674 = vmul.f32 %v487, %v647
  %v675 = vmul.f32 %v492, %v647
  %v676 = vmul.f32 %v495, %v647
  %v677 = vmul.f32 %v500, %v647
  %v678 = vmul.f32 %v503, %v647
  %v679 = vmul.f32 %v508, %v647
  %v680 = vmul.f32 %v511, %v647
  %v681 = vmul.f32 %v516, %v647
  %v682 = vmul.f32 %v519, %v647
  %v683 = vmul.f32 %v524, %v647
  %v684 = vmul.f32 %v527, %v647
  %v685 = vmul.f32 %v532, %v647
  %v686 = vmul.f32 %v535, %v647
  %v687 = vmul.f32 %v540, %v647
  %v688 = vmul.f32 %v543, %v647
  %v689 = vmul.f32 %v548, %v647
  %v690 = vmul.f32 %v551, %v647
  %v691 = vmul.f32 %v556, %v647
  %v692 = vmul.f32 %v559, %v647
  %v693 = vmul.f32 %v564, %v647
  %v694 = vmul.f32 %v567, %v647
  %v695 = vmul.f32 %v572, %v647
  %v696 = vmul.f32 %v575, %v647
  %v697 = vmul.f32 %v580, %v647
  %v698 = vmul.f32 %v583, %v647
  %v699 = vmul.f32 %v588, %v647
  %v700 = vmul.f32 %v591, %v647
  %v701 = vmul.f32 %v596, %v647
  %v702 = vmul.f32 %v599, %v647
  %v703 = vmul.f32 %v604, %v647
  %v704 = vmul.f32 %v607, %v647
  %v705 = vmul.f32 %v612, %v647
  %v706 = vmul.f32 %v615, %v647
  %v707 = vmul.f32 %v620, %v647
  %v708 = vmul.f32 %v623, %v647
  %v709 = vmul.f32 %v628, %v647
  %v710 = vmul.f32 %v631, %v647
  %v711 = vmul.f32 %v636, %v647
  %v712 = vmul.f32 %v639, %v647
  %v713 = vld [vmem:[%s3] sm:$0x1]
  %v715 = vlaneseq
  %v716 = vshrl.u32 %v715, 7
  %v717 = vsub.s32 0, %v716
  %v718 = vrot.slane %v713, %v717
  %v720 = vadd.f32 %v649, %v718
  %v721 = vadd.f32 %v650, %v718
  %v722 = vadd.f32 %v651, %v718
  %v723 = vadd.f32 %v652, %v718
  %v724 = vadd.f32 %v653, %v718
  %v725 = vadd.f32 %v654, %v718
  %v726 = vadd.f32 %v655, %v718
  %v727 = vadd.f32 %v656, %v718
  %v728 = vadd.f32 %v657, %v718
  %v729 = vadd.f32 %v658, %v718
  %v730 = vadd.f32 %v659, %v718
  %v731 = vadd.f32 %v660, %v718
  %v732 = vadd.f32 %v661, %v718
  %v733 = vadd.f32 %v662, %v718
  %v734 = vadd.f32 %v663, %v718
  %v735 = vadd.f32 %v664, %v718
  %v736 = vadd.f32 %v665, %v718
  %v737 = vadd.f32 %v666, %v718
  %v738 = vadd.f32 %v667, %v718
  %v739 = vadd.f32 %v668, %v718
  %v740 = vadd.f32 %v669, %v718
  %v741 = vadd.f32 %v670, %v718
  %v742 = vadd.f32 %v671, %v718
  %v743 = vadd.f32 %v672, %v718
  %v744 = vadd.f32 %v673, %v718
  %v745 = vadd.f32 %v674, %v718
  %v746 = vadd.f32 %v675, %v718
  %v747 = vadd.f32 %v676, %v718
  %v748 = vadd.f32 %v677, %v718
  %v749 = vadd.f32 %v678, %v718
  %v750 = vadd.f32 %v679, %v718
  %v751 = vadd.f32 %v680, %v718
  %v752 = vadd.f32 %v681, %v718
  %v753 = vadd.f32 %v682, %v718
  %v754 = vadd.f32 %v683, %v718
  %v755 = vadd.f32 %v684, %v718
  %v756 = vadd.f32 %v685, %v718
  %v757 = vadd.f32 %v686, %v718
  %v758 = vadd.f32 %v687, %v718
  %v759 = vadd.f32 %v688, %v718
  %v760 = vadd.f32 %v689, %v718
  %v761 = vadd.f32 %v690, %v718
  %v762 = vadd.f32 %v691, %v718
  %v763 = vadd.f32 %v692, %v718
  %v764 = vadd.f32 %v693, %v718
  %v765 = vadd.f32 %v694, %v718
  %v766 = vadd.f32 %v695, %v718
  %v767 = vadd.f32 %v696, %v718
  %v768 = vadd.f32 %v697, %v718
  %v769 = vadd.f32 %v698, %v718
  %v770 = vadd.f32 %v699, %v718
  %v771 = vadd.f32 %v700, %v718
  %v772 = vadd.f32 %v701, %v718
  %v773 = vadd.f32 %v702, %v718
  %v774 = vadd.f32 %v703, %v718
  %v775 = vadd.f32 %v704, %v718
  %v776 = vadd.f32 %v705, %v718
  %v777 = vadd.f32 %v706, %v718
  %v778 = vadd.f32 %v707, %v718
  %v779 = vadd.f32 %v708, %v718
  %v780 = vadd.f32 %v709, %v718
  %v781 = vadd.f32 %v710, %v718
  %v782 = vadd.f32 %v711, %v718
  %v783 = vadd.f32 %v712, %v718
  %v784 = vmax.f32 %v720, 0.0
  %v785 = vmax.f32 %v721, 0.0
  %v786 = vmax.f32 %v722, 0.0
  %v787 = vmax.f32 %v723, 0.0
  %v788 = vmax.f32 %v724, 0.0
  %v789 = vmax.f32 %v725, 0.0
  %v790 = vmax.f32 %v726, 0.0
  %v791 = vmax.f32 %v727, 0.0
  %v792 = vmax.f32 %v728, 0.0
  %v793 = vmax.f32 %v729, 0.0
  %v794 = vmax.f32 %v730, 0.0
  %v795 = vmax.f32 %v731, 0.0
  %v796 = vmax.f32 %v732, 0.0
  %v797 = vmax.f32 %v733, 0.0
  %v798 = vmax.f32 %v734, 0.0
  %v799 = vmax.f32 %v735, 0.0
  %v800 = vmax.f32 %v736, 0.0
  %v801 = vmax.f32 %v737, 0.0
  %v802 = vmax.f32 %v738, 0.0
  %v803 = vmax.f32 %v739, 0.0
  %v804 = vmax.f32 %v740, 0.0
  %v805 = vmax.f32 %v741, 0.0
  %v806 = vmax.f32 %v742, 0.0
  %v807 = vmax.f32 %v743, 0.0
  %v808 = vmax.f32 %v744, 0.0
  %v809 = vmax.f32 %v745, 0.0
  %v810 = vmax.f32 %v746, 0.0
  %v811 = vmax.f32 %v747, 0.0
  %v812 = vmax.f32 %v748, 0.0
  %v813 = vmax.f32 %v749, 0.0
  %v814 = vmax.f32 %v750, 0.0
  %v815 = vmax.f32 %v751, 0.0
  %v816 = vmax.f32 %v752, 0.0
  %v817 = vmax.f32 %v753, 0.0
  %v818 = vmax.f32 %v754, 0.0
  %v819 = vmax.f32 %v755, 0.0
  %v820 = vmax.f32 %v756, 0.0
  %v821 = vmax.f32 %v757, 0.0
  %v822 = vmax.f32 %v758, 0.0
  %v823 = vmax.f32 %v759, 0.0
  %v824 = vmax.f32 %v760, 0.0
  %v825 = vmax.f32 %v761, 0.0
  %v826 = vmax.f32 %v762, 0.0
  %v827 = vmax.f32 %v763, 0.0
  %v828 = vmax.f32 %v764, 0.0
  %v829 = vmax.f32 %v765, 0.0
  %v830 = vmax.f32 %v766, 0.0
  %v831 = vmax.f32 %v767, 0.0
  %v832 = vmax.f32 %v768, 0.0
  %v833 = vmax.f32 %v769, 0.0
  %v834 = vmax.f32 %v770, 0.0
  %v835 = vmax.f32 %v771, 0.0
  %v836 = vmax.f32 %v772, 0.0
  %v837 = vmax.f32 %v773, 0.0
  %v838 = vmax.f32 %v774, 0.0
  %v839 = vmax.f32 %v775, 0.0
  %v840 = vmax.f32 %v776, 0.0
  %v841 = vmax.f32 %v777, 0.0
  %v842 = vmax.f32 %v778, 0.0
  %v843 = vmax.f32 %v779, 0.0
  %v844 = vmax.f32 %v780, 0.0
  %v845 = vmax.f32 %v781, 0.0
  %v846 = vmax.f32 %v782, 0.0
  %v847 = vmax.f32 %v783, 0.0
  %848 = vst [vmem:[%s4] sm:$0xff] %v784
  %849 = vst [vmem:[%s4 + $0x8] sm:$0xff] %v785
  %850 = vst [vmem:[%s4 + $0x10] sm:$0xff] %v786
  %851 = vst [vmem:[%s4 + $0x18] sm:$0xff] %v787
  %852 = vst [vmem:[%s4 + $0x20] sm:$0xff] %v788
  %853 = vst [vmem:[%s4 + $0x28] sm:$0xff] %v789
  %854 = vst [vmem:[%s4 + $0x30] sm:$0xff] %v790
  %855 = vst [vmem:[%s4 + $0x38] sm:$0xff] %v791
  %856 = vst [vmem:[%s4 + $0x40] sm:$0xff] %v792
  %857 = vst [vmem:[%s4 + $0x48] sm:$0xff] %v793
  %858 = vst [vmem:[%s4 + $0x50] sm:$0xff] %v794
  %859 = vst [vmem:[%s4 + $0x58] sm:$0xff] %v795
  %860 = vst [vmem:[%s4 + $0x60] sm:$0xff] %v796
  %861 = vst [vmem:[%s4 + $0x68] sm:$0xff] %v797
  %862 = vst [vmem:[%s4 + $0x70] sm:$0xff] %v798
  %863 = vst [vmem:[%s4 + $0x78] sm:$0xff] %v799
  %864 = vst [vmem:[%s4 + $0x80] sm:$0xff] %v800
  %865 = vst [vmem:[%s4 + $0x88] sm:$0xff] %v801
  %866 = vst [vmem:[%s4 + $0x90] sm:$0xff] %v802
  %867 = vst [vmem:[%s4 + $0x98] sm:$0xff] %v803
  %868 = vst [vmem:[%s4 + $0xa0] sm:$0xff] %v804
  %869 = vst [vmem:[%s4 + $0xa8] sm:$0xff] %v805
  %870 = vst [vmem:[%s4 + $0xb0] sm:$0xff] %v806
  %871 = vst [vmem:[%s4 + $0xb8] sm:$0xff] %v807
  %872 = vst [vmem:[%s4 + $0xc0] sm:$0xff] %v808
  %873 = vst [vmem:[%s4 + $0xc8] sm:$0xff] %v809
  %874 = vst [vmem:[%s4 + $0xd0] sm:$0xff] %v810
  %875 = vst [vmem:[%s4 + $0xd8] sm:$0xff] %v811
  %876 = vst [vmem:[%s4 + $0xe0] sm:$0xff] %v812
  %877 = vst [vmem:[%s4 + $0xe8] sm:$0xff] %v813
  %878 = vst [vmem:[%s4 + $0xf0] sm:$0xff] %v814
  %879 = vst [vmem:[%s4 + $0xf8] sm:$0xff] %v815
  %880 = vst [vmem:[%s4 + $0x100] sm:$0xff] %v816
  %881 = vst [vmem:[%s4 + $0x108] sm:$0xff] %v817
  %882 = vst [vmem:[%s4 + $0x110] sm:$0xff] %v818
  %883 = vst [vmem:[%s4 + $0x118] sm:$0xff] %v819
  %884 = vst [vmem:[%s4 + $0x120] sm:$0xff] %v820
  %885 = vst [vmem:[%s4 + $0x128] sm:$0xff] %v821
  %886 = vst [vmem:[%s4 + $0x130] sm:$0xff] %v822
  %887 = vst [vmem:[%s4 + $0x138] sm:$0xff] %v823
  %888 = vst [vmem:[%s4 + $0x140] sm:$0xff] %v824
  %889 = vst [vmem:[%s4 + $0x148] sm:$0xff] %v825
  %890 = vst [vmem:[%s4 + $0x150] sm:$0xff] %v826
  %891 = vst [vmem:[%s4 + $0x158] sm:$0xff] %v827
  %892 = vst [vmem:[%s4 + $0x160] sm:$0xff] %v828
  %893 = vst [vmem:[%s4 + $0x168] sm:$0xff] %v829
  %894 = vst [vmem:[%s4 + $0x170] sm:$0xff] %v830
  %895 = vst [vmem:[%s4 + $0x178] sm:$0xff] %v831
  %896 = vst [vmem:[%s4 + $0x180] sm:$0xff] %v832
  %897 = vst [vmem:[%s4 + $0x188] sm:$0xff] %v833
  %898 = vst [vmem:[%s4 + $0x190] sm:$0xff] %v834
  %899 = vst [vmem:[%s4 + $0x198] sm:$0xff] %v835
  %900 = vst [vmem:[%s4 + $0x1a0] sm:$0xff] %v836
  %901 = vst [vmem:[%s4 + $0x1a8] sm:$0xff] %v837
  %902 = vst [vmem:[%s4 + $0x1b0] sm:$0xff] %v838
  %903 = vst [vmem:[%s4 + $0x1b8] sm:$0xff] %v839
  %904 = vst [vmem:[%s4 + $0x1c0] sm:$0xff] %v840
  %905 = vst [vmem:[%s4 + $0x1c8] sm:$0xff] %v841
  %906 = vst [vmem:[%s4 + $0x1d0] sm:$0xff] %v842
  %907 = vst [vmem:[%s4 + $0x1d8] sm:$0xff] %v843
  %908 = vst [vmem:[%s4 + $0x1e0] sm:$0xff] %v844
  %909 = vst [vmem:[%s4 + $0x1e8] sm:$0xff] %v845
  %910 = vst [vmem:[%s4 + $0x1f0] sm:$0xff] %v846
  %911 = vst [vmem:[%s4 + $0x1f8] sm:$0xff] %v847
  // Predicated region
  $region18: #{se_spp_net_forward.10} parent=0 // pred_check
    _
  $region19: #{se_spp_net_forward.10} parent=0 // pred_check_branch
    %913 = sbr.rel (0) target = $region21
  $region20: #{se_spp_net_forward.10} parent=0 // pred_region
    _
  $region21: #{se_spp_net_forward.10} parent=0 // pred_fallthru
    _
  // Predicated region
  $region22: #{se_spp_net_forward.10} parent=0 // pred_check
    _
  $region23: #{se_spp_net_forward.10} parent=0 // pred_check_branch
    %915 = sbr.rel (0) target = $region25
  $region24: #{se_spp_net_forward.10} parent=0 // pred_region
    _
  $region25: #{se_spp_net_forward.10} parent=0 // pred_fallthru
    _

// kernel: se_spp_net_forward.12
$region0: #{se_spp_net_forward.12}
  #allocation0 [shape = 'u32[]', space=smem, size = 0x4, offset = 0x4, fixed_abs, tag = 'smem constant byte address 0x4 - core index']
  #allocation1 [shape = 'u32[144,128]{1,0:T(1,128)}', space=vmem, size = 0x12000, scoped, tag = 'internal scratch']
  %s0 = inlined_call_operand.vmem [shape: bf16[32,288], index: 0, kind: input, shape index: {}]
  %s1 = inlined_call_operand.vmem [shape: bf16[288,128], index: 1, kind: input, shape index: {}]
  %s2 = inlined_call_operand.vmem [shape: f32[1,128], index: 2, kind: input, shape index: {}]
  %s3 = inlined_call_operand.vmem [shape: f32[1,128], index: 3, kind: input, shape index: {}]
  %s4 = inlined_call_operand.vmem [shape: f32[32,128], index: 4, kind: output, shape index: {}]
  %s5 = sld [smem:[#allocation0]]
  $region26: #{se_spp_net_forward.12} parent=0
    _
  %s7 = ssub.s32 1, %s5
  %s8 = scalar_select 0, %s7, %s5
  // Predicated region
  $region2: #{se_spp_net_forward.12} parent=0 // pred_check
    _
  $region3: #{se_spp_net_forward.12} parent=0 // pred_check_branch
    %10 = sbr.rel (0) target = $region5
  $region4: #{se_spp_net_forward.12} parent=0 // pred_region
    _
  $region5: #{se_spp_net_forward.12} parent=0 // pred_fallthru
    _
  // Predicated region
  $region6: #{se_spp_net_forward.12} parent=0 // pred_check
    _
  $region7: #{se_spp_net_forward.12} parent=0 // pred_check_branch
    %12 = sbr.rel (0) target = $region9
  $region8: #{se_spp_net_forward.12} parent=0 // pred_region
    _
  $region9: #{se_spp_net_forward.12} parent=0 // pred_fallthru
    _
  // Predicated region
  $region10: #{se_spp_net_forward.12} parent=0 // pred_check
    _
  $region11: #{se_spp_net_forward.12} parent=0 // pred_check_branch
    %14 = sbr.rel (0) target = $region13
  $region12: #{se_spp_net_forward.12} parent=0 // pred_region
    _
  $region13: #{se_spp_net_forward.12} parent=0 // pred_fallthru
    _
  // Predicated region
  $region14: #{se_spp_net_forward.12} parent=0 // pred_check
    _
  $region15: #{se_spp_net_forward.12} parent=0 // pred_check_branch
    %16 = sbr.rel (0) target = $region17
  $region16: #{se_spp_net_forward.12} parent=0 // pred_region
    _
  $region17: #{se_spp_net_forward.12} parent=0 // pred_fallthru
    _
  %v18 = vld [vmem:[%s0] sm:$0xff]
  %v19 = vld [vmem:[%s0 + $0x8] sm:$0xf]
  %v20 = vld [vmem:[%s0 + $0xc] sm:$0xff]
  %v21 = vld [vmem:[%s0 + $0x14] sm:$0xf]
  %v22 = vld [vmem:[%s0 + $0x18] sm:$0xff]
  %v23 = vld [vmem:[%s0 + $0x20] sm:$0xf]
  %v24 = vld [vmem:[%s0 + $0x24] sm:$0xff]
  %v25 = vld [vmem:[%s0 + $0x2c] sm:$0xf]
  %v26 = vld [vmem:[%s1] sm:$0xf]
  %v27 = vld [vmem:[%s1 + $0x4] sm:$0xf]
  %v28 = vld [vmem:[%s1 + $0x8] sm:$0xf]
  %v29 = vld [vmem:[%s1 + $0xc] sm:$0xf]
  %v30 = vld [vmem:[%s1 + $0x10] sm:$0xf]
  %v31 = vld [vmem:[%s1 + $0x14] sm:$0xf]
  %v32 = vld [vmem:[%s1 + $0x18] sm:$0xf]
  %v33 = vld [vmem:[%s1 + $0x1c] sm:$0xf]
  %v34 = vld [vmem:[%s1 + $0x20] sm:$0xf]
  %v35 = vld [vmem:[%s1 + $0x24] sm:$0xf]
  %v36 = vld [vmem:[%s1 + $0x28] sm:$0xf]
  %v37 = vld [vmem:[%s1 + $0x2c] sm:$0xf]
  %v38 = vld [vmem:[%s1 + $0x30] sm:$0xf]
  %v39 = vld [vmem:[%s1 + $0x34] sm:$0xf]
  %v40 = vld [vmem:[%s1 + $0x38] sm:$0xf]
  %v41 = vld [vmem:[%s1 + $0x3c] sm:$0xf]
  %v42 = vld [vmem:[%s1 + $0x40] sm:$0xf]
  %v43 = vld [vmem:[%s1 + $0x44] sm:$0xf]
  %v44 = vld [vmem:[%s1 + $0x48] sm:$0xf]
  %v45 = vld [vmem:[%s1 + $0x4c] sm:$0xf]
  %v46 = vld [vmem:[%s1 + $0x50] sm:$0xf]
  %v47 = vld [vmem:[%s1 + $0x54] sm:$0xf]
  %v48 = vld [vmem:[%s1 + $0x58] sm:$0xf]
  %v49 = vld [vmem:[%s1 + $0x5c] sm:$0xf]
  %v50 = vld [vmem:[%s1 + $0x60] sm:$0xf]
  %v51 = vld [vmem:[%s1 + $0x64] sm:$0xf]
  %v52 = vld [vmem:[%s1 + $0x68] sm:$0xf]
  %v53 = vld [vmem:[%s1 + $0x6c] sm:$0xf]
  %v54 = vld [vmem:[%s1 + $0x70] sm:$0xf]
  %v55 = vld [vmem:[%s1 + $0x74] sm:$0xf]
  %v56 = vld [vmem:[%s1 + $0x78] sm:$0xf]
  %v57 = vld [vmem:[%s1 + $0x7c] sm:$0xf]
  %v58 = vld [vmem:[%s1 + $0x80] sm:$0xf]
  %v59 = vld [vmem:[%s1 + $0x84] sm:$0xf]
  %v60 = vld [vmem:[%s1 + $0x88] sm:$0xf]
  %v61 = vld [vmem:[%s1 + $0x8c] sm:$0xf]
  %v70 = vunpack.c.l.b16 %v18
  %v71 = vunpack.c.h.b16 %v18
  %v72 = vunpack.c.l.b16 %v19
  %v73 = vunpack.c.l.b16 %v20
  %v74 = vunpack.c.h.b16 %v20
  %v75 = vunpack.c.l.b16 %v21
  %v76 = vunpack.c.l.b16 %v22
  %v77 = vunpack.c.h.b16 %v22
  %v78 = vunpack.c.l.b16 %v23
  %v79 = vunpack.c.l.b16 %v24
  %v80 = vunpack.c.h.b16 %v24
  %v81 = vunpack.c.l.b16 %v25
  %v82 = vpack.c.b16 %v73, %v70
  %v83 = vpack.c.b16 %v74, %v71
  %v84 = vpack.c.b16 %v75, %v72
  %v85 = vpack.c.b16 %v79, %v76
  %v86 = vpack.c.b16 %v80, %v77
  %v87 = vpack.c.b16 %v81, %v78
  %v128 = vunpack.c.l.b16 %v26
  %v129 = vunpack.c.l.b16 %v27
  %v130 = vunpack.c.l.b16 %v28
  %v131 = vunpack.c.l.b16 %v29
  %v132 = vunpack.c.l.b16 %v30
  %v133 = vunpack.c.l.b16 %v31
  %v134 = vunpack.c.l.b16 %v32
  %v135 = vunpack.c.l.b16 %v33
  %v136 = vunpack.c.l.b16 %v34
  %v137 = vunpack.c.l.b16 %v35
  %v138 = vunpack.c.l.b16 %v36
  %v139 = vunpack.c.l.b16 %v37
  %v140 = vunpack.c.l.b16 %v38
  %v141 = vunpack.c.l.b16 %v39
  %v142 = vunpack.c.l.b16 %v40
  %v143 = vunpack.c.l.b16 %v41
  %v144 = vunpack.c.l.b16 %v42
  %v145 = vunpack.c.l.b16 %v43
  %v146 = vunpack.c.l.b16 %v44
  %v147 = vunpack.c.l.b16 %v45
  %v148 = vunpack.c.l.b16 %v46
  %v149 = vunpack.c.l.b16 %v47
  %v150 = vunpack.c.l.b16 %v48
  %v151 = vunpack.c.l.b16 %v49
  %v152 = vunpack.c.l.b16 %v50
  %v153 = vunpack.c.l.b16 %v51
  %v154 = vunpack.c.l.b16 %v52
  %v155 = vunpack.c.l.b16 %v53
  %v156 = vunpack.c.l.b16 %v54
  %v157 = vunpack.c.l.b16 %v55
  %v158 = vunpack.c.l.b16 %v56
  %v159 = vunpack.c.l.b16 %v57
  %v160 = vunpack.c.l.b16 %v58
  %v161 = vunpack.c.l.b16 %v59
  %v162 = vunpack.c.l.b16 %v60
  %v163 = vunpack.c.l.b16 %v61
  %v164 = vpack.c.b16 %v129, %v128
  %v165 = vpack.c.b16 %v131, %v130
  %v166 = vpack.c.b16 %v133, %v132
  %v167 = vpack.c.b16 %v135, %v134
  %v168 = vpack.c.b16 %v137, %v136
  %v169 = vpack.c.b16 %v139, %v138
  %v170 = vpack.c.b16 %v141, %v140
  %v171 = vpack.c.b16 %v143, %v142
  %v172 = vpack.c.b16 %v145, %v144
  %v173 = vpack.c.b16 %v147, %v146
  %v174 = vpack.c.b16 %v149, %v148
  %v175 = vpack.c.b16 %v151, %v150
  %v176 = vpack.c.b16 %v153, %v152
  %v177 = vpack.c.b16 %v155, %v154
  %v178 = vpack.c.b16 %v157, %v156
  %v179 = vpack.c.b16 %v159, %v158
  %v180 = vpack.c.b16 %v161, %v160
  %v181 = vpack.c.b16 %v163, %v162
  %vm200 = vcmask 261120
  %v202 = vsel %vm200, %v84, 0
  %v205 = vsel %vm200, %v87, 0
  %207 = vmatprep.subr.bf16.mxu0 0
  %208 = vmatpush1.bf16.msra.mxu0 %v164
  %209 = vmatprep.subr.bf16.mxu0 0
  %210 = vmatpush1.bf16.msra.mxu0 %v165
  %211 = vmatprep.subr.bf16.mxu0 0
  %212 = vmatpush1.bf16.msra.mxu0 %v166
  %213 = vmatprep.subr.bf16.mxu0 0
  %214 = vmatpush1.bf16.msra.mxu0 %v167
  %215 = vmatprep.subr.bf16.mxu0 0
  %216 = vmatpush1.bf16.msra.mxu0 %v168
  %217 = vmatprep.subr.bf16.mxu0 0
  %218 = vmatpush1.bf16.msra.mxu0 %v169
  %219 = vmatprep.subr.bf16.mxu0 0
  %220 = vmatpush1.bf16.msra.mxu0 %v170
  %221 = vmatprep.subr.bf16.mxu0 0
  %222 = vmatpush1.bf16.msra.mxu0 %v171
  %223 = vmatprep.subr.bf16.mxu0 0
  %224 = vmatpush1.bf16.msra.mxu0 %v172
  %225 = vmatprep.subr.bf16.mxu0 0
  %226 = vmatpush1.bf16.msra.mxu0 %v173
  %227 = vmatprep.subr.bf16.mxu0 0
  %228 = vmatpush1.bf16.msra.mxu0 %v174
  %229 = vmatprep.subr.bf16.mxu0 0
  %230 = vmatpush1.bf16.msra.mxu0 %v175
  %231 = vmatprep.subr.bf16.mxu0 0
  %232 = vmatpush1.bf16.msra.mxu0 %v176
  %233 = vmatprep.subr.bf16.mxu0 0
  %234 = vmatpush1.bf16.msra.mxu0 %v177
  %235 = vmatprep.subr.bf16.mxu0 0
  %236 = vmatpush1.bf16.msra.mxu0 %v178
  %237 = vmatprep.subr.bf16.mxu0 0
  %238 = vmatpush1.bf16.msra.mxu0 %v179
  %239 = vmatprep.mubr.bf16.mxu0 %v83
  %240 = vmatmul.mubr.bf16.gmra.mrb[0].mxu0 %v82
  %v241 = vpop.f32.mrb[0].mxu0
  %v242 = vadd.f32 0.0, %v241
  %v243 = vpop.f32.mrb[0].mxu0
  %v244 = vpop.f32.mrb[0].mxu0
  %v245 = vadd.f32 0.0, %v244
  %v246 = vpop.f32.mrb[0].mxu0
  %247 = vmatprep.mubr.bf16.mxu0 %v86
  %248 = vmatmul.mubr.bf16.gmra.mrb[0].mxu0 %v85
  %v249 = vpop.f32.mrb[0].mxu0
  %v250 = vadd.f32 0.0, %v249
  %v251 = vpop.f32.mrb[0].mxu0
  %v252 = vpop.f32.mrb[0].mxu0
  %v253 = vadd.f32 0.0, %v252
  %v254 = vpop.f32.mrb[0].mxu0
  %255 = vdwg.mxu0
  %256 = vmatprep.subr.bf16.mxu0 0
  %257 = vmatpush1.bf16.msra.mxu0 %v180
  %258 = vmatprep.subr.bf16.mxu0 0
  %259 = vmatpush1.bf16.msra.mxu0 %v181
  %260 = vmatprep.subr.bf16.mxu0 0
  %261 = vmatpush1.bf16.msra.mxu0 0
  %262 = vmatprep.subr.bf16.mxu0 0
  %263 = vmatpush1.bf16.msra.mxu0 0
  %264 = vmatprep.subr.bf16.mxu0 0
  %265 = vmatpush1.bf16.msra.mxu0 0
  %266 = vmatprep.subr.bf16.mxu0 0
  %267 = vmatpush1.bf16.msra.mxu0 0
  %268 = vmatprep.subr.bf16.mxu0 0
  %269 = vmatpush1.bf16.msra.mxu0 0
  %270 = vmatprep.subr.bf16.mxu0 0
  %271 = vmatpush1.bf16.msra.mxu0 0
  %272 = vmatprep.subr.bf16.mxu0 0
  %273 = vmatpush1.bf16.msra.mxu0 0
  %274 = vmatprep.subr.bf16.mxu0 0
  %275 = vmatpush1.bf16.msra.mxu0 0
  %276 = vmatprep.subr.bf16.mxu0 0
  %277 = vmatpush1.bf16.msra.mxu0 0
  %278 = vmatprep.subr.bf16.mxu0 0
  %279 = vmatpush1.bf16.msra.mxu0 0
  %280 = vmatprep.subr.bf16.mxu0 0
  %281 = vmatpush1.bf16.msra.mxu0 0
  %282 = vmatprep.subr.bf16.mxu0 0
  %283 = vmatpush1.bf16.msra.mxu0 0
  %284 = vmatprep.subr.bf16.mxu0 0
  %285 = vmatpush1.bf16.msra.mxu0 0
  %286 = vmatprep.subr.bf16.mxu0 0
  %287 = vmatpush1.bf16.msra.mxu0 0
  %288 = vmatprep.mubr.bf16.mxu0 0
  %289 = vmatmul.mubr.bf16.gmra.mrb[0].mxu0 %v202
  %v290 = vpop.f32.mrb[0].mxu0
  %v291 = vadd.f32 %v242, %v290
  %v292 = vpop.f32.mrb[0].mxu0
  %v293 = vpop.f32.mrb[0].mxu0
  %v294 = vadd.f32 %v245, %v293
  %v295 = vpop.f32.mrb[0].mxu0
  %296 = vmatprep.mubr.bf16.mxu0 0
  %297 = vmatmul.mubr.bf16.gmra.mrb[0].mxu0 %v205
  %v298 = vpop.f32.mrb[0].mxu0
  %v299 = vadd.f32 %v250, %v298
  %v300 = vpop.f32.mrb[0].mxu0
  %v301 = vpop.f32.mrb[0].mxu0
  %v302 = vadd.f32 %v253, %v301
  %v303 = vpop.f32.mrb[0].mxu0
  %304 = vdwg.mxu0
  %v305 = vld [vmem:[%s2] sm:$0x1]
  %v307 = vlaneseq
  %v308 = vshrl.u32 %v307, 7
  %v309 = vsub.s32 0, %v308
  %v310 = vrot.slane %v305, %v309
  %v312 = vmul.f32 %v291, %v310
  %v313 = vmul.f32 %v294, %v310
  %v314 = vmul.f32 %v299, %v310
  %v315 = vmul.f32 %v302, %v310
  %v316 = vld [vmem:[%s3] sm:$0x1]
  %v318 = vlaneseq
  %v319 = vshrl.u32 %v318, 7
  %v320 = vsub.s32 0, %v319
  %v321 = vrot.slane %v316, %v320
  %v323 = vadd.f32 %v312, %v321
  %v324 = vadd.f32 %v313, %v321
  %v325 = vadd.f32 %v314, %v321
  %v326 = vadd.f32 %v315, %v321
  %v327 = vmax.f32 %v323, 0.0
  %v328 = vmax.f32 %v324, 0.0
  %v329 = vmax.f32 %v325, 0.0
  %v330 = vmax.f32 %v326, 0.0
  %331 = vst [vmem:[%s4] sm:$0xff] %v327
  %332 = vst [vmem:[%s4 + $0x8] sm:$0xff] %v328
  %333 = vst [vmem:[%s4 + $0x10] sm:$0xff] %v329
  %334 = vst [vmem:[%s4 + $0x18] sm:$0xff] %v330
  // Predicated region
  $region18: #{se_spp_net_forward.12} parent=0 // pred_check
    _
  $region19: #{se_spp_net_forward.12} parent=0 // pred_check_branch
    %336 = sbr.rel (0) target = $region21
  $region20: #{se_spp_net_forward.12} parent=0 // pred_region
    _
  $region21: #{se_spp_net_forward.12} parent=0 // pred_fallthru
    _
  // Predicated region
  $region22: #{se_spp_net_forward.12} parent=0 // pred_check
    _
  $region23: #{se_spp_net_forward.12} parent=0 // pred_check_branch
    %338 = sbr.rel (0) target = $region25
  $region24: #{se_spp_net_forward.12} parent=0 // pred_region
    _
  $region25: #{se_spp_net_forward.12} parent=0 // pred_fallthru
    _

// kernel: se_spp_net_forward.16
$region0: #{se_spp_net_forward.16}
  #allocation0 [shape = 'u32[]', space=smem, size = 0x4, offset = 0x4, fixed_abs, tag = 'smem constant byte address 0x4 - core index']
  #allocation1 [shape = 'u32[144,128]{1,0:T(1,128)}', space=vmem, size = 0x12000, scoped, tag = 'internal scratch']
  %s0 = inlined_call_operand.vmem [shape: bf16[32,576], index: 0, kind: input, shape index: {}]
  %s1 = inlined_call_operand.vmem [shape: bf16[576,128], index: 1, kind: input, shape index: {}]
  %s2 = inlined_call_operand.vmem [shape: f32[1,128], index: 2, kind: input, shape index: {}]
  %s3 = inlined_call_operand.vmem [shape: f32[1,128], index: 3, kind: input, shape index: {}]
  %s4 = inlined_call_operand.vmem [shape: f32[32,128], index: 4, kind: output, shape index: {}]
  %s5 = sld [smem:[#allocation0]]
  $region26: #{se_spp_net_forward.16} parent=0
    _
  %s7 = ssub.s32 1, %s5
  %s8 = scalar_select 0, %s7, %s5
  // Predicated region
  $region2: #{se_spp_net_forward.16} parent=0 // pred_check
    _
  $region3: #{se_spp_net_forward.16} parent=0 // pred_check_branch
    %10 = sbr.rel (0) target = $region5
  $region4: #{se_spp_net_forward.16} parent=0 // pred_region
    _
  $region5: #{se_spp_net_forward.16} parent=0 // pred_fallthru
    _
  // Predicated region
  $region6: #{se_spp_net_forward.16} parent=0 // pred_check
    _
  $region7: #{se_spp_net_forward.16} parent=0 // pred_check_branch
    %12 = sbr.rel (0) target = $region9
  $region8: #{se_spp_net_forward.16} parent=0 // pred_region
    _
  $region9: #{se_spp_net_forward.16} parent=0 // pred_fallthru
    _
  // Predicated region
  $region10: #{se_spp_net_forward.16} parent=0 // pred_check
    _
  $region11: #{se_spp_net_forward.16} parent=0 // pred_check_branch
    %14 = sbr.rel (0) target = $region13
  $region12: #{se_spp_net_forward.16} parent=0 // pred_region
    _
  $region13: #{se_spp_net_forward.16} parent=0 // pred_fallthru
    _
  // Predicated region
  $region14: #{se_spp_net_forward.16} parent=0 // pred_check
    _
  $region15: #{se_spp_net_forward.16} parent=0 // pred_check_branch
    %16 = sbr.rel (0) target = $region17
  $region16: #{se_spp_net_forward.16} parent=0 // pred_region
    _
  $region17: #{se_spp_net_forward.16} parent=0 // pred_fallthru
    _
  %v18 = vld [vmem:[%s0] sm:$0xff]
  %v19 = vld [vmem:[%s0 + $0x8] sm:$0xff]
  %v20 = vld [vmem:[%s0 + $0x10] sm:$0xf]
  %v21 = vld [vmem:[%s0 + $0x14] sm:$0xff]
  %v22 = vld [vmem:[%s0 + $0x1c] sm:$0xff]
  %v23 = vld [vmem:[%s0 + $0x24] sm:$0xf]
  %v24 = vld [vmem:[%s0 + $0x28] sm:$0xff]
  %v25 = vld [vmem:[%s0 + $0x30] sm:$0xff]
  %v26 = vld [vmem:[%s0 + $0x38] sm:$0xf]
  %v27 = vld [vmem:[%s0 + $0x3c] sm:$0xff]
  %v28 = vld [vmem:[%s0 + $0x44] sm:$0xff]
  %v29 = vld [vmem:[%s0 + $0x4c] sm:$0xf]
  %v30 = vld [vmem:[%s1] sm:$0xf]
  %v31 = vld [vmem:[%s1 + $0x4] sm:$0xf]
  %v32 = vld [vmem:[%s1 + $0x8] sm:$0xf]
  %v33 = vld [vmem:[%s1 + $0xc] sm:$0xf]
  %v34 = vld [vmem:[%s1 + $0x10] sm:$0xf]
  %v35 = vld [vmem:[%s1 + $0x14] sm:$0xf]
  %v36 = vld [vmem:[%s1 + $0x18] sm:$0xf]
  %v37 = vld [vmem:[%s1 + $0x1c] sm:$0xf]
  %v38 = vld [vmem:[%s1 + $0x20] sm:$0xf]
  %v39 = vld [vmem:[%s1 + $0x24] sm:$0xf]
  %v40 = vld [vmem:[%s1 + $0x28] sm:$0xf]
  %v41 = vld [vmem:[%s1 + $0x2c] sm:$0xf]
  %v42 = vld [vmem:[%s1 + $0x30] sm:$0xf]
  %v43 = vld [vmem:[%s1 + $0x34] sm:$0xf]
  %v44 = vld [vmem:[%s1 + $0x38] sm:$0xf]
  %v45 = vld [vmem:[%s1 + $0x3c] sm:$0xf]
  %v46 = vld [vmem:[%s1 + $0x40] sm:$0xf]
  %v47 = vld [vmem:[%s1 + $0x44] sm:$0xf]
  %v48 = vld [vmem:[%s1 + $0x48] sm:$0xf]
  %v49 = vld [vmem:[%s1 + $0x4c] sm:$0xf]
  %v50 = vld [vmem:[%s1 + $0x50] sm:$0xf]
  %v51 = vld [vmem:[%s1 + $0x54] sm:$0xf]
  %v52 = vld [vmem:[%s1 + $0x58] sm:$0xf]
  %v53 = vld [vmem:[%s1 + $0x5c] sm:$0xf]
  %v54 = vld [vmem:[%s1 + $0x60] sm:$0xf]
  %v55 = vld [vmem:[%s1 + $0x64] sm:$0xf]
  %v56 = vld [vmem:[%s1 + $0x68] sm:$0xf]
  %v57 = vld [vmem:[%s1 + $0x6c] sm:$0xf]
  %v58 = vld [vmem:[%s1 + $0x70] sm:$0xf]
  %v59 = vld [vmem:[%s1 + $0x74] sm:$0xf]
  %v60 = vld [vmem:[%s1 + $0x78] sm:$0xf]
  %v61 = vld [vmem:[%s1 + $0x7c] sm:$0xf]
  %v62 = vld [vmem:[%s1 + $0x80] sm:$0xf]
  %v63 = vld [vmem:[%s1 + $0x84] sm:$0xf]
  %v64 = vld [vmem:[%s1 + $0x88] sm:$0xf]
  %v65 = vld [vmem:[%s1 + $0x8c] sm:$0xf]
  %v66 = vld [vmem:[%s1 + $0x90] sm:$0xf]
  %v67 = vld [vmem:[%s1 + $0x94] sm:$0xf]
  %v68 = vld [vmem:[%s1 + $0x98] sm:$0xf]
  %v69 = vld [vmem:[%s1 + $0x9c] sm:$0xf]
  %v70 = vld [vmem:[%s1 + $0xa0] sm:$0xf]
  %v71 = vld [vmem:[%s1 + $0xa4] sm:$0xf]
  %v72 = vld [vmem:[%s1 + $0xa8] sm:$0xf]
  %v73 = vld [vmem:[%s1 + $0xac] sm:$0xf]
  %v74 = vld [vmem:[%s1 + $0xb0] sm:$0xf]
  %v75 = vld [vmem:[%s1 + $0xb4] sm:$0xf]
  %v76 = vld [vmem:[%s1 + $0xb8] sm:$0xf]
  %v77 = vld [vmem:[%s1 + $0xbc] sm:$0xf]
  %v78 = vld [vmem:[%s1 + $0xc0] sm:$0xf]
  %v79 = vld [vmem:[%s1 + $0xc4] sm:$0xf]
  %v80 = vld [vmem:[%s1 + $0xc8] sm:$0xf]
  %v81 = vld [vmem:[%s1 + $0xcc] sm:$0xf]
  %v82 = vld [vmem:[%s1 + $0xd0] sm:$0xf]
  %v83 = vld [vmem:[%s1 + $0xd4] sm:$0xf]
  %v84 = vld [vmem:[%s1 + $0xd8] sm:$0xf]
  %v85 = vld [vmem:[%s1 + $0xdc] sm:$0xf]
  %v86 = vld [vmem:[%s1 + $0xe0] sm:$0xf]
  %v87 = vld [vmem:[%s1 + $0xe4] sm:$0xf]
  %v88 = vld [vmem:[%s1 + $0xe8] sm:$0xf]
  %v89 = vld [vmem:[%s1 + $0xec] sm:$0xf]
  %v90 = vld [vmem:[%s1 + $0xf0] sm:$0xf]
  %v91 = vld [vmem:[%s1 + $0xf4] sm:$0xf]
  %v92 = vld [vmem:[%s1 + $0xf8] sm:$0xf]
  %v93 = vld [vmem:[%s1 + $0xfc] sm:$0xf]
  %v94 = vld [vmem:[%s1 + $0x100] sm:$0xf]
  %v95 = vld [vmem:[%s1 + $0x104] sm:$0xf]
  %v96 = vld [vmem:[%s1 + $0x108] sm:$0xf]
  %v97 = vld [vmem:[%s1 + $0x10c] sm:$0xf]
  %v98 = vld [vmem:[%s1 + $0x110] sm:$0xf]
  %v99 = vld [vmem:[%s1 + $0x114] sm:$0xf]
  %v100 = vld [vmem:[%s1 + $0x118] sm:$0xf]
  %v101 = vld [vmem:[%s1 + $0x11c] sm:$0xf]
  %v114 = vunpack.c.l.b16 %v18
  %v115 = vunpack.c.h.b16 %v18
  %v116 = vunpack.c.l.b16 %v19
  %v117 = vunpack.c.h.b16 %v19
  %v118 = vunpack.c.l.b16 %v20
  %v119 = vunpack.c.l.b16 %v21
  %v120 = vunpack.c.h.b16 %v21
  %v121 = vunpack.c.l.b16 %v22
  %v122 = vunpack.c.h.b16 %v22
  %v123 = vunpack.c.l.b16 %v23
  %v124 = vunpack.c.l.b16 %v24
  %v125 = vunpack.c.h.b16 %v24
  %v126 = vunpack.c.l.b16 %v25
  %v127 = vunpack.c.h.b16 %v25
  %v128 = vunpack.c.l.b16 %v26
  %v129 = vunpack.c.l.b16 %v27
  %v130 = vunpack.c.h.b16 %v27
  %v131 = vunpack.c.l.b16 %v28
  %v132 = vunpack.c.h.b16 %v28
  %v133 = vunpack.c.l.b16 %v29
  %v134 = vpack.c.b16 %v119, %v114
  %v135 = vpack.c.b16 %v120, %v115
  %v136 = vpack.c.b16 %v121, %v116
  %v137 = vpack.c.b16 %v122, %v117
  %v138 = vpack.c.b16 %v123, %v118
  %v139 = vpack.c.b16 %v129, %v124
  %v140 = vpack.c.b16 %v130, %v125
  %v141 = vpack.c.b16 %v131, %v126
  %v142 = vpack.c.b16 %v132, %v127
  %v143 = vpack.c.b16 %v133, %v128
  %v224 = vunpack.c.l.b16 %v30
  %v225 = vunpack.c.l.b16 %v31
  %v226 = vunpack.c.l.b16 %v32
  %v227 = vunpack.c.l.b16 %v33
  %v228 = vunpack.c.l.b16 %v34
  %v229 = vunpack.c.l.b16 %v35
  %v230 = vunpack.c.l.b16 %v36
  %v231 = vunpack.c.l.b16 %v37
  %v232 = vunpack.c.l.b16 %v38
  %v233 = vunpack.c.l.b16 %v39
  %v234 = vunpack.c.l.b16 %v40
  %v235 = vunpack.c.l.b16 %v41
  %v236 = vunpack.c.l.b16 %v42
  %v237 = vunpack.c.l.b16 %v43
  %v238 = vunpack.c.l.b16 %v44
  %v239 = vunpack.c.l.b16 %v45
  %v240 = vunpack.c.l.b16 %v46
  %v241 = vunpack.c.l.b16 %v47
  %v242 = vunpack.c.l.b16 %v48
  %v243 = vunpack.c.l.b16 %v49
  %v244 = vunpack.c.l.b16 %v50
  %v245 = vunpack.c.l.b16 %v51
  %v246 = vunpack.c.l.b16 %v52
  %v247 = vunpack.c.l.b16 %v53
  %v248 = vunpack.c.l.b16 %v54
  %v249 = vunpack.c.l.b16 %v55
  %v250 = vunpack.c.l.b16 %v56
  %v251 = vunpack.c.l.b16 %v57
  %v252 = vunpack.c.l.b16 %v58
  %v253 = vunpack.c.l.b16 %v59
  %v254 = vunpack.c.l.b16 %v60
  %v255 = vunpack.c.l.b16 %v61
  %v256 = vunpack.c.l.b16 %v62
  %v257 = vunpack.c.l.b16 %v63
  %v258 = vunpack.c.l.b16 %v64
  %v259 = vunpack.c.l.b16 %v65
  %v260 = vunpack.c.l.b16 %v66
  %v261 = vunpack.c.l.b16 %v67
  %v262 = vunpack.c.l.b16 %v68
  %v263 = vunpack.c.l.b16 %v69
  %v264 = vunpack.c.l.b16 %v70
  %v265 = vunpack.c.l.b16 %v71
  %v266 = vunpack.c.l.b16 %v72
  %v267 = vunpack.c.l.b16 %v73
  %v268 = vunpack.c.l.b16 %v74
  %v269 = vunpack.c.l.b16 %v75
  %v270 = vunpack.c.l.b16 %v76
  %v271 = vunpack.c.l.b16 %v77
  %v272 = vunpack.c.l.b16 %v78
  %v273 = vunpack.c.l.b16 %v79
  %v274 = vunpack.c.l.b16 %v80
  %v275 = vunpack.c.l.b16 %v81
  %v276 = vunpack.c.l.b16 %v82
  %v277 = vunpack.c.l.b16 %v83
  %v278 = vunpack.c.l.b16 %v84
  %v279 = vunpack.c.l.b16 %v85
  %v280 = vunpack.c.l.b16 %v86
  %v281 = vunpack.c.l.b16 %v87
  %v282 = vunpack.c.l.b16 %v88
  %v283 = vunpack.c.l.b16 %v89
  %v284 = vunpack.c.l.b16 %v90
  %v285 = vunpack.c.l.b16 %v91
  %v286 = vunpack.c.l.b16 %v92
  %v287 = vunpack.c.l.b16 %v93
  %v288 = vunpack.c.l.b16 %v94
  %v289 = vunpack.c.l.b16 %v95
  %v290 = vunpack.c.l.b16 %v96
  %v291 = vunpack.c.l.b16 %v97
  %v292 = vunpack.c.l.b16 %v98
  %v293 = vunpack.c.l.b16 %v99
  %v294 = vunpack.c.l.b16 %v100
  %v295 = vunpack.c.l.b16 %v101
  %v296 = vpack.c.b16 %v225, %v224
  %v297 = vpack.c.b16 %v227, %v226
  %v298 = vpack.c.b16 %v229, %v228
  %v299 = vpack.c.b16 %v231, %v230
  %v300 = vpack.c.b16 %v233, %v232
  %v301 = vpack.c.b16 %v235, %v234
  %v302 = vpack.c.b16 %v237, %v236
  %v303 = vpack.c.b16 %v239, %v238
  %v304 = vpack.c.b16 %v241, %v240
  %v305 = vpack.c.b16 %v243, %v242
  %v306 = vpack.c.b16 %v245, %v244
  %v307 = vpack.c.b16 %v247, %v246
  %v308 = vpack.c.b16 %v249, %v248
  %v309 = vpack.c.b16 %v251, %v250
  %v310 = vpack.c.b16 %v253, %v252
  %v311 = vpack.c.b16 %v255, %v254
  %v312 = vpack.c.b16 %v257, %v256
  %v313 = vpack.c.b16 %v259, %v258
  %v314 = vpack.c.b16 %v261, %v260
  %v315 = vpack.c.b16 %v263, %v262
  %v316 = vpack.c.b16 %v265, %v264
  %v317 = vpack.c.b16 %v267, %v266
  %v318 = vpack.c.b16 %v269, %v268
  %v319 = vpack.c.b16 %v271, %v270
  %v320 = vpack.c.b16 %v273, %v272
  %v321 = vpack.c.b16 %v275, %v274
  %v322 = vpack.c.b16 %v277, %v276
  %v323 = vpack.c.b16 %v279, %v278
  %v324 = vpack.c.b16 %v281, %v280
  %v325 = vpack.c.b16 %v283, %v282
  %v326 = vpack.c.b16 %v285, %v284
  %v327 = vpack.c.b16 %v287, %v286
  %v328 = vpack.c.b16 %v289, %v288
  %v329 = vpack.c.b16 %v291, %v290
  %v330 = vpack.c.b16 %v293, %v292
  %v331 = vpack.c.b16 %v295, %v294
  %vm368 = vcmask 523264
  %v370 = vsel %vm368, %v138, 0
  %v373 = vsel %vm368, %v143, 0
  %375 = vmatprep.subr.bf16.mxu0 0
  %376 = vmatpush1.bf16.msra.mxu0 %v296
  %377 = vmatprep.subr.bf16.mxu0 0
  %378 = vmatpush1.bf16.msra.mxu0 %v297
  %379 = vmatprep.subr.bf16.mxu0 0
  %380 = vmatpush1.bf16.msra.mxu0 %v298
  %381 = vmatprep.subr.bf16.mxu0 0
  %382 = vmatpush1.bf16.msra.mxu0 %v299
  %383 = vmatprep.subr.bf16.mxu0 0
  %384 = vmatpush1.bf16.msra.mxu0 %v300
  %385 = vmatprep.subr.bf16.mxu0 0
  %386 = vmatpush1.bf16.msra.mxu0 %v301
  %387 = vmatprep.subr.bf16.mxu0 0
  %388 = vmatpush1.bf16.msra.mxu0 %v302
  %389 = vmatprep.subr.bf16.mxu0 0
  %390 = vmatpush1.bf16.msra.mxu0 %v303
  %391 = vmatprep.subr.bf16.mxu0 0
  %392 = vmatpush1.bf16.msra.mxu0 %v304
  %393 = vmatprep.subr.bf16.mxu0 0
  %394 = vmatpush1.bf16.msra.mxu0 %v305
  %395 = vmatprep.subr.bf16.mxu0 0
  %396 = vmatpush1.bf16.msra.mxu0 %v306
  %397 = vmatprep.subr.bf16.mxu0 0
  %398 = vmatpush1.bf16.msra.mxu0 %v307
  %399 = vmatprep.subr.bf16.mxu0 0
  %400 = vmatpush1.bf16.msra.mxu0 %v308
  %401 = vmatprep.subr.bf16.mxu0 0
  %402 = vmatpush1.bf16.msra.mxu0 %v309
  %403 = vmatprep.subr.bf16.mxu0 0
  %404 = vmatpush1.bf16.msra.mxu0 %v310
  %405 = vmatprep.subr.bf16.mxu0 0
  %406 = vmatpush1.bf16.msra.mxu0 %v311
  %407 = vmatprep.mubr.bf16.mxu0 %v135
  %408 = vmatmul.mubr.bf16.gmra.mrb[0].mxu0 %v134
  %v409 = vpop.f32.mrb[0].mxu0
  %v410 = vadd.f32 0.0, %v409
  %v411 = vpop.f32.mrb[0].mxu0
  %v412 = vpop.f32.mrb[0].mxu0
  %v413 = vadd.f32 0.0, %v412
  %v414 = vpop.f32.mrb[0].mxu0
  %415 = vmatprep.mubr.bf16.mxu0 %v140
  %416 = vmatmul.mubr.bf16.gmra.mrb[0].mxu0 %v139
  %v417 = vpop.f32.mrb[0].mxu0
  %v418 = vadd.f32 0.0, %v417
  %v419 = vpop.f32.mrb[0].mxu0
  %v420 = vpop.f32.mrb[0].mxu0
  %v421 = vadd.f32 0.0, %v420
  %v422 = vpop.f32.mrb[0].mxu0
  %423 = vdwg.mxu0
  %424 = vmatprep.subr.bf16.mxu0 0
  %425 = vmatpush1.bf16.msra.mxu0 %v312
  %426 = vmatprep.subr.bf16.mxu0 0
  %427 = vmatpush1.bf16.msra.mxu0 %v313
  %428 = vmatprep.subr.bf16.mxu0 0
  %429 = vmatpush1.bf16.msra.mxu0 %v314
  %430 = vmatprep.subr.bf16.mxu0 0
  %431 = vmatpush1.bf16.msra.mxu0 %v315
  %432 = vmatprep.subr.bf16.mxu0 0
  %433 = vmatpush1.bf16.msra.mxu0 %v316
  %434 = vmatprep.subr.bf16.mxu0 0
  %435 = vmatpush1.bf16.msra.mxu0 %v317
  %436 = vmatprep.subr.bf16.mxu0 0
  %437 = vmatpush1.bf16.msra.mxu0 %v318
  %438 = vmatprep.subr.bf16.mxu0 0
  %439 = vmatpush1.bf16.msra.mxu0 %v319
  %440 = vmatprep.subr.bf16.mxu0 0
  %441 = vmatpush1.bf16.msra.mxu0 %v320
  %442 = vmatprep.subr.bf16.mxu0 0
  %443 = vmatpush1.bf16.msra.mxu0 %v321
  %444 = vmatprep.subr.bf16.mxu0 0
  %445 = vmatpush1.bf16.msra.mxu0 %v322
  %446 = vmatprep.subr.bf16.mxu0 0
  %447 = vmatpush1.bf16.msra.mxu0 %v323
  %448 = vmatprep.subr.bf16.mxu0 0
  %449 = vmatpush1.bf16.msra.mxu0 %v324
  %450 = vmatprep.subr.bf16.mxu0 0
  %451 = vmatpush1.bf16.msra.mxu0 %v325
  %452 = vmatprep.subr.bf16.mxu0 0
  %453 = vmatpush1.bf16.msra.mxu0 %v326
  %454 = vmatprep.subr.bf16.mxu0 0
  %455 = vmatpush1.bf16.msra.mxu0 %v327
  %456 = vmatprep.mubr.bf16.mxu0 %v137
  %457 = vmatmul.mubr.bf16.gmra.mrb[0].mxu0 %v136
  %v458 = vpop.f32.mrb[0].mxu0
  %v459 = vadd.f32 %v410, %v458
  %v460 = vpop.f32.mrb[0].mxu0
  %v461 = vpop.f32.mrb[0].mxu0
  %v462 = vadd.f32 %v413, %v461
  %v463 = vpop.f32.mrb[0].mxu0
  %464 = vmatprep.mubr.bf16.mxu0 %v142
  %465 = vmatmul.mubr.bf16.gmra.mrb[0].mxu0 %v141
  %v466 = vpop.f32.mrb[0].mxu0
  %v467 = vadd.f32 %v418, %v466
  %v468 = vpop.f32.mrb[0].mxu0
  %v469 = vpop.f32.mrb[0].mxu0
  %v470 = vadd.f32 %v421, %v469
  %v471 = vpop.f32.mrb[0].mxu0
  %472 = vdwg.mxu0
  %473 = vmatprep.subr.bf16.mxu0 0
  %474 = vmatpush1.bf16.msra.mxu0 %v328
  %475 = vmatprep.subr.bf16.mxu0 0
  %476 = vmatpush1.bf16.msra.mxu0 %v329
  %477 = vmatprep.subr.bf16.mxu0 0
  %478 = vmatpush1.bf16.msra.mxu0 %v330
  %479 = vmatprep.subr.bf16.mxu0 0
  %480 = vmatpush1.bf16.msra.mxu0 %v331
  %481 = vmatprep.subr.bf16.mxu0 0
  %482 = vmatpush1.bf16.msra.mxu0 0
  %483 = vmatprep.subr.bf16.mxu0 0
  %484 = vmatpush1.bf16.msra.mxu0 0
  %485 = vmatprep.subr.bf16.mxu0 0
  %486 = vmatpush1.bf16.msra.mxu0 0
  %487 = vmatprep.subr.bf16.mxu0 0
  %488 = vmatpush1.bf16.msra.mxu0 0
  %489 = vmatprep.subr.bf16.mxu0 0
  %490 = vmatpush1.bf16.msra.mxu0 0
  %491 = vmatprep.subr.bf16.mxu0 0
  %492 = vmatpush1.bf16.msra.mxu0 0
  %493 = vmatprep.subr.bf16.mxu0 0
  %494 = vmatpush1.bf16.msra.mxu0 0
  %495 = vmatprep.subr.bf16.mxu0 0
  %496 = vmatpush1.bf16.msra.mxu0 0
  %497 = vmatprep.subr.bf16.mxu0 0
  %498 = vmatpush1.bf16.msra.mxu0 0
  %499 = vmatprep.subr.bf16.mxu0 0
  %500 = vmatpush1.bf16.msra.mxu0 0
  %501 = vmatprep.subr.bf16.mxu0 0
  %502 = vmatpush1.bf16.msra.mxu0 0
  %503 = vmatprep.subr.bf16.mxu0 0
  %504 = vmatpush1.bf16.msra.mxu0 0
  %505 = vmatprep.mubr.bf16.mxu0 0
  %506 = vmatmul.mubr.bf16.gmra.mrb[0].mxu0 %v370
  %v507 = vpop.f32.mrb[0].mxu0
  %v508 = vadd.f32 %v459, %v507
  %v509 = vpop.f32.mrb[0].mxu0
  %v510 = vpop.f32.mrb[0].mxu0
  %v511 = vadd.f32 %v462, %v510
  %v512 = vpop.f32.mrb[0].mxu0
  %513 = vmatprep.mubr.bf16.mxu0 0
  %514 = vmatmul.mubr.bf16.gmra.mrb[0].mxu0 %v373
  %v515 = vpop.f32.mrb[0].mxu0
  %v516 = vadd.f32 %v467, %v515
  %v517 = vpop.f32.mrb[0].mxu0
  %v518 = vpop.f32.mrb[0].mxu0
  %v519 = vadd.f32 %v470, %v518
  %v520 = vpop.f32.mrb[0].mxu0
  %521 = vdwg.mxu0
  %v522 = vld [vmem:[%s2] sm:$0x1]
  %v524 = vlaneseq
  %v525 = vshrl.u32 %v524, 7
  %v526 = vsub.s32 0, %v525
  %v527 = vrot.slane %v522, %v526
  %v529 = vmul.f32 %v508, %v527
  %v530 = vmul.f32 %v511, %v527
  %v531 = vmul.f32 %v516, %v527
  %v532 = vmul.f32 %v519, %v527
  %v533 = vld [vmem:[%s3] sm:$0x1]
  %v535 = vlaneseq
  %v536 = vshrl.u32 %v535, 7
  %v537 = vsub.s32 0, %v536
  %v538 = vrot.slane %v533, %v537
  %v540 = vadd.f32 %v529, %v538
  %v541 = vadd.f32 %v530, %v538
  %v542 = vadd.f32 %v531, %v538
  %v543 = vadd.f32 %v532, %v538
  %v544 = vmax.f32 %v540, 0.0
  %v545 = vmax.f32 %v541, 0.0
  %v546 = vmax.f32 %v542, 0.0
  %v547 = vmax.f32 %v543, 0.0
  %548 = vst [vmem:[%s4] sm:$0xff] %v544
  %549 = vst [vmem:[%s4 + $0x8] sm:$0xff] %v545
  %550 = vst [vmem:[%s4 + $0x10] sm:$0xff] %v546
  %551 = vst [vmem:[%s4 + $0x18] sm:$0xff] %v547
  // Predicated region
  $region18: #{se_spp_net_forward.16} parent=0 // pred_check
    _
  $region19: #{se_spp_net_forward.16} parent=0 // pred_check_branch
    %553 = sbr.rel (0) target = $region21
  $region20: #{se_spp_net_forward.16} parent=0 // pred_region
    _
  $region21: #{se_spp_net_forward.16} parent=0 // pred_fallthru
    _
  // Predicated region
  $region22: #{se_spp_net_forward.16} parent=0 // pred_check
    _
  $region23: #{se_spp_net_forward.16} parent=0 // pred_check_branch
    %555 = sbr.rel (0) target = $region25
  $region24: #{se_spp_net_forward.16} parent=0 // pred_region
    _
  $region25: #{se_spp_net_forward.16} parent=0 // pred_fallthru
    _

// kernel: se_spp_net_forward.18
$region0: #{se_spp_net_forward.18}
  #allocation0 [shape = 'u32[]', space=smem, size = 0x4, offset = 0x4, fixed_abs, tag = 'smem constant byte address 0x4 - core index']
  #allocation1 [shape = 'u32[144,128]{1,0:T(1,128)}', space=vmem, size = 0x12000, scoped, tag = 'internal scratch']
  %s0 = inlined_call_operand.vmem [shape: bf16[32,144], index: 0, kind: input, shape index: {}]
  %s1 = inlined_call_operand.vmem [shape: bf16[144,128], index: 1, kind: input, shape index: {}]
  %s2 = inlined_call_operand.vmem [shape: f32[1,128], index: 2, kind: input, shape index: {}]
  %s3 = inlined_call_operand.vmem [shape: f32[1,128], index: 3, kind: input, shape index: {}]
  %s4 = inlined_call_operand.vmem [shape: f32[32,128], index: 4, kind: output, shape index: {}]
  %s5 = sld [smem:[#allocation0]]
  $region26: #{se_spp_net_forward.18} parent=0
    _
  %s7 = ssub.s32 1, %s5
  %s8 = scalar_select 0, %s7, %s5
  // Predicated region
  $region2: #{se_spp_net_forward.18} parent=0 // pred_check
    _
  $region3: #{se_spp_net_forward.18} parent=0 // pred_check_branch
    %10 = sbr.rel (0) target = $region5
  $region4: #{se_spp_net_forward.18} parent=0 // pred_region
    _
  $region5: #{se_spp_net_forward.18} parent=0 // pred_fallthru
    _
  // Predicated region
  $region6: #{se_spp_net_forward.18} parent=0 // pred_check
    _
  $region7: #{se_spp_net_forward.18} parent=0 // pred_check_branch
    %12 = sbr.rel (0) target = $region9
  $region8: #{se_spp_net_forward.18} parent=0 // pred_region
    _
  $region9: #{se_spp_net_forward.18} parent=0 // pred_fallthru
    _
  // Predicated region
  $region10: #{se_spp_net_forward.18} parent=0 // pred_check
    _
  $region11: #{se_spp_net_forward.18} parent=0 // pred_check_branch
    %14 = sbr.rel (0) target = $region13
  $region12: #{se_spp_net_forward.18} parent=0 // pred_region
    _
  $region13: #{se_spp_net_forward.18} parent=0 // pred_fallthru
    _
  // Predicated region
  $region14: #{se_spp_net_forward.18} parent=0 // pred_check
    _
  $region15: #{se_spp_net_forward.18} parent=0 // pred_check_branch
    %16 = sbr.rel (0) target = $region17
  $region16: #{se_spp_net_forward.18} parent=0 // pred_region
    _
  $region17: #{se_spp_net_forward.18} parent=0 // pred_fallthru
    _
  %v18 = vld [vmem:[%s0] sm:$0xff]
  %v19 = vld [vmem:[%s0 + $0x8] sm:$0xff]
  %v20 = vld [vmem:[%s0 + $0x10] sm:$0xff]
  %v21 = vld [vmem:[%s0 + $0x18] sm:$0xff]
  %v22 = vld [vmem:[%s1] sm:$0xf]
  %v23 = vld [vmem:[%s1 + $0x4] sm:$0xf]
  %v24 = vld [vmem:[%s1 + $0x8] sm:$0xf]
  %v25 = vld [vmem:[%s1 + $0xc] sm:$0xf]
  %v26 = vld [vmem:[%s1 + $0x10] sm:$0xf]
  %v27 = vld [vmem:[%s1 + $0x14] sm:$0xf]
  %v28 = vld [vmem:[%s1 + $0x18] sm:$0xf]
  %v29 = vld [vmem:[%s1 + $0x1c] sm:$0xf]
  %v30 = vld [vmem:[%s1 + $0x20] sm:$0xf]
  %v31 = vld [vmem:[%s1 + $0x24] sm:$0xf]
  %v32 = vld [vmem:[%s1 + $0x28] sm:$0xf]
  %v33 = vld [vmem:[%s1 + $0x2c] sm:$0xf]
  %v34 = vld [vmem:[%s1 + $0x30] sm:$0xf]
  %v35 = vld [vmem:[%s1 + $0x34] sm:$0xf]
  %v36 = vld [vmem:[%s1 + $0x38] sm:$0xf]
  %v37 = vld [vmem:[%s1 + $0x3c] sm:$0xf]
  %v38 = vld [vmem:[%s1 + $0x40] sm:$0xf]
  %v39 = vld [vmem:[%s1 + $0x44] sm:$0xf]
  %v44 = vunpack.c.l.b16 %v18
  %v45 = vunpack.c.h.b16 %v18
  %v46 = vunpack.c.l.b16 %v19
  %v47 = vunpack.c.h.b16 %v19
  %v48 = vunpack.c.l.b16 %v20
  %v49 = vunpack.c.h.b16 %v20
  %v50 = vunpack.c.l.b16 %v21
  %v51 = vunpack.c.h.b16 %v21
  %v52 = vpack.c.b16 %v46, %v44
  %v53 = vpack.c.b16 %v47, %v45
  %v54 = vpack.c.b16 %v50, %v48
  %v55 = vpack.c.b16 %v51, %v49
  %v76 = vunpack.c.l.b16 %v22
  %v77 = vunpack.c.l.b16 %v23
  %v78 = vunpack.c.l.b16 %v24
  %v79 = vunpack.c.l.b16 %v25
  %v80 = vunpack.c.l.b16 %v26
  %v81 = vunpack.c.l.b16 %v27
  %v82 = vunpack.c.l.b16 %v28
  %v83 = vunpack.c.l.b16 %v29
  %v84 = vunpack.c.l.b16 %v30
  %v85 = vunpack.c.l.b16 %v31
  %v86 = vunpack.c.l.b16 %v32
  %v87 = vunpack.c.l.b16 %v33
  %v88 = vunpack.c.l.b16 %v34
  %v89 = vunpack.c.l.b16 %v35
  %v90 = vunpack.c.l.b16 %v36
  %v91 = vunpack.c.l.b16 %v37
  %v92 = vunpack.c.l.b16 %v38
  %v93 = vunpack.c.l.b16 %v39
  %v94 = vpack.c.b16 %v77, %v76
  %v95 = vpack.c.b16 %v79, %v78
  %v96 = vpack.c.b16 %v81, %v80
  %v97 = vpack.c.b16 %v83, %v82
  %v98 = vpack.c.b16 %v85, %v84
  %v99 = vpack.c.b16 %v87, %v86
  %v100 = vpack.c.b16 %v89, %v88
  %v101 = vpack.c.b16 %v91, %v90
  %v102 = vpack.c.b16 %v93, %v92
  %vm112 = vcmask 130048
  %v114 = vsel %vm112, %v53, 0
  %v117 = vsel %vm112, %v55, 0
  %119 = vmatprep.subr.bf16.mxu0 0
  %120 = vmatpush1.bf16.msra.mxu0 %v94
  %121 = vmatprep.subr.bf16.mxu0 0
  %122 = vmatpush1.bf16.msra.mxu0 %v95
  %123 = vmatprep.subr.bf16.mxu0 0
  %124 = vmatpush1.bf16.msra.mxu0 %v96
  %125 = vmatprep.subr.bf16.mxu0 0
  %126 = vmatpush1.bf16.msra.mxu0 %v97
  %127 = vmatprep.subr.bf16.mxu0 0
  %128 = vmatpush1.bf16.msra.mxu0 %v98
  %129 = vmatprep.subr.bf16.mxu0 0
  %130 = vmatpush1.bf16.msra.mxu0 %v99
  %131 = vmatprep.subr.bf16.mxu0 0
  %132 = vmatpush1.bf16.msra.mxu0 %v100
  %133 = vmatprep.subr.bf16.mxu0 0
  %134 = vmatpush1.bf16.msra.mxu0 %v101
  %135 = vmatprep.subr.bf16.mxu0 0
  %136 = vmatpush1.bf16.msra.mxu0 %v102
  %137 = vmatprep.subr.bf16.mxu0 0
  %138 = vmatpush1.bf16.msra.mxu0 0
  %139 = vmatprep.subr.bf16.mxu0 0
  %140 = vmatpush1.bf16.msra.mxu0 0
  %141 = vmatprep.subr.bf16.mxu0 0
  %142 = vmatpush1.bf16.msra.mxu0 0
  %143 = vmatprep.subr.bf16.mxu0 0
  %144 = vmatpush1.bf16.msra.mxu0 0
  %145 = vmatprep.subr.bf16.mxu0 0
  %146 = vmatpush1.bf16.msra.mxu0 0
  %147 = vmatprep.subr.bf16.mxu0 0
  %148 = vmatpush1.bf16.msra.mxu0 0
  %149 = vmatprep.subr.bf16.mxu0 0
  %150 = vmatpush1.bf16.msra.mxu0 0
  %151 = vmatprep.mubr.bf16.mxu0 %v114
  %152 = vmatmul.mubr.bf16.gmra.mrb[0].mxu0 %v52
  %v153 = vpop.f32.mrb[0].mxu0
  %v154 = vadd.f32 0.0, %v153
  %v155 = vpop.f32.mrb[0].mxu0
  %v156 = vpop.f32.mrb[0].mxu0
  %v157 = vadd.f32 0.0, %v156
  %v158 = vpop.f32.mrb[0].mxu0
  %159 = vmatprep.mubr.bf16.mxu0 %v117
  %160 = vmatmul.mubr.bf16.gmra.mrb[0].mxu0 %v54
  %v161 = vpop.f32.mrb[0].mxu0
  %v162 = vadd.f32 0.0, %v161
  %v163 = vpop.f32.mrb[0].mxu0
  %v164 = vpop.f32.mrb[0].mxu0
  %v165 = vadd.f32 0.0, %v164
  %v166 = vpop.f32.mrb[0].mxu0
  %167 = vdwg.mxu0
  %v168 = vld [vmem:[%s2] sm:$0x1]
  %v170 = vlaneseq
  %v171 = vshrl.u32 %v170, 7
  %v172 = vsub.s32 0, %v171
  %v173 = vrot.slane %v168, %v172
  %v175 = vmul.f32 %v154, %v173
  %v176 = vmul.f32 %v157, %v173
  %v177 = vmul.f32 %v162, %v173
  %v178 = vmul.f32 %v165, %v173
  %v179 = vld [vmem:[%s3] sm:$0x1]
  %v181 = vlaneseq
  %v182 = vshrl.u32 %v181, 7
  %v183 = vsub.s32 0, %v182
  %v184 = vrot.slane %v179, %v183
  %v186 = vadd.f32 %v175, %v184
  %v187 = vadd.f32 %v176, %v184
  %v188 = vadd.f32 %v177, %v184
  %v189 = vadd.f32 %v178, %v184
  %v190 = vxor.u32 %v186, 2147483648
  %v191 = vxor.u32 %v187, 2147483648
  %v192 = vxor.u32 %v188, 2147483648
  %v193 = vxor.u32 %v189, 2147483648
  %v194 = vmul.f32 %v190, 1.442695
  %v195 = vpow.pop %v194
  %v196 = vmul.f32 %v191, 1.442695
  %v197 = vpow.pop %v196
  %v198 = vmul.f32 %v192, 1.442695
  %v199 = vpow.pop %v198
  %v200 = vmul.f32 %v193, 1.442695
  %v201 = vpow.pop %v200
  %v202 = vadd.f32 %v195, 1.0
  %v203 = vadd.f32 %v197, 1.0
  %v204 = vadd.f32 %v199, 1.0
  %v205 = vadd.f32 %v201, 1.0
  %v206 = vrcp.pop %v202
  %v207 = vmul.f32 1.0, %v206
  %v208 = vrcp.pop %v203
  %v209 = vmul.f32 1.0, %v208
  %v210 = vrcp.pop %v204
  %v211 = vmul.f32 1.0, %v210
  %v212 = vrcp.pop %v205
  %v213 = vmul.f32 1.0, %v212
  %214 = vst [vmem:[%s4] sm:$0xff] %v207
  %215 = vst [vmem:[%s4 + $0x8] sm:$0xff] %v209
  %216 = vst [vmem:[%s4 + $0x10] sm:$0xff] %v211
  %217 = vst [vmem:[%s4 + $0x18] sm:$0xff] %v213
  // Predicated region
  $region18: #{se_spp_net_forward.18} parent=0 // pred_check
    _
  $region19: #{se_spp_net_forward.18} parent=0 // pred_check_branch
    %219 = sbr.rel (0) target = $region21
  $region20: #{se_spp_net_forward.18} parent=0 // pred_region
    _
  $region21: #{se_spp_net_forward.18} parent=0 // pred_fallthru
    _
  // Predicated region
  $region22: #{se_spp_net_forward.18} parent=0 // pred_check
    _
  $region23: #{se_spp_net_forward.18} parent=0 // pred_check_branch
    %221 = sbr.rel (0) target = $region25
  $region24: #{se_spp_net_forward.18} parent=0 // pred_region
    _
  $region25: #{se_spp_net_forward.18} parent=0 // pred_fallthru
    _

// kernel: se_spp_net_forward.19
$region0: #{se_spp_net_forward.19}
  #allocation0 [shape = 'u32[]', space=smem, size = 0x4, offset = 0x4, fixed_abs, tag = 'smem constant byte address 0x4 - core index']
  #allocation1 [shape = 'u32[144,128]{1,0:T(1,128)}', space=vmem, size = 0x12000, scoped, tag = 'internal scratch']
  %s0 = inlined_call_operand.vmem [shape: f32[4,8], index: 0, kind: input, shape index: {}]
  %s1 = inlined_call_operand.vmem [shape: f32[16,4], index: 1, kind: input, shape index: {}]
  %s2 = inlined_call_operand.vmem [shape: f32[8,32], index: 2, kind: input, shape index: {}]
  %s3 = inlined_call_operand.vmem [shape: f32[16,32], index: 3, kind: output, shape index: {}]
  %s4 = sld [smem:[#allocation0]]
  $region22: #{se_spp_net_forward.19} parent=0
    _
  %s6 = ssub.s32 1, %s4
  %s7 = scalar_select 0, %s6, %s4
  // Predicated region
  $region2: #{se_spp_net_forward.19} parent=0 // pred_check
    _
  $region3: #{se_spp_net_forward.19} parent=0 // pred_check_branch
    %9 = sbr.rel (0) target = $region5
  $region4: #{se_spp_net_forward.19} parent=0 // pred_region
    _
  $region5: #{se_spp_net_forward.19} parent=0 // pred_fallthru
    _
  // Predicated region
  $region6: #{se_spp_net_forward.19} parent=0 // pred_check
    _
  $region7: #{se_spp_net_forward.19} parent=0 // pred_check_branch
    %11 = sbr.rel (0) target = $region9
  $region8: #{se_spp_net_forward.19} parent=0 // pred_region
    _
  $region9: #{se_spp_net_forward.19} parent=0 // pred_fallthru
    _
  // Predicated region
  $region10: #{se_spp_net_forward.19} parent=0 // pred_check
    _
  $region11: #{se_spp_net_forward.19} parent=0 // pred_check_branch
    %13 = sbr.rel (0) target = $region13
  $region12: #{se_spp_net_forward.19} parent=0 // pred_region
    _
  $region13: #{se_spp_net_forward.19} parent=0 // pred_fallthru
    _
  %v14 = vld [vmem:[%s1] sm:$0xff]
  %v15 = vld [vmem:[%s1 + $0x8] sm:$0xff]
  %v16 = vld [vmem:[%s0] sm:$0xf]
  %vm17 = vcmask 31744
  %v19 = vsel %vm17, %v14, 0
  %v22 = vsel %vm17, %v15, 0
  %vm24 = vcmask 1043456
  %v26 = vsel %vm24, %v16, 0
  %28 = vmatprep.subr.mxu0 0.0
  %29 = vmatpush1.msra.mxu0 %v26
  %30 = vmatprep.subr.mxu0 0.0
  %31 = vmatpush1.msra.mxu0 0.0
  %32 = vmatprep.subr.mxu0 0.0
  %33 = vmatpush1.msra.mxu0 0.0
  %34 = vmatprep.subr.mxu0 0.0
  %35 = vmatpush1.msra.mxu0 0.0
  %36 = vmatprep.subr.mxu0 0.0
  %37 = vmatpush1.msra.mxu0 0.0
  %38 = vmatprep.subr.mxu0 0.0
  %39 = vmatpush1.msra.mxu0 0.0
  %40 = vmatprep.subr.mxu0 0.0
  %41 = vmatpush1.msra.mxu0 0.0
  %42 = vmatprep.subr.mxu0 0.0
  %43 = vmatpush1.msra.mxu0 0.0
  %44 = vmatprep.subr.mxu0 0.0
  %45 = vmatpush1.msra.mxu0 0.0
  %46 = vmatprep.subr.mxu0 0.0
  %47 = vmatpush1.msra.mxu0 0.0
  %48 = vmatprep.subr.mxu0 0.0
  %49 = vmatpush1.msra.mxu0 0.0
  %50 = vmatprep.subr.mxu0 0.0
  %51 = vmatpush1.msra.mxu0 0.0
  %52 = vmatprep.subr.mxu0 0.0
  %53 = vmatpush1.msra.mxu0 0.0
  %54 = vmatprep.subr.mxu0 0.0
  %55 = vmatpush1.msra.mxu0 0.0
  %56 = vmatprep.subr.mxu0 0.0
  %57 = vmatpush1.msra.mxu0 0.0
  %58 = vmatprep.subr.mxu0 0.0
  %59 = vmatpush1.msra.mxu0 0.0
  %60 = vmatprep.subr.mxu0 0.0
  %61 = vmatpush1.msra.mxu0 0.0
  %62 = vmatprep.subr.mxu0 0.0
  %63 = vmatpush1.msra.mxu0 0.0
  %64 = vmatprep.subr.mxu0 0.0
  %65 = vmatpush1.msra.mxu0 0.0
  %66 = vmatprep.subr.mxu0 0.0
  %67 = vmatpush1.msra.mxu0 0.0
  %68 = vmatprep.subr.mxu0 0.0
  %69 = vmatpush1.msra.mxu0 0.0
  %70 = vmatprep.subr.mxu0 0.0
  %71 = vmatpush1.msra.mxu0 0.0
  %72 = vmatprep.subr.mxu0 0.0
  %73 = vmatpush1.msra.mxu0 0.0
  %74 = vmatprep.subr.mxu0 0.0
  %75 = vmatpush1.msra.mxu0 0.0
  %76 = vmatprep.subr.mxu0 0.0
  %77 = vmatpush1.msra.mxu0 0.0
  %78 = vmatprep.subr.mxu0 0.0
  %79 = vmatpush1.msra.mxu0 0.0
  %80 = vmatprep.subr.mxu0 0.0
  %81 = vmatpush1.msra.mxu0 0.0
  %82 = vmatprep.subr.mxu0 0.0
  %83 = vmatpush1.msra.mxu0 0.0
  %84 = vmatprep.subr.mxu0 0.0
  %85 = vmatpush1.msra.mxu0 0.0
  %86 = vmatprep.subr.mxu0 0.0
  %87 = vmatpush1.msra.mxu0 0.0
  %88 = vmatprep.subr.mxu0 0.0
  %89 = vmatpush1.msra.mxu0 0.0
  %90 = vmatprep.subr.mxu0 0.0
  %91 = vmatpush1.msra.mxu0 0.0
  %92 = vmatprep.mubr.f32.mxu0 0.0
  %93 = vmatmul.mubr.f32.gmra.mrb[0].mxu0 %v19
  %v94 = vpop.f32.mrb[0].mxu0
  %v95 = vadd.f32 0.0, %v94
  %v96 = vpop.f32.mrb[0].mxu0
  %97 = vmatprep.mubr.f32.mxu0 0.0
  %98 = vmatmul.mubr.f32.gmra.mrb[0].mxu0 %v22
  %v99 = vpop.f32.mrb[0].mxu0
  %v100 = vadd.f32 0.0, %v99
  %v101 = vpop.f32.mrb[0].mxu0
  %102 = vdwg.mxu0
  %v103 = vld [vmem:[%s2] sm:$0xff]
  %vm104 = vcmask 64512
  %v106 = vsel %vm104, %v95, 0
  %v109 = vsel %vm104, %v100, 0
  %111 = vmatprep.subr.mxu0 0.0
  %112 = vmatpush1.msra.mxu0 %v103
  %113 = vmatprep.subr.mxu0 0.0
  %114 = vmatpush1.msra.mxu0 0.0
  %115 = vmatprep.subr.mxu0 0.0
  %116 = vmatpush1.msra.mxu0 0.0
  %117 = vmatprep.subr.mxu0 0.0
  %118 = vmatpush1.msra.mxu0 0.0
  %119 = vmatprep.subr.mxu0 0.0
  %120 = vmatpush1.msra.mxu0 0.0
  %121 = vmatprep.subr.mxu0 0.0
  %122 = vmatpush1.msra.mxu0 0.0
  %123 = vmatprep.subr.mxu0 0.0
  %124 = vmatpush1.msra.mxu0 0.0
  %125 = vmatprep.subr.mxu0 0.0
  %126 = vmatpush1.msra.mxu0 0.0
  %127 = vmatprep.subr.mxu0 0.0
  %128 = vmatpush1.msra.mxu0 0.0
  %129 = vmatprep.subr.mxu0 0.0
  %130 = vmatpush1.msra.mxu0 0.0
  %131 = vmatprep.subr.mxu0 0.0
  %132 = vmatpush1.msra.mxu0 0.0
  %133 = vmatprep.subr.mxu0 0.0
  %134 = vmatpush1.msra.mxu0 0.0
  %135 = vmatprep.subr.mxu0 0.0
  %136 = vmatpush1.msra.mxu0 0.0
  %137 = vmatprep.subr.mxu0 0.0
  %138 = vmatpush1.msra.mxu0 0.0
  %139 = vmatprep.subr.mxu0 0.0
  %140 = vmatpush1.msra.mxu0 0.0
  %141 = vmatprep.subr.mxu0 0.0
  %142 = vmatpush1.msra.mxu0 0.0
  %143 = vmatprep.subr.mxu0 0.0
  %144 = vmatpush1.msra.mxu0 0.0
  %145 = vmatprep.subr.mxu0 0.0
  %146 = vmatpush1.msra.mxu0 0.0
  %147 = vmatprep.subr.mxu0 0.0
  %148 = vmatpush1.msra.mxu0 0.0
  %149 = vmatprep.subr.mxu0 0.0
  %150 = vmatpush1.msra.mxu0 0.0
  %151 = vmatprep.subr.mxu0 0.0
  %152 = vmatpush1.msra.mxu0 0.0
  %153 = vmatprep.subr.mxu0 0.0
  %154 = vmatpush1.msra.mxu0 0.0
  %155 = vmatprep.subr.mxu0 0.0
  %156 = vmatpush1.msra.mxu0 0.0
  %157 = vmatprep.subr.mxu0 0.0
  %158 = vmatpush1.msra.mxu0 0.0
  %159 = vmatprep.subr.mxu0 0.0
  %160 = vmatpush1.msra.mxu0 0.0
  %161 = vmatprep.subr.mxu0 0.0
  %162 = vmatpush1.msra.mxu0 0.0
  %163 = vmatprep.subr.mxu0 0.0
  %164 = vmatpush1.msra.mxu0 0.0
  %165 = vmatprep.subr.mxu0 0.0
  %166 = vmatpush1.msra.mxu0 0.0
  %167 = vmatprep.subr.mxu0 0.0
  %168 = vmatpush1.msra.mxu0 0.0
  %169 = vmatprep.subr.mxu0 0.0
  %170 = vmatpush1.msra.mxu0 0.0
  %171 = vmatprep.subr.mxu0 0.0
  %172 = vmatpush1.msra.mxu0 0.0
  %173 = vmatprep.subr.mxu0 0.0
  %174 = vmatpush1.msra.mxu0 0.0
  %175 = vmatprep.mubr.f32.mxu0 0.0
  %176 = vmatmul.mubr.f32.gmra.mrb[0].mxu0 %v106
  %v177 = vpop.f32.mrb[0].mxu0
  %v178 = vadd.f32 0.0, %v177
  %v179 = vpop.f32.mrb[0].mxu0
  %180 = vmatprep.mubr.f32.mxu0 0.0
  %181 = vmatmul.mubr.f32.gmra.mrb[0].mxu0 %v109
  %v182 = vpop.f32.mrb[0].mxu0
  %v183 = vadd.f32 0.0, %v182
  %v184 = vpop.f32.mrb[0].mxu0
  %185 = vdwg.mxu0
  %vm186 = vcmask 261120
  %187 = vst.msk [vmem:[%s3] sm:$0xff] %vm186, %v178
  %188 = vst.msk [vmem:[%s3 + $0x8] sm:$0xff] %vm186, %v183
  // Predicated region
  $region14: #{se_spp_net_forward.19} parent=0 // pred_check
    _
  $region15: #{se_spp_net_forward.19} parent=0 // pred_check_branch
    %190 = sbr.rel (0) target = $region17
  $region16: #{se_spp_net_forward.19} parent=0 // pred_region
    _
  $region17: #{se_spp_net_forward.19} parent=0 // pred_fallthru
    _
  // Predicated region
  $region18: #{se_spp_net_forward.19} parent=0 // pred_check
    _
  $region19: #{se_spp_net_forward.19} parent=0 // pred_check_branch
    %192 = sbr.rel (0) target = $region21
  $region20: #{se_spp_net_forward.19} parent=0 // pred_region
    _
  $region21: #{se_spp_net_forward.19} parent=0 // pred_fallthru
    _

// kernel: se_spp_net_forward.14
$region0: #{se_spp_net_forward.14}
  #allocation0 [shape = 'u32[]', space=smem, size = 0x4, offset = 0x4, fixed_abs, tag = 'smem constant byte address 0x4 - core index']
  #allocation1 [shape = 'u32[144,128]{1,0:T(1,128)}', space=vmem, size = 0x12000, scoped, tag = 'internal scratch']
  %s0 = inlined_call_operand.vmem [shape: bf16[128,288], index: 0, kind: input, shape index: {}]
  %s1 = inlined_call_operand.vmem [shape: bf16[288,128], index: 1, kind: input, shape index: {}]
  %s2 = inlined_call_operand.vmem [shape: f32[1,128], index: 2, kind: input, shape index: {}]
  %s3 = inlined_call_operand.vmem [shape: f32[1,128], index: 3, kind: input, shape index: {}]
  %s4 = inlined_call_operand.vmem [shape: f32[128,128], index: 4, kind: output, shape index: {}]
  %s5 = sld [smem:[#allocation0]]
  $region26: #{se_spp_net_forward.14} parent=0
    _
  %s7 = ssub.s32 1, %s5
  %s8 = scalar_select 0, %s7, %s5
  // Predicated region
  $region2: #{se_spp_net_forward.14} parent=0 // pred_check
    _
  $region3: #{se_spp_net_forward.14} parent=0 // pred_check_branch
    %10 = sbr.rel (0) target = $region5
  $region4: #{se_spp_net_forward.14} parent=0 // pred_region
    _
  $region5: #{se_spp_net_forward.14} parent=0 // pred_fallthru
    _
  // Predicated region
  $region6: #{se_spp_net_forward.14} parent=0 // pred_check
    _
  $region7: #{se_spp_net_forward.14} parent=0 // pred_check_branch
    %12 = sbr.rel (0) target = $region9
  $region8: #{se_spp_net_forward.14} parent=0 // pred_region
    _
  $region9: #{se_spp_net_forward.14} parent=0 // pred_fallthru
    _
  // Predicated region
  $region10: #{se_spp_net_forward.14} parent=0 // pred_check
    _
  $region11: #{se_spp_net_forward.14} parent=0 // pred_check_branch
    %14 = sbr.rel (0) target = $region13
  $region12: #{se_spp_net_forward.14} parent=0 // pred_region
    _
  $region13: #{se_spp_net_forward.14} parent=0 // pred_fallthru
    _
  // Predicated region
  $region14: #{se_spp_net_forward.14} parent=0 // pred_check
    _
  $region15: #{se_spp_net_forward.14} parent=0 // pred_check_branch
    %16 = sbr.rel (0) target = $region17
  $region16: #{se_spp_net_forward.14} parent=0 // pred_region
    _
  $region17: #{se_spp_net_forward.14} parent=0 // pred_fallthru
    _
  %v18 = vld [vmem:[%s0] sm:$0xff]
  %v19 = vld [vmem:[%s0 + $0x8] sm:$0xf]
  %v20 = vld [vmem:[%s0 + $0xc] sm:$0xff]
  %v21 = vld [vmem:[%s0 + $0x14] sm:$0xf]
  %v22 = vld [vmem:[%s0 + $0x18] sm:$0xff]
  %v23 = vld [vmem:[%s0 + $0x20] sm:$0xf]
  %v24 = vld [vmem:[%s0 + $0x24] sm:$0xff]
  %v25 = vld [vmem:[%s0 + $0x2c] sm:$0xf]
  %v26 = vld [vmem:[%s0 + $0x30] sm:$0xff]
  %v27 = vld [vmem:[%s0 + $0x38] sm:$0xf]
  %v28 = vld [vmem:[%s0 + $0x3c] sm:$0xff]
  %v29 = vld [vmem:[%s0 + $0x44] sm:$0xf]
  %v30 = vld [vmem:[%s0 + $0x48] sm:$0xff]
  %v31 = vld [vmem:[%s0 + $0x50] sm:$0xf]
  %v32 = vld [vmem:[%s0 + $0x54] sm:$0xff]
  %v33 = vld [vmem:[%s0 + $0x5c] sm:$0xf]
  %v34 = vld [vmem:[%s0 + $0x60] sm:$0xff]
  %v35 = vld [vmem:[%s0 + $0x68] sm:$0xf]
  %v36 = vld [vmem:[%s0 + $0x6c] sm:$0xff]
  %v37 = vld [vmem:[%s0 + $0x74] sm:$0xf]
  %v38 = vld [vmem:[%s0 + $0x78] sm:$0xff]
  %v39 = vld [vmem:[%s0 + $0x80] sm:$0xf]
  %v40 = vld [vmem:[%s0 + $0x84] sm:$0xff]
  %v41 = vld [vmem:[%s0 + $0x8c] sm:$0xf]
  %v42 = vld [vmem:[%s0 + $0x90] sm:$0xff]
  %v43 = vld [vmem:[%s0 + $0x98] sm:$0xf]
  %v44 = vld [vmem:[%s0 + $0x9c] sm:$0xff]
  %v45 = vld [vmem:[%s0 + $0xa4] sm:$0xf]
  %v46 = vld [vmem:[%s0 + $0xa8] sm:$0xff]
  %v47 = vld [vmem:[%s0 + $0xb0] sm:$0xf]
  %v48 = vld [vmem:[%s0 + $0xb4] sm:$0xff]
  %v49 = vld [vmem:[%s0 + $0xbc] sm:$0xf]
  %v50 = vld [vmem:[%s1] sm:$0xf]
  %v51 = vld [vmem:[%s1 + $0x4] sm:$0xf]
  %v52 = vld [vmem:[%s1 + $0x8] sm:$0xf]
  %v53 = vld [vmem:[%s1 + $0xc] sm:$0xf]
  %v54 = vld [vmem:[%s1 + $0x10] sm:$0xf]
  %v55 = vld [vmem:[%s1 + $0x14] sm:$0xf]
  %v56 = vld [vmem:[%s1 + $0x18] sm:$0xf]
  %v57 = vld [vmem:[%s1 + $0x1c] sm:$0xf]
  %v58 = vld [vmem:[%s1 + $0x20] sm:$0xf]
  %v59 = vld [vmem:[%s1 + $0x24] sm:$0xf]
  %v60 = vld [vmem:[%s1 + $0x28] sm:$0xf]
  %v61 = vld [vmem:[%s1 + $0x2c] sm:$0xf]
  %v62 = vld [vmem:[%s1 + $0x30] sm:$0xf]
  %v63 = vld [vmem:[%s1 + $0x34] sm:$0xf]
  %v64 = vld [vmem:[%s1 + $0x38] sm:$0xf]
  %v65 = vld [vmem:[%s1 + $0x3c] sm:$0xf]
  %v66 = vld [vmem:[%s1 + $0x40] sm:$0xf]
  %v67 = vld [vmem:[%s1 + $0x44] sm:$0xf]
  %v68 = vld [vmem:[%s1 + $0x48] sm:$0xf]
  %v69 = vld [vmem:[%s1 + $0x4c] sm:$0xf]
  %v70 = vld [vmem:[%s1 + $0x50] sm:$0xf]
  %v71 = vld [vmem:[%s1 + $0x54] sm:$0xf]
  %v72 = vld [vmem:[%s1 + $0x58] sm:$0xf]
  %v73 = vld [vmem:[%s1 + $0x5c] sm:$0xf]
  %v74 = vld [vmem:[%s1 + $0x60] sm:$0xf]
  %v75 = vld [vmem:[%s1 + $0x64] sm:$0xf]
  %v76 = vld [vmem:[%s1 + $0x68] sm:$0xf]
  %v77 = vld [vmem:[%s1 + $0x6c] sm:$0xf]
  %v78 = vld [vmem:[%s1 + $0x70] sm:$0xf]
  %v79 = vld [vmem:[%s1 + $0x74] sm:$0xf]
  %v80 = vld [vmem:[%s1 + $0x78] sm:$0xf]
  %v81 = vld [vmem:[%s1 + $0x7c] sm:$0xf]
  %v82 = vld [vmem:[%s1 + $0x80] sm:$0xf]
  %v83 = vld [vmem:[%s1 + $0x84] sm:$0xf]
  %v84 = vld [vmem:[%s1 + $0x88] sm:$0xf]
  %v85 = vld [vmem:[%s1 + $0x8c] sm:$0xf]
  %v118 = vunpack.c.l.b16 %v18
  %v119 = vunpack.c.h.b16 %v18
  %v120 = vunpack.c.l.b16 %v19
  %v121 = vunpack.c.l.b16 %v20
  %v122 = vunpack.c.h.b16 %v20
  %v123 = vunpack.c.l.b16 %v21
  %v124 = vunpack.c.l.b16 %v22
  %v125 = vunpack.c.h.b16 %v22
  %v126 = vunpack.c.l.b16 %v23
  %v127 = vunpack.c.l.b16 %v24
  %v128 = vunpack.c.h.b16 %v24
  %v129 = vunpack.c.l.b16 %v25
  %v130 = vunpack.c.l.b16 %v26
  %v131 = vunpack.c.h.b16 %v26
  %v132 = vunpack.c.l.b16 %v27
  %v133 = vunpack.c.l.b16 %v28
  %v134 = vunpack.c.h.b16 %v28
  %v135 = vunpack.c.l.b16 %v29
  %v136 = vunpack.c.l.b16 %v30
  %v137 = vunpack.c.h.b16 %v30
  %v138 = vunpack.c.l.b16 %v31
  %v139 = vunpack.c.l.b16 %v32
  %v140 = vunpack.c.h.b16 %v32
  %v141 = vunpack.c.l.b16 %v33
  %v142 = vunpack.c.l.b16 %v34
  %v143 = vunpack.c.h.b16 %v34
  %v144 = vunpack.c.l.b16 %v35
  %v145 = vunpack.c.l.b16 %v36
  %v146 = vunpack.c.h.b16 %v36
  %v147 = vunpack.c.l.b16 %v37
  %v148 = vunpack.c.l.b16 %v38
  %v149 = vunpack.c.h.b16 %v38
  %v150 = vunpack.c.l.b16 %v39
  %v151 = vunpack.c.l.b16 %v40
  %v152 = vunpack.c.h.b16 %v40
  %v153 = vunpack.c.l.b16 %v41
  %v154 = vunpack.c.l.b16 %v42
  %v155 = vunpack.c.h.b16 %v42
  %v156 = vunpack.c.l.b16 %v43
  %v157 = vunpack.c.l.b16 %v44
  %v158 = vunpack.c.h.b16 %v44
  %v159 = vunpack.c.l.b16 %v45
  %v160 = vunpack.c.l.b16 %v46
  %v161 = vunpack.c.h.b16 %v46
  %v162 = vunpack.c.l.b16 %v47
  %v163 = vunpack.c.l.b16 %v48
  %v164 = vunpack.c.h.b16 %v48
  %v165 = vunpack.c.l.b16 %v49
  %v166 = vpack.c.b16 %v121, %v118
  %v167 = vpack.c.b16 %v122, %v119
  %v168 = vpack.c.b16 %v123, %v120
  %v169 = vpack.c.b16 %v127, %v124
  %v170 = vpack.c.b16 %v128, %v125
  %v171 = vpack.c.b16 %v129, %v126
  %v172 = vpack.c.b16 %v133, %v130
  %v173 = vpack.c.b16 %v134, %v131
  %v174 = vpack.c.b16 %v135, %v132
  %v175 = vpack.c.b16 %v139, %v136
  %v176 = vpack.c.b16 %v140, %v137
  %v177 = vpack.c.b16 %v141, %v138
  %v178 = vpack.c.b16 %v145, %v142
  %v179 = vpack.c.b16 %v146, %v143
  %v180 = vpack.c.b16 %v147, %v144
  %v181 = vpack.c.b16 %v151, %v148
  %v182 = vpack.c.b16 %v152, %v149
  %v183 = vpack.c.b16 %v153, %v150
  %v184 = vpack.c.b16 %v157, %v154
  %v185 = vpack.c.b16 %v158, %v155
  %v186 = vpack.c.b16 %v159, %v156
  %v187 = vpack.c.b16 %v163, %v160
  %v188 = vpack.c.b16 %v164, %v161
  %v189 = vpack.c.b16 %v165, %v162
  %v242 = vunpack.c.l.b16 %v50
  %v243 = vunpack.c.l.b16 %v51
  %v244 = vunpack.c.l.b16 %v52
  %v245 = vunpack.c.l.b16 %v53
  %v246 = vunpack.c.l.b16 %v54
  %v247 = vunpack.c.l.b16 %v55
  %v248 = vunpack.c.l.b16 %v56
  %v249 = vunpack.c.l.b16 %v57
  %v250 = vunpack.c.l.b16 %v58
  %v251 = vunpack.c.l.b16 %v59
  %v252 = vunpack.c.l.b16 %v60
  %v253 = vunpack.c.l.b16 %v61
  %v254 = vunpack.c.l.b16 %v62
  %v255 = vunpack.c.l.b16 %v63
  %v256 = vunpack.c.l.b16 %v64
  %v257 = vunpack.c.l.b16 %v65
  %v258 = vunpack.c.l.b16 %v66
  %v259 = vunpack.c.l.b16 %v67
  %v260 = vunpack.c.l.b16 %v68
  %v261 = vunpack.c.l.b16 %v69
  %v262 = vunpack.c.l.b16 %v70
  %v263 = vunpack.c.l.b16 %v71
  %v264 = vunpack.c.l.b16 %v72
  %v265 = vunpack.c.l.b16 %v73
  %v266 = vunpack.c.l.b16 %v74
  %v267 = vunpack.c.l.b16 %v75
  %v268 = vunpack.c.l.b16 %v76
  %v269 = vunpack.c.l.b16 %v77
  %v270 = vunpack.c.l.b16 %v78
  %v271 = vunpack.c.l.b16 %v79
  %v272 = vunpack.c.l.b16 %v80
  %v273 = vunpack.c.l.b16 %v81
  %v274 = vunpack.c.l.b16 %v82
  %v275 = vunpack.c.l.b16 %v83
  %v276 = vunpack.c.l.b16 %v84
  %v277 = vunpack.c.l.b16 %v85
  %v278 = vpack.c.b16 %v243, %v242
  %v279 = vpack.c.b16 %v245, %v244
  %v280 = vpack.c.b16 %v247, %v246
  %v281 = vpack.c.b16 %v249, %v248
  %v282 = vpack.c.b16 %v251, %v250
  %v283 = vpack.c.b16 %v253, %v252
  %v284 = vpack.c.b16 %v255, %v254
  %v285 = vpack.c.b16 %v257, %v256
  %v286 = vpack.c.b16 %v259, %v258
  %v287 = vpack.c.b16 %v261, %v260
  %v288 = vpack.c.b16 %v263, %v262
  %v289 = vpack.c.b16 %v265, %v264
  %v290 = vpack.c.b16 %v267, %v266
  %v291 = vpack.c.b16 %v269, %v268
  %v292 = vpack.c.b16 %v271, %v270
  %v293 = vpack.c.b16 %v273, %v272
  %v294 = vpack.c.b16 %v275, %v274
  %v295 = vpack.c.b16 %v277, %v276
  %vm314 = vcmask 261120
  %v316 = vsel %vm314, %v168, 0
  %v319 = vsel %vm314, %v171, 0
  %v322 = vsel %vm314, %v174, 0
  %v325 = vsel %vm314, %v177, 0
  %v328 = vsel %vm314, %v180, 0
  %v331 = vsel %vm314, %v183, 0
  %v334 = vsel %vm314, %v186, 0
  %v337 = vsel %vm314, %v189, 0
  %339 = vmatprep.subr.bf16.mxu0 0
  %340 = vmatpush1.bf16.msra.mxu0 %v278
  %341 = vmatprep.subr.bf16.mxu0 0
  %342 = vmatpush1.bf16.msra.mxu0 %v279
  %343 = vmatprep.subr.bf16.mxu0 0
  %344 = vmatpush1.bf16.msra.mxu0 %v280
  %345 = vmatprep.subr.bf16.mxu0 0
  %346 = vmatpush1.bf16.msra.mxu0 %v281
  %347 = vmatprep.subr.bf16.mxu0 0
  %348 = vmatpush1.bf16.msra.mxu0 %v282
  %349 = vmatprep.subr.bf16.mxu0 0
  %350 = vmatpush1.bf16.msra.mxu0 %v283
  %351 = vmatprep.subr.bf16.mxu0 0
  %352 = vmatpush1.bf16.msra.mxu0 %v284
  %353 = vmatprep.subr.bf16.mxu0 0
  %354 = vmatpush1.bf16.msra.mxu0 %v285
  %355 = vmatprep.subr.bf16.mxu0 0
  %356 = vmatpush1.bf16.msra.mxu0 %v286
  %357 = vmatprep.subr.bf16.mxu0 0
  %358 = vmatpush1.bf16.msra.mxu0 %v287
  %359 = vmatprep.subr.bf16.mxu0 0
  %360 = vmatpush1.bf16.msra.mxu0 %v288
  %361 = vmatprep.subr.bf16.mxu0 0
  %362 = vmatpush1.bf16.msra.mxu0 %v289
  %363 = vmatprep.subr.bf16.mxu0 0
  %364 = vmatpush1.bf16.msra.mxu0 %v290
  %365 = vmatprep.subr.bf16.mxu0 0
  %366 = vmatpush1.bf16.msra.mxu0 %v291
  %367 = vmatprep.subr.bf16.mxu0 0
  %368 = vmatpush1.bf16.msra.mxu0 %v292
  %369 = vmatprep.subr.bf16.mxu0 0
  %370 = vmatpush1.bf16.msra.mxu0 %v293
  %371 = vmatprep.mubr.bf16.mxu0 %v167
  %372 = vmatmul.mubr.bf16.gmra.mrb[0].mxu0 %v166
  %v373 = vpop.f32.mrb[0].mxu0
  %v374 = vadd.f32 0.0, %v373
  %v375 = vpop.f32.mrb[0].mxu0
  %v376 = vpop.f32.mrb[0].mxu0
  %v377 = vadd.f32 0.0, %v376
  %v378 = vpop.f32.mrb[0].mxu0
  %379 = vmatprep.mubr.bf16.mxu0 %v170
  %380 = vmatmul.mubr.bf16.gmra.mrb[0].mxu0 %v169
  %v381 = vpop.f32.mrb[0].mxu0
  %v382 = vadd.f32 0.0, %v381
  %v383 = vpop.f32.mrb[0].mxu0
  %v384 = vpop.f32.mrb[0].mxu0
  %v385 = vadd.f32 0.0, %v384
  %v386 = vpop.f32.mrb[0].mxu0
  %387 = vmatprep.mubr.bf16.mxu0 %v173
  %388 = vmatmul.mubr.bf16.gmra.mrb[0].mxu0 %v172
  %v389 = vpop.f32.mrb[0].mxu0
  %v390 = vadd.f32 0.0, %v389
  %v391 = vpop.f32.mrb[0].mxu0
  %v392 = vpop.f32.mrb[0].mxu0
  %v393 = vadd.f32 0.0, %v392
  %v394 = vpop.f32.mrb[0].mxu0
  %395 = vmatprep.mubr.bf16.mxu0 %v176
  %396 = vmatmul.mubr.bf16.gmra.mrb[0].mxu0 %v175
  %v397 = vpop.f32.mrb[0].mxu0
  %v398 = vadd.f32 0.0, %v397
  %v399 = vpop.f32.mrb[0].mxu0
  %v400 = vpop.f32.mrb[0].mxu0
  %v401 = vadd.f32 0.0, %v400
  %v402 = vpop.f32.mrb[0].mxu0
  %403 = vmatprep.mubr.bf16.mxu0 %v179
  %404 = vmatmul.mubr.bf16.gmra.mrb[0].mxu0 %v178
  %v405 = vpop.f32.mrb[0].mxu0
  %v406 = vadd.f32 0.0, %v405
  %v407 = vpop.f32.mrb[0].mxu0
  %v408 = vpop.f32.mrb[0].mxu0
  %v409 = vadd.f32 0.0, %v408
  %v410 = vpop.f32.mrb[0].mxu0
  %411 = vmatprep.mubr.bf16.mxu0 %v182
  %412 = vmatmul.mubr.bf16.gmra.mrb[0].mxu0 %v181
  %v413 = vpop.f32.mrb[0].mxu0
  %v414 = vadd.f32 0.0, %v413
  %v415 = vpop.f32.mrb[0].mxu0
  %v416 = vpop.f32.mrb[0].mxu0
  %v417 = vadd.f32 0.0, %v416
  %v418 = vpop.f32.mrb[0].mxu0
  %419 = vmatprep.mubr.bf16.mxu0 %v185
  %420 = vmatmul.mubr.bf16.gmra.mrb[0].mxu0 %v184
  %v421 = vpop.f32.mrb[0].mxu0
  %v422 = vadd.f32 0.0, %v421
  %v423 = vpop.f32.mrb[0].mxu0
  %v424 = vpop.f32.mrb[0].mxu0
  %v425 = vadd.f32 0.0, %v424
  %v426 = vpop.f32.mrb[0].mxu0
  %427 = vmatprep.mubr.bf16.mxu0 %v188
  %428 = vmatmul.mubr.bf16.gmra.mrb[0].mxu0 %v187
  %v429 = vpop.f32.mrb[0].mxu0
  %v430 = vadd.f32 0.0, %v429
  %v431 = vpop.f32.mrb[0].mxu0
  %v432 = vpop.f32.mrb[0].mxu0
  %v433 = vadd.f32 0.0, %v432
  %v434 = vpop.f32.mrb[0].mxu0
  %435 = vdwg.mxu0
  %436 = vmatprep.subr.bf16.mxu0 0
  %437 = vmatpush1.bf16.msra.mxu0 %v294
  %438 = vmatprep.subr.bf16.mxu0 0
  %439 = vmatpush1.bf16.msra.mxu0 %v295
  %440 = vmatprep.subr.bf16.mxu0 0
  %441 = vmatpush1.bf16.msra.mxu0 0
  %442 = vmatprep.subr.bf16.mxu0 0
  %443 = vmatpush1.bf16.msra.mxu0 0
  %444 = vmatprep.subr.bf16.mxu0 0
  %445 = vmatpush1.bf16.msra.mxu0 0
  %446 = vmatprep.subr.bf16.mxu0 0
  %447 = vmatpush1.bf16.msra.mxu0 0
  %448 = vmatprep.subr.bf16.mxu0 0
  %449 = vmatpush1.bf16.msra.mxu0 0
  %450 = vmatprep.subr.bf16.mxu0 0
  %451 = vmatpush1.bf16.msra.mxu0 0
  %452 = vmatprep.subr.bf16.mxu0 0
  %453 = vmatpush1.bf16.msra.mxu0 0
  %454 = vmatprep.subr.bf16.mxu0 0
  %455 = vmatpush1.bf16.msra.mxu0 0
  %456 = vmatprep.subr.bf16.mxu0 0
  %457 = vmatpush1.bf16.msra.mxu0 0
  %458 = vmatprep.subr.bf16.mxu0 0
  %459 = vmatpush1.bf16.msra.mxu0 0
  %460 = vmatprep.subr.bf16.mxu0 0
  %461 = vmatpush1.bf16.msra.mxu0 0
  %462 = vmatprep.subr.bf16.mxu0 0
  %463 = vmatpush1.bf16.msra.mxu0 0
  %464 = vmatprep.subr.bf16.mxu0 0
  %465 = vmatpush1.bf16.msra.mxu0 0
  %466 = vmatprep.subr.bf16.mxu0 0
  %467 = vmatpush1.bf16.msra.mxu0 0
  %468 = vmatprep.mubr.bf16.mxu0 0
  %469 = vmatmul.mubr.bf16.gmra.mrb[0].mxu0 %v316
  %v470 = vpop.f32.mrb[0].mxu0
  %v471 = vadd.f32 %v374, %v470
  %v472 = vpop.f32.mrb[0].mxu0
  %v473 = vpop.f32.mrb[0].mxu0
  %v474 = vadd.f32 %v377, %v473
  %v475 = vpop.f32.mrb[0].mxu0
  %476 = vmatprep.mubr.bf16.mxu0 0
  %477 = vmatmul.mubr.bf16.gmra.mrb[0].mxu0 %v319
  %v478 = vpop.f32.mrb[0].mxu0
  %v479 = vadd.f32 %v382, %v478
  %v480 = vpop.f32.mrb[0].mxu0
  %v481 = vpop.f32.mrb[0].mxu0
  %v482 = vadd.f32 %v385, %v481
  %v483 = vpop.f32.mrb[0].mxu0
  %484 = vmatprep.mubr.bf16.mxu0 0
  %485 = vmatmul.mubr.bf16.gmra.mrb[0].mxu0 %v322
  %v486 = vpop.f32.mrb[0].mxu0
  %v487 = vadd.f32 %v390, %v486
  %v488 = vpop.f32.mrb[0].mxu0
  %v489 = vpop.f32.mrb[0].mxu0
  %v490 = vadd.f32 %v393, %v489
  %v491 = vpop.f32.mrb[0].mxu0
  %492 = vmatprep.mubr.bf16.mxu0 0
  %493 = vmatmul.mubr.bf16.gmra.mrb[0].mxu0 %v325
  %v494 = vpop.f32.mrb[0].mxu0
  %v495 = vadd.f32 %v398, %v494
  %v496 = vpop.f32.mrb[0].mxu0
  %v497 = vpop.f32.mrb[0].mxu0
  %v498 = vadd.f32 %v401, %v497
  %v499 = vpop.f32.mrb[0].mxu0
  %500 = vmatprep.mubr.bf16.mxu0 0
  %501 = vmatmul.mubr.bf16.gmra.mrb[0].mxu0 %v328
  %v502 = vpop.f32.mrb[0].mxu0
  %v503 = vadd.f32 %v406, %v502
  %v504 = vpop.f32.mrb[0].mxu0
  %v505 = vpop.f32.mrb[0].mxu0
  %v506 = vadd.f32 %v409, %v505
  %v507 = vpop.f32.mrb[0].mxu0
  %508 = vmatprep.mubr.bf16.mxu0 0
  %509 = vmatmul.mubr.bf16.gmra.mrb[0].mxu0 %v331
  %v510 = vpop.f32.mrb[0].mxu0
  %v511 = vadd.f32 %v414, %v510
  %v512 = vpop.f32.mrb[0].mxu0
  %v513 = vpop.f32.mrb[0].mxu0
  %v514 = vadd.f32 %v417, %v513
  %v515 = vpop.f32.mrb[0].mxu0
  %516 = vmatprep.mubr.bf16.mxu0 0
  %517 = vmatmul.mubr.bf16.gmra.mrb[0].mxu0 %v334
  %v518 = vpop.f32.mrb[0].mxu0
  %v519 = vadd.f32 %v422, %v518
  %v520 = vpop.f32.mrb[0].mxu0
  %v521 = vpop.f32.mrb[0].mxu0
  %v522 = vadd.f32 %v425, %v521
  %v523 = vpop.f32.mrb[0].mxu0
  %524 = vmatprep.mubr.bf16.mxu0 0
  %525 = vmatmul.mubr.bf16.gmra.mrb[0].mxu0 %v337
  %v526 = vpop.f32.mrb[0].mxu0
  %v527 = vadd.f32 %v430, %v526
  %v528 = vpop.f32.mrb[0].mxu0
  %v529 = vpop.f32.mrb[0].mxu0
  %v530 = vadd.f32 %v433, %v529
  %v531 = vpop.f32.mrb[0].mxu0
  %532 = vdwg.mxu0
  %v533 = vld [vmem:[%s2] sm:$0x1]
  %v535 = vlaneseq
  %v536 = vshrl.u32 %v535, 7
  %v537 = vsub.s32 0, %v536
  %v538 = vrot.slane %v533, %v537
  %v540 = vmul.f32 %v471, %v538
  %v541 = vmul.f32 %v474, %v538
  %v542 = vmul.f32 %v479, %v538
  %v543 = vmul.f32 %v482, %v538
  %v544 = vmul.f32 %v487, %v538
  %v545 = vmul.f32 %v490, %v538
  %v546 = vmul.f32 %v495, %v538
  %v547 = vmul.f32 %v498, %v538
  %v548 = vmul.f32 %v503, %v538
  %v549 = vmul.f32 %v506, %v538
  %v550 = vmul.f32 %v511, %v538
  %v551 = vmul.f32 %v514, %v538
  %v552 = vmul.f32 %v519, %v538
  %v553 = vmul.f32 %v522, %v538
  %v554 = vmul.f32 %v527, %v538
  %v555 = vmul.f32 %v530, %v538
  %v556 = vld [vmem:[%s3] sm:$0x1]
  %v558 = vlaneseq
  %v559 = vshrl.u32 %v558, 7
  %v560 = vsub.s32 0, %v559
  %v561 = vrot.slane %v556, %v560
  %v563 = vadd.f32 %v540, %v561
  %v564 = vadd.f32 %v541, %v561
  %v565 = vadd.f32 %v542, %v561
  %v566 = vadd.f32 %v543, %v561
  %v567 = vadd.f32 %v544, %v561
  %v568 = vadd.f32 %v545, %v561
  %v569 = vadd.f32 %v546, %v561
  %v570 = vadd.f32 %v547, %v561
  %v571 = vadd.f32 %v548, %v561
  %v572 = vadd.f32 %v549, %v561
  %v573 = vadd.f32 %v550, %v561
  %v574 = vadd.f32 %v551, %v561
  %v575 = vadd.f32 %v552, %v561
  %v576 = vadd.f32 %v553, %v561
  %v577 = vadd.f32 %v554, %v561
  %v578 = vadd.f32 %v555, %v561
  %v579 = vmax.f32 %v563, 0.0
  %v580 = vmax.f32 %v564, 0.0
  %v581 = vmax.f32 %v565, 0.0
  %v582 = vmax.f32 %v566, 0.0
  %v583 = vmax.f32 %v567, 0.0
  %v584 = vmax.f32 %v568, 0.0
  %v585 = vmax.f32 %v569, 0.0
  %v586 = vmax.f32 %v570, 0.0
  %v587 = vmax.f32 %v571, 0.0
  %v588 = vmax.f32 %v572, 0.0
  %v589 = vmax.f32 %v573, 0.0
  %v590 = vmax.f32 %v574, 0.0
  %v591 = vmax.f32 %v575, 0.0
  %v592 = vmax.f32 %v576, 0.0
  %v593 = vmax.f32 %v577, 0.0
  %v594 = vmax.f32 %v578, 0.0
  %595 = vst [vmem:[%s4] sm:$0xff] %v579
  %596 = vst [vmem:[%s4 + $0x8] sm:$0xff] %v580
  %597 = vst [vmem:[%s4 + $0x10] sm:$0xff] %v581
  %598 = vst [vmem:[%s4 + $0x18] sm:$0xff] %v582
  %599 = vst [vmem:[%s4 + $0x20] sm:$0xff] %v583
  %600 = vst [vmem:[%s4 + $0x28] sm:$0xff] %v584
  %601 = vst [vmem:[%s4 + $0x30] sm:$0xff] %v585
  %602 = vst [vmem:[%s4 + $0x38] sm:$0xff] %v586
  %603 = vst [vmem:[%s4 + $0x40] sm:$0xff] %v587
  %604 = vst [vmem:[%s4 + $0x48] sm:$0xff] %v588
  %605 = vst [vmem:[%s4 + $0x50] sm:$0xff] %v589
  %606 = vst [vmem:[%s4 + $0x58] sm:$0xff] %v590
  %607 = vst [vmem:[%s4 + $0x60] sm:$0xff] %v591
  %608 = vst [vmem:[%s4 + $0x68] sm:$0xff] %v592
  %609 = vst [vmem:[%s4 + $0x70] sm:$0xff] %v593
  %610 = vst [vmem:[%s4 + $0x78] sm:$0xff] %v594
  // Predicated region
  $region18: #{se_spp_net_forward.14} parent=0 // pred_check
    _
  $region19: #{se_spp_net_forward.14} parent=0 // pred_check_branch
    %612 = sbr.rel (0) target = $region21
  $region20: #{se_spp_net_forward.14} parent=0 // pred_region
    _
  $region21: #{se_spp_net_forward.14} parent=0 // pred_fallthru
    _
  // Predicated region
  $region22: #{se_spp_net_forward.14} parent=0 // pred_check
    _
  $region23: #{se_spp_net_forward.14} parent=0 // pred_check_branch
    %614 = sbr.rel (0) target = $region25
  $region24: #{se_spp_net_forward.14} parent=0 // pred_region
    _
  $region25: #{se_spp_net_forward.14} parent=0 // pred_fallthru
    _

// kernel: se_spp_net_forward.15
$region0: #{se_spp_net_forward.15}
  #allocation0 [shape = 'u32[]', space=smem, size = 0x4, offset = 0x4, fixed_abs, tag = 'smem constant byte address 0x4 - core index']
  #allocation1 [shape = 'u32[144,128]{1,0:T(1,128)}', space=vmem, size = 0x12000, scoped, tag = 'internal scratch']
  %s0 = inlined_call_operand.vmem [shape: bf16[512,144], index: 0, kind: input, shape index: {}]
  %s1 = inlined_call_operand.vmem [shape: bf16[144,128], index: 1, kind: input, shape index: {}]
  %s2 = inlined_call_operand.vmem [shape: f32[1,128], index: 2, kind: input, shape index: {}]
  %s3 = inlined_call_operand.vmem [shape: f32[1,128], index: 3, kind: input, shape index: {}]
  %s4 = inlined_call_operand.vmem [shape: f32[512,128], index: 4, kind: output, shape index: {}]
  %s5 = sld [smem:[#allocation0]]
  $region26: #{se_spp_net_forward.15} parent=0
    _
  %s7 = ssub.s32 1, %s5
  %s8 = scalar_select 0, %s7, %s5
  // Predicated region
  $region2: #{se_spp_net_forward.15} parent=0 // pred_check
    _
  $region3: #{se_spp_net_forward.15} parent=0 // pred_check_branch
    %10 = sbr.rel (0) target = $region5
  $region4: #{se_spp_net_forward.15} parent=0 // pred_region
    _
  $region5: #{se_spp_net_forward.15} parent=0 // pred_fallthru
    _
  // Predicated region
  $region6: #{se_spp_net_forward.15} parent=0 // pred_check
    _
  $region7: #{se_spp_net_forward.15} parent=0 // pred_check_branch
    %12 = sbr.rel (0) target = $region9
  $region8: #{se_spp_net_forward.15} parent=0 // pred_region
    _
  $region9: #{se_spp_net_forward.15} parent=0 // pred_fallthru
    _
  // Predicated region
  $region10: #{se_spp_net_forward.15} parent=0 // pred_check
    _
  $region11: #{se_spp_net_forward.15} parent=0 // pred_check_branch
    %14 = sbr.rel (0) target = $region13
  $region12: #{se_spp_net_forward.15} parent=0 // pred_region
    _
  $region13: #{se_spp_net_forward.15} parent=0 // pred_fallthru
    _
  // Predicated region
  $region14: #{se_spp_net_forward.15} parent=0 // pred_check
    _
  $region15: #{se_spp_net_forward.15} parent=0 // pred_check_branch
    %16 = sbr.rel (0) target = $region17
  $region16: #{se_spp_net_forward.15} parent=0 // pred_region
    _
  $region17: #{se_spp_net_forward.15} parent=0 // pred_fallthru
    _
  %v18 = vld [vmem:[%s0] sm:$0xff]
  %v19 = vld [vmem:[%s0 + $0x8] sm:$0xff]
  %v20 = vld [vmem:[%s0 + $0x10] sm:$0xff]
  %v21 = vld [vmem:[%s0 + $0x18] sm:$0xff]
  %v22 = vld [vmem:[%s0 + $0x20] sm:$0xff]
  %v23 = vld [vmem:[%s0 + $0x28] sm:$0xff]
  %v24 = vld [vmem:[%s0 + $0x30] sm:$0xff]
  %v25 = vld [vmem:[%s0 + $0x38] sm:$0xff]
  %v26 = vld [vmem:[%s0 + $0x40] sm:$0xff]
  %v27 = vld [vmem:[%s0 + $0x48] sm:$0xff]
  %v28 = vld [vmem:[%s0 + $0x50] sm:$0xff]
  %v29 = vld [vmem:[%s0 + $0x58] sm:$0xff]
  %v30 = vld [vmem:[%s0 + $0x60] sm:$0xff]
  %v31 = vld [vmem:[%s0 + $0x68] sm:$0xff]
  %v32 = vld [vmem:[%s0 + $0x70] sm:$0xff]
  %v33 = vld [vmem:[%s0 + $0x78] sm:$0xff]
  %v34 = vld [vmem:[%s0 + $0x80] sm:$0xff]
  %v35 = vld [vmem:[%s0 + $0x88] sm:$0xff]
  %v36 = vld [vmem:[%s0 + $0x90] sm:$0xff]
  %v37 = vld [vmem:[%s0 + $0x98] sm:$0xff]
  %v38 = vld [vmem:[%s0 + $0xa0] sm:$0xff]
  %v39 = vld [vmem:[%s0 + $0xa8] sm:$0xff]
  %v40 = vld [vmem:[%s0 + $0xb0] sm:$0xff]
  %v41 = vld [vmem:[%s0 + $0xb8] sm:$0xff]
  %v42 = vld [vmem:[%s0 + $0xc0] sm:$0xff]
  %v43 = vld [vmem:[%s0 + $0xc8] sm:$0xff]
  %v44 = vld [vmem:[%s0 + $0xd0] sm:$0xff]
  %v45 = vld [vmem:[%s0 + $0xd8] sm:$0xff]
  %v46 = vld [vmem:[%s0 + $0xe0] sm:$0xff]
  %v47 = vld [vmem:[%s0 + $0xe8] sm:$0xff]
  %v48 = vld [vmem:[%s0 + $0xf0] sm:$0xff]
  %v49 = vld [vmem:[%s0 + $0xf8] sm:$0xff]
  %v50 = vld [vmem:[%s0 + $0x100] sm:$0xff]
  %v51 = vld [vmem:[%s0 + $0x108] sm:$0xff]
  %v52 = vld [vmem:[%s0 + $0x110] sm:$0xff]
  %v53 = vld [vmem:[%s0 + $0x118] sm:$0xff]
  %v54 = vld [vmem:[%s0 + $0x120] sm:$0xff]
  %v55 = vld [vmem:[%s0 + $0x128] sm:$0xff]
  %v56 = vld [vmem:[%s0 + $0x130] sm:$0xff]
  %v57 = vld [vmem:[%s0 + $0x138] sm:$0xff]
  %v58 = vld [vmem:[%s0 + $0x140] sm:$0xff]
  %v59 = vld [vmem:[%s0 + $0x148] sm:$0xff]
  %v60 = vld [vmem:[%s0 + $0x150] sm:$0xff]
  %v61 = vld [vmem:[%s0 + $0x158] sm:$0xff]
  %v62 = vld [vmem:[%s0 + $0x160] sm:$0xff]
  %v63 = vld [vmem:[%s0 + $0x168] sm:$0xff]
  %v64 = vld [vmem:[%s0 + $0x170] sm:$0xff]
  %v65 = vld [vmem:[%s0 + $0x178] sm:$0xff]
  %v66 = vld [vmem:[%s0 + $0x180] sm:$0xff]
  %v67 = vld [vmem:[%s0 + $0x188] sm:$0xff]
  %v68 = vld [vmem:[%s0 + $0x190] sm:$0xff]
  %v69 = vld [vmem:[%s0 + $0x198] sm:$0xff]
  %v70 = vld [vmem:[%s0 + $0x1a0] sm:$0xff]
  %v71 = vld [vmem:[%s0 + $0x1a8] sm:$0xff]
  %v72 = vld [vmem:[%s0 + $0x1b0] sm:$0xff]
  %v73 = vld [vmem:[%s0 + $0x1b8] sm:$0xff]
  %v74 = vld [vmem:[%s0 + $0x1c0] sm:$0xff]
  %v75 = vld [vmem:[%s0 + $0x1c8] sm:$0xff]
  %v76 = vld [vmem:[%s0 + $0x1d0] sm:$0xff]
  %v77 = vld [vmem:[%s0 + $0x1d8] sm:$0xff]
  %v78 = vld [vmem:[%s0 + $0x1e0] sm:$0xff]
  %v79 = vld [vmem:[%s0 + $0x1e8] sm:$0xff]
  %v80 = vld [vmem:[%s0 + $0x1f0] sm:$0xff]
  %v81 = vld [vmem:[%s0 + $0x1f8] sm:$0xff]
  %v82 = vld [vmem:[%s1] sm:$0xf]
  %v83 = vld [vmem:[%s1 + $0x4] sm:$0xf]
  %v84 = vld [vmem:[%s1 + $0x8] sm:$0xf]
  %v85 = vld [vmem:[%s1 + $0xc] sm:$0xf]
  %v86 = vld [vmem:[%s1 + $0x10] sm:$0xf]
  %v87 = vld [vmem:[%s1 + $0x14] sm:$0xf]
  %v88 = vld [vmem:[%s1 + $0x18] sm:$0xf]
  %v89 = vld [vmem:[%s1 + $0x1c] sm:$0xf]
  %v90 = vld [vmem:[%s1 + $0x20] sm:$0xf]
  %v91 = vld [vmem:[%s1 + $0x24] sm:$0xf]
  %v92 = vld [vmem:[%s1 + $0x28] sm:$0xf]
  %v93 = vld [vmem:[%s1 + $0x2c] sm:$0xf]
  %v94 = vld [vmem:[%s1 + $0x30] sm:$0xf]
  %v95 = vld [vmem:[%s1 + $0x34] sm:$0xf]
  %v96 = vld [vmem:[%s1 + $0x38] sm:$0xf]
  %v97 = vld [vmem:[%s1 + $0x3c] sm:$0xf]
  %v98 = vld [vmem:[%s1 + $0x40] sm:$0xf]
  %v99 = vld [vmem:[%s1 + $0x44] sm:$0xf]
  %v164 = vunpack.c.l.b16 %v18
  %v165 = vunpack.c.h.b16 %v18
  %v166 = vunpack.c.l.b16 %v19
  %v167 = vunpack.c.h.b16 %v19
  %v168 = vunpack.c.l.b16 %v20
  %v169 = vunpack.c.h.b16 %v20
  %v170 = vunpack.c.l.b16 %v21
  %v171 = vunpack.c.h.b16 %v21
  %v172 = vunpack.c.l.b16 %v22
  %v173 = vunpack.c.h.b16 %v22
  %v174 = vunpack.c.l.b16 %v23
  %v175 = vunpack.c.h.b16 %v23
  %v176 = vunpack.c.l.b16 %v24
  %v177 = vunpack.c.h.b16 %v24
  %v178 = vunpack.c.l.b16 %v25
  %v179 = vunpack.c.h.b16 %v25
  %v180 = vunpack.c.l.b16 %v26
  %v181 = vunpack.c.h.b16 %v26
  %v182 = vunpack.c.l.b16 %v27
  %v183 = vunpack.c.h.b16 %v27
  %v184 = vunpack.c.l.b16 %v28
  %v185 = vunpack.c.h.b16 %v28
  %v186 = vunpack.c.l.b16 %v29
  %v187 = vunpack.c.h.b16 %v29
  %v188 = vunpack.c.l.b16 %v30
  %v189 = vunpack.c.h.b16 %v30
  %v190 = vunpack.c.l.b16 %v31
  %v191 = vunpack.c.h.b16 %v31
  %v192 = vunpack.c.l.b16 %v32
  %v193 = vunpack.c.h.b16 %v32
  %v194 = vunpack.c.l.b16 %v33
  %v195 = vunpack.c.h.b16 %v33
  %v196 = vunpack.c.l.b16 %v34
  %v197 = vunpack.c.h.b16 %v34
  %v198 = vunpack.c.l.b16 %v35
  %v199 = vunpack.c.h.b16 %v35
  %v200 = vunpack.c.l.b16 %v36
  %v201 = vunpack.c.h.b16 %v36
  %v202 = vunpack.c.l.b16 %v37
  %v203 = vunpack.c.h.b16 %v37
  %v204 = vunpack.c.l.b16 %v38
  %v205 = vunpack.c.h.b16 %v38
  %v206 = vunpack.c.l.b16 %v39
  %v207 = vunpack.c.h.b16 %v39
  %v208 = vunpack.c.l.b16 %v40
  %v209 = vunpack.c.h.b16 %v40
  %v210 = vunpack.c.l.b16 %v41
  %v211 = vunpack.c.h.b16 %v41
  %v212 = vunpack.c.l.b16 %v42
  %v213 = vunpack.c.h.b16 %v42
  %v214 = vunpack.c.l.b16 %v43
  %v215 = vunpack.c.h.b16 %v43
  %v216 = vunpack.c.l.b16 %v44
  %v217 = vunpack.c.h.b16 %v44
  %v218 = vunpack.c.l.b16 %v45
  %v219 = vunpack.c.h.b16 %v45
  %v220 = vunpack.c.l.b16 %v46
  %v221 = vunpack.c.h.b16 %v46
  %v222 = vunpack.c.l.b16 %v47
  %v223 = vunpack.c.h.b16 %v47
  %v224 = vunpack.c.l.b16 %v48
  %v225 = vunpack.c.h.b16 %v48
  %v226 = vunpack.c.l.b16 %v49
  %v227 = vunpack.c.h.b16 %v49
  %v228 = vunpack.c.l.b16 %v50
  %v229 = vunpack.c.h.b16 %v50
  %v230 = vunpack.c.l.b16 %v51
  %v231 = vunpack.c.h.b16 %v51
  %v232 = vunpack.c.l.b16 %v52
  %v233 = vunpack.c.h.b16 %v52
  %v234 = vunpack.c.l.b16 %v53
  %v235 = vunpack.c.h.b16 %v53
  %v236 = vunpack.c.l.b16 %v54
  %v237 = vunpack.c.h.b16 %v54
  %v238 = vunpack.c.l.b16 %v55
  %v239 = vunpack.c.h.b16 %v55
  %v240 = vunpack.c.l.b16 %v56
  %v241 = vunpack.c.h.b16 %v56
  %v242 = vunpack.c.l.b16 %v57
  %v243 = vunpack.c.h.b16 %v57
  %v244 = vunpack.c.l.b16 %v58
  %v245 = vunpack.c.h.b16 %v58
  %v246 = vunpack.c.l.b16 %v59
  %v247 = vunpack.c.h.b16 %v59
  %v248 = vunpack.c.l.b16 %v60
  %v249 = vunpack.c.h.b16 %v60
  %v250 = vunpack.c.l.b16 %v61
  %v251 = vunpack.c.h.b16 %v61
  %v252 = vunpack.c.l.b16 %v62
  %v253 = vunpack.c.h.b16 %v62
  %v254 = vunpack.c.l.b16 %v63
  %v255 = vunpack.c.h.b16 %v63
  %v256 = vunpack.c.l.b16 %v64
  %v257 = vunpack.c.h.b16 %v64
  %v258 = vunpack.c.l.b16 %v65
  %v259 = vunpack.c.h.b16 %v65
  %v260 = vunpack.c.l.b16 %v66
  %v261 = vunpack.c.h.b16 %v66
  %v262 = vunpack.c.l.b16 %v67
  %v263 = vunpack.c.h.b16 %v67
  %v264 = vunpack.c.l.b16 %v68
  %v265 = vunpack.c.h.b16 %v68
  %v266 = vunpack.c.l.b16 %v69
  %v267 = vunpack.c.h.b16 %v69
  %v268 = vunpack.c.l.b16 %v70
  %v269 = vunpack.c.h.b16 %v70
  %v270 = vunpack.c.l.b16 %v71
  %v271 = vunpack.c.h.b16 %v71
  %v272 = vunpack.c.l.b16 %v72
  %v273 = vunpack.c.h.b16 %v72
  %v274 = vunpack.c.l.b16 %v73
  %v275 = vunpack.c.h.b16 %v73
  %v276 = vunpack.c.l.b16 %v74
  %v277 = vunpack.c.h.b16 %v74
  %v278 = vunpack.c.l.b16 %v75
  %v279 = vunpack.c.h.b16 %v75
  %v280 = vunpack.c.l.b16 %v76
  %v281 = vunpack.c.h.b16 %v76
  %v282 = vunpack.c.l.b16 %v77
  %v283 = vunpack.c.h.b16 %v77
  %v284 = vunpack.c.l.b16 %v78
  %v285 = vunpack.c.h.b16 %v78
  %v286 = vunpack.c.l.b16 %v79
  %v287 = vunpack.c.h.b16 %v79
  %v288 = vunpack.c.l.b16 %v80
  %v289 = vunpack.c.h.b16 %v80
  %v290 = vunpack.c.l.b16 %v81
  %v291 = vunpack.c.h.b16 %v81
  %v292 = vpack.c.b16 %v166, %v164
  %v293 = vpack.c.b16 %v167, %v165
  %v294 = vpack.c.b16 %v170, %v168
  %v295 = vpack.c.b16 %v171, %v169
  %v296 = vpack.c.b16 %v174, %v172
  %v297 = vpack.c.b16 %v175, %v173
  %v298 = vpack.c.b16 %v178, %v176
  %v299 = vpack.c.b16 %v179, %v177
  %v300 = vpack.c.b16 %v182, %v180
  %v301 = vpack.c.b16 %v183, %v181
  %v302 = vpack.c.b16 %v186, %v184
  %v303 = vpack.c.b16 %v187, %v185
  %v304 = vpack.c.b16 %v190, %v188
  %v305 = vpack.c.b16 %v191, %v189
  %v306 = vpack.c.b16 %v194, %v192
  %v307 = vpack.c.b16 %v195, %v193
  %v308 = vpack.c.b16 %v198, %v196
  %v309 = vpack.c.b16 %v199, %v197
  %v310 = vpack.c.b16 %v202, %v200
  %v311 = vpack.c.b16 %v203, %v201
  %v312 = vpack.c.b16 %v206, %v204
  %v313 = vpack.c.b16 %v207, %v205
  %v314 = vpack.c.b16 %v210, %v208
  %v315 = vpack.c.b16 %v211, %v209
  %v316 = vpack.c.b16 %v214, %v212
  %v317 = vpack.c.b16 %v215, %v213
  %v318 = vpack.c.b16 %v218, %v216
  %v319 = vpack.c.b16 %v219, %v217
  %v320 = vpack.c.b16 %v222, %v220
  %v321 = vpack.c.b16 %v223, %v221
  %v322 = vpack.c.b16 %v226, %v224
  %v323 = vpack.c.b16 %v227, %v225
  %v324 = vpack.c.b16 %v230, %v228
  %v325 = vpack.c.b16 %v231, %v229
  %v326 = vpack.c.b16 %v234, %v232
  %v327 = vpack.c.b16 %v235, %v233
  %v328 = vpack.c.b16 %v238, %v236
  %v329 = vpack.c.b16 %v239, %v237
  %v330 = vpack.c.b16 %v242, %v240
  %v331 = vpack.c.b16 %v243, %v241
  %v332 = vpack.c.b16 %v246, %v244
  %v333 = vpack.c.b16 %v247, %v245
  %v334 = vpack.c.b16 %v250, %v248
  %v335 = vpack.c.b16 %v251, %v249
  %v336 = vpack.c.b16 %v254, %v252
  %v337 = vpack.c.b16 %v255, %v253
  %v338 = vpack.c.b16 %v258, %v256
  %v339 = vpack.c.b16 %v259, %v257
  %v340 = vpack.c.b16 %v262, %v260
  %v341 = vpack.c.b16 %v263, %v261
  %v342 = vpack.c.b16 %v266, %v264
  %v343 = vpack.c.b16 %v267, %v265
  %v344 = vpack.c.b16 %v270, %v268
  %v345 = vpack.c.b16 %v271, %v269
  %v346 = vpack.c.b16 %v274, %v272
  %v347 = vpack.c.b16 %v275, %v273
  %v348 = vpack.c.b16 %v278, %v276
  %v349 = vpack.c.b16 %v279, %v277
  %v350 = vpack.c.b16 %v282, %v280
  %v351 = vpack.c.b16 %v283, %v281
  %v352 = vpack.c.b16 %v286, %v284
  %v353 = vpack.c.b16 %v287, %v285
  %v354 = vpack.c.b16 %v290, %v288
  %v355 = vpack.c.b16 %v291, %v289
  %v406 = vunpack.c.l.b16 %v82
  %v407 = vunpack.c.l.b16 %v83
  %v408 = vunpack.c.l.b16 %v84
  %v409 = vunpack.c.l.b16 %v85
  %v410 = vunpack.c.l.b16 %v86
  %v411 = vunpack.c.l.b16 %v87
  %v412 = vunpack.c.l.b16 %v88
  %v413 = vunpack.c.l.b16 %v89
  %v414 = vunpack.c.l.b16 %v90
  %v415 = vunpack.c.l.b16 %v91
  %v416 = vunpack.c.l.b16 %v92
  %v417 = vunpack.c.l.b16 %v93
  %v418 = vunpack.c.l.b16 %v94
  %v419 = vunpack.c.l.b16 %v95
  %v420 = vunpack.c.l.b16 %v96
  %v421 = vunpack.c.l.b16 %v97
  %v422 = vunpack.c.l.b16 %v98
  %v423 = vunpack.c.l.b16 %v99
  %v424 = vpack.c.b16 %v407, %v406
  %v425 = vpack.c.b16 %v409, %v408
  %v426 = vpack.c.b16 %v411, %v410
  %v427 = vpack.c.b16 %v413, %v412
  %v428 = vpack.c.b16 %v415, %v414
  %v429 = vpack.c.b16 %v417, %v416
  %v430 = vpack.c.b16 %v419, %v418
  %v431 = vpack.c.b16 %v421, %v420
  %v432 = vpack.c.b16 %v423, %v422
  %vm442 = vcmask 130048
  %v444 = vsel %vm442, %v293, 0
  %v447 = vsel %vm442, %v295, 0
  %v450 = vsel %vm442, %v297, 0
  %v453 = vsel %vm442, %v299, 0
  %v456 = vsel %vm442, %v301, 0
  %v459 = vsel %vm442, %v303, 0
  %v462 = vsel %vm442, %v305, 0
  %v465 = vsel %vm442, %v307, 0
  %v468 = vsel %vm442, %v309, 0
  %v471 = vsel %vm442, %v311, 0
  %v474 = vsel %vm442, %v313, 0
  %v477 = vsel %vm442, %v315, 0
  %v480 = vsel %vm442, %v317, 0
  %v483 = vsel %vm442, %v319, 0
  %v486 = vsel %vm442, %v321, 0
  %v489 = vsel %vm442, %v323, 0
  %v492 = vsel %vm442, %v325, 0
  %v495 = vsel %vm442, %v327, 0
  %v498 = vsel %vm442, %v329, 0
  %v501 = vsel %vm442, %v331, 0
  %v504 = vsel %vm442, %v333, 0
  %v507 = vsel %vm442, %v335, 0
  %v510 = vsel %vm442, %v337, 0
  %v513 = vsel %vm442, %v339, 0
  %v516 = vsel %vm442, %v341, 0
  %v519 = vsel %vm442, %v343, 0
  %v522 = vsel %vm442, %v345, 0
  %v525 = vsel %vm442, %v347, 0
  %v528 = vsel %vm442, %v349, 0
  %v531 = vsel %vm442, %v351, 0
  %v534 = vsel %vm442, %v353, 0
  %v537 = vsel %vm442, %v355, 0
  %539 = vmatprep.subr.bf16.mxu0 0
  %540 = vmatpush1.bf16.msra.mxu0 %v424
  %541 = vmatprep.subr.bf16.mxu0 0
  %542 = vmatpush1.bf16.msra.mxu0 %v425
  %543 = vmatprep.subr.bf16.mxu0 0
  %544 = vmatpush1.bf16.msra.mxu0 %v426
  %545 = vmatprep.subr.bf16.mxu0 0
  %546 = vmatpush1.bf16.msra.mxu0 %v427
  %547 = vmatprep.subr.bf16.mxu0 0
  %548 = vmatpush1.bf16.msra.mxu0 %v428
  %549 = vmatprep.subr.bf16.mxu0 0
  %550 = vmatpush1.bf16.msra.mxu0 %v429
  %551 = vmatprep.subr.bf16.mxu0 0
  %552 = vmatpush1.bf16.msra.mxu0 %v430
  %553 = vmatprep.subr.bf16.mxu0 0
  %554 = vmatpush1.bf16.msra.mxu0 %v431
  %555 = vmatprep.subr.bf16.mxu0 0
  %556 = vmatpush1.bf16.msra.mxu0 %v432
  %557 = vmatprep.subr.bf16.mxu0 0
  %558 = vmatpush1.bf16.msra.mxu0 0
  %559 = vmatprep.subr.bf16.mxu0 0
  %560 = vmatpush1.bf16.msra.mxu0 0
  %561 = vmatprep.subr.bf16.mxu0 0
  %562 = vmatpush1.bf16.msra.mxu0 0
  %563 = vmatprep.subr.bf16.mxu0 0
  %564 = vmatpush1.bf16.msra.mxu0 0
  %565 = vmatprep.subr.bf16.mxu0 0
  %566 = vmatpush1.bf16.msra.mxu0 0
  %567 = vmatprep.subr.bf16.mxu0 0
  %568 = vmatpush1.bf16.msra.mxu0 0
  %569 = vmatprep.subr.bf16.mxu0 0
  %570 = vmatpush1.bf16.msra.mxu0 0
  %571 = vmatprep.mubr.bf16.mxu0 %v444
  %572 = vmatmul.mubr.bf16.gmra.mrb[0].mxu0 %v292
  %v573 = vpop.f32.mrb[0].mxu0
  %v574 = vadd.f32 0.0, %v573
  %v575 = vpop.f32.mrb[0].mxu0
  %v576 = vpop.f32.mrb[0].mxu0
  %v577 = vadd.f32 0.0, %v576
  %v578 = vpop.f32.mrb[0].mxu0
  %579 = vmatprep.mubr.bf16.mxu0 %v447
  %580 = vmatmul.mubr.bf16.gmra.mrb[0].mxu0 %v294
  %v581 = vpop.f32.mrb[0].mxu0
  %v582 = vadd.f32 0.0, %v581
  %v583 = vpop.f32.mrb[0].mxu0
  %v584 = vpop.f32.mrb[0].mxu0
  %v585 = vadd.f32 0.0, %v584
  %v586 = vpop.f32.mrb[0].mxu0
  %587 = vmatprep.mubr.bf16.mxu0 %v450
  %588 = vmatmul.mubr.bf16.gmra.mrb[0].mxu0 %v296
  %v589 = vpop.f32.mrb[0].mxu0
  %v590 = vadd.f32 0.0, %v589
  %v591 = vpop.f32.mrb[0].mxu0
  %v592 = vpop.f32.mrb[0].mxu0
  %v593 = vadd.f32 0.0, %v592
  %v594 = vpop.f32.mrb[0].mxu0
  %595 = vmatprep.mubr.bf16.mxu0 %v453
  %596 = vmatmul.mubr.bf16.gmra.mrb[0].mxu0 %v298
  %v597 = vpop.f32.mrb[0].mxu0
  %v598 = vadd.f32 0.0, %v597
  %v599 = vpop.f32.mrb[0].mxu0
  %v600 = vpop.f32.mrb[0].mxu0
  %v601 = vadd.f32 0.0, %v600
  %v602 = vpop.f32.mrb[0].mxu0
  %603 = vmatprep.mubr.bf16.mxu0 %v456
  %604 = vmatmul.mubr.bf16.gmra.mrb[0].mxu0 %v300
  %v605 = vpop.f32.mrb[0].mxu0
  %v606 = vadd.f32 0.0, %v605
  %v607 = vpop.f32.mrb[0].mxu0
  %v608 = vpop.f32.mrb[0].mxu0
  %v609 = vadd.f32 0.0, %v608
  %v610 = vpop.f32.mrb[0].mxu0
  %611 = vmatprep.mubr.bf16.mxu0 %v459
  %612 = vmatmul.mubr.bf16.gmra.mrb[0].mxu0 %v302
  %v613 = vpop.f32.mrb[0].mxu0
  %v614 = vadd.f32 0.0, %v613
  %v615 = vpop.f32.mrb[0].mxu0
  %v616 = vpop.f32.mrb[0].mxu0
  %v617 = vadd.f32 0.0, %v616
  %v618 = vpop.f32.mrb[0].mxu0
  %619 = vmatprep.mubr.bf16.mxu0 %v462
  %620 = vmatmul.mubr.bf16.gmra.mrb[0].mxu0 %v304
  %v621 = vpop.f32.mrb[0].mxu0
  %v622 = vadd.f32 0.0, %v621
  %v623 = vpop.f32.mrb[0].mxu0
  %v624 = vpop.f32.mrb[0].mxu0
  %v625 = vadd.f32 0.0, %v624
  %v626 = vpop.f32.mrb[0].mxu0
  %627 = vmatprep.mubr.bf16.mxu0 %v465
  %628 = vmatmul.mubr.bf16.gmra.mrb[0].mxu0 %v306
  %v629 = vpop.f32.mrb[0].mxu0
  %v630 = vadd.f32 0.0, %v629
  %v631 = vpop.f32.mrb[0].mxu0
  %v632 = vpop.f32.mrb[0].mxu0
  %v633 = vadd.f32 0.0, %v632
  %v634 = vpop.f32.mrb[0].mxu0
  %635 = vmatprep.mubr.bf16.mxu0 %v468
  %636 = vmatmul.mubr.bf16.gmra.mrb[0].mxu0 %v308
  %v637 = vpop.f32.mrb[0].mxu0
  %v638 = vadd.f32 0.0, %v637
  %v639 = vpop.f32.mrb[0].mxu0
  %v640 = vpop.f32.mrb[0].mxu0
  %v641 = vadd.f32 0.0, %v640
  %v642 = vpop.f32.mrb[0].mxu0
  %643 = vmatprep.mubr.bf16.mxu0 %v471
  %644 = vmatmul.mubr.bf16.gmra.mrb[0].mxu0 %v310
  %v645 = vpop.f32.mrb[0].mxu0
  %v646 = vadd.f32 0.0, %v645
  %v647 = vpop.f32.mrb[0].mxu0
  %v648 = vpop.f32.mrb[0].mxu0
  %v649 = vadd.f32 0.0, %v648
  %v650 = vpop.f32.mrb[0].mxu0
  %651 = vmatprep.mubr.bf16.mxu0 %v474
  %652 = vmatmul.mubr.bf16.gmra.mrb[0].mxu0 %v312
  %v653 = vpop.f32.mrb[0].mxu0
  %v654 = vadd.f32 0.0, %v653
  %v655 = vpop.f32.mrb[0].mxu0
  %v656 = vpop.f32.mrb[0].mxu0
  %v657 = vadd.f32 0.0, %v656
  %v658 = vpop.f32.mrb[0].mxu0
  %659 = vmatprep.mubr.bf16.mxu0 %v477
  %660 = vmatmul.mubr.bf16.gmra.mrb[0].mxu0 %v314
  %v661 = vpop.f32.mrb[0].mxu0
  %v662 = vadd.f32 0.0, %v661
  %v663 = vpop.f32.mrb[0].mxu0
  %v664 = vpop.f32.mrb[0].mxu0
  %v665 = vadd.f32 0.0, %v664
  %v666 = vpop.f32.mrb[0].mxu0
  %667 = vmatprep.mubr.bf16.mxu0 %v480
  %668 = vmatmul.mubr.bf16.gmra.mrb[0].mxu0 %v316
  %v669 = vpop.f32.mrb[0].mxu0
  %v670 = vadd.f32 0.0, %v669
  %v671 = vpop.f32.mrb[0].mxu0
  %v672 = vpop.f32.mrb[0].mxu0
  %v673 = vadd.f32 0.0, %v672
  %v674 = vpop.f32.mrb[0].mxu0
  %675 = vmatprep.mubr.bf16.mxu0 %v483
  %676 = vmatmul.mubr.bf16.gmra.mrb[0].mxu0 %v318
  %v677 = vpop.f32.mrb[0].mxu0
  %v678 = vadd.f32 0.0, %v677
  %v679 = vpop.f32.mrb[0].mxu0
  %v680 = vpop.f32.mrb[0].mxu0
  %v681 = vadd.f32 0.0, %v680
  %v682 = vpop.f32.mrb[0].mxu0
  %683 = vmatprep.mubr.bf16.mxu0 %v486
  %684 = vmatmul.mubr.bf16.gmra.mrb[0].mxu0 %v320
  %v685 = vpop.f32.mrb[0].mxu0
  %v686 = vadd.f32 0.0, %v685
  %v687 = vpop.f32.mrb[0].mxu0
  %v688 = vpop.f32.mrb[0].mxu0
  %v689 = vadd.f32 0.0, %v688
  %v690 = vpop.f32.mrb[0].mxu0
  %691 = vmatprep.mubr.bf16.mxu0 %v489
  %692 = vmatmul.mubr.bf16.gmra.mrb[0].mxu0 %v322
  %v693 = vpop.f32.mrb[0].mxu0
  %v694 = vadd.f32 0.0, %v693
  %v695 = vpop.f32.mrb[0].mxu0
  %v696 = vpop.f32.mrb[0].mxu0
  %v697 = vadd.f32 0.0, %v696
  %v698 = vpop.f32.mrb[0].mxu0
  %699 = vmatprep.mubr.bf16.mxu0 %v492
  %700 = vmatmul.mubr.bf16.gmra.mrb[0].mxu0 %v324
  %v701 = vpop.f32.mrb[0].mxu0
  %v702 = vadd.f32 0.0, %v701
  %v703 = vpop.f32.mrb[0].mxu0
  %v704 = vpop.f32.mrb[0].mxu0
  %v705 = vadd.f32 0.0, %v704
  %v706 = vpop.f32.mrb[0].mxu0
  %707 = vmatprep.mubr.bf16.mxu0 %v495
  %708 = vmatmul.mubr.bf16.gmra.mrb[0].mxu0 %v326
  %v709 = vpop.f32.mrb[0].mxu0
  %v710 = vadd.f32 0.0, %v709
  %v711 = vpop.f32.mrb[0].mxu0
  %v712 = vpop.f32.mrb[0].mxu0
  %v713 = vadd.f32 0.0, %v712
  %v714 = vpop.f32.mrb[0].mxu0
  %715 = vmatprep.mubr.bf16.mxu0 %v498
  %716 = vmatmul.mubr.bf16.gmra.mrb[0].mxu0 %v328
  %v717 = vpop.f32.mrb[0].mxu0
  %v718 = vadd.f32 0.0, %v717
  %v719 = vpop.f32.mrb[0].mxu0
  %v720 = vpop.f32.mrb[0].mxu0
  %v721 = vadd.f32 0.0, %v720
  %v722 = vpop.f32.mrb[0].mxu0
  %723 = vmatprep.mubr.bf16.mxu0 %v501
  %724 = vmatmul.mubr.bf16.gmra.mrb[0].mxu0 %v330
  %v725 = vpop.f32.mrb[0].mxu0
  %v726 = vadd.f32 0.0, %v725
  %v727 = vpop.f32.mrb[0].mxu0
  %v728 = vpop.f32.mrb[0].mxu0
  %v729 = vadd.f32 0.0, %v728
  %v730 = vpop.f32.mrb[0].mxu0
  %731 = vmatprep.mubr.bf16.mxu0 %v504
  %732 = vmatmul.mubr.bf16.gmra.mrb[0].mxu0 %v332
  %v733 = vpop.f32.mrb[0].mxu0
  %v734 = vadd.f32 0.0, %v733
  %v735 = vpop.f32.mrb[0].mxu0
  %v736 = vpop.f32.mrb[0].mxu0
  %v737 = vadd.f32 0.0, %v736
  %v738 = vpop.f32.mrb[0].mxu0
  %739 = vmatprep.mubr.bf16.mxu0 %v507
  %740 = vmatmul.mubr.bf16.gmra.mrb[0].mxu0 %v334
  %v741 = vpop.f32.mrb[0].mxu0
  %v742 = vadd.f32 0.0, %v741
  %v743 = vpop.f32.mrb[0].mxu0
  %v744 = vpop.f32.mrb[0].mxu0
  %v745 = vadd.f32 0.0, %v744
  %v746 = vpop.f32.mrb[0].mxu0
  %747 = vmatprep.mubr.bf16.mxu0 %v510
  %748 = vmatmul.mubr.bf16.gmra.mrb[0].mxu0 %v336
  %v749 = vpop.f32.mrb[0].mxu0
  %v750 = vadd.f32 0.0, %v749
  %v751 = vpop.f32.mrb[0].mxu0
  %v752 = vpop.f32.mrb[0].mxu0
  %v753 = vadd.f32 0.0, %v752
  %v754 = vpop.f32.mrb[0].mxu0
  %755 = vmatprep.mubr.bf16.mxu0 %v513
  %756 = vmatmul.mubr.bf16.gmra.mrb[0].mxu0 %v338
  %v757 = vpop.f32.mrb[0].mxu0
  %v758 = vadd.f32 0.0, %v757
  %v759 = vpop.f32.mrb[0].mxu0
  %v760 = vpop.f32.mrb[0].mxu0
  %v761 = vadd.f32 0.0, %v760
  %v762 = vpop.f32.mrb[0].mxu0
  %763 = vmatprep.mubr.bf16.mxu0 %v516
  %764 = vmatmul.mubr.bf16.gmra.mrb[0].mxu0 %v340
  %v765 = vpop.f32.mrb[0].mxu0
  %v766 = vadd.f32 0.0, %v765
  %v767 = vpop.f32.mrb[0].mxu0
  %v768 = vpop.f32.mrb[0].mxu0
  %v769 = vadd.f32 0.0, %v768
  %v770 = vpop.f32.mrb[0].mxu0
  %771 = vmatprep.mubr.bf16.mxu0 %v519
  %772 = vmatmul.mubr.bf16.gmra.mrb[0].mxu0 %v342
  %v773 = vpop.f32.mrb[0].mxu0
  %v774 = vadd.f32 0.0, %v773
  %v775 = vpop.f32.mrb[0].mxu0
  %v776 = vpop.f32.mrb[0].mxu0
  %v777 = vadd.f32 0.0, %v776
  %v778 = vpop.f32.mrb[0].mxu0
  %779 = vmatprep.mubr.bf16.mxu0 %v522
  %780 = vmatmul.mubr.bf16.gmra.mrb[0].mxu0 %v344
  %v781 = vpop.f32.mrb[0].mxu0
  %v782 = vadd.f32 0.0, %v781
  %v783 = vpop.f32.mrb[0].mxu0
  %v784 = vpop.f32.mrb[0].mxu0
  %v785 = vadd.f32 0.0, %v784
  %v786 = vpop.f32.mrb[0].mxu0
  %787 = vmatprep.mubr.bf16.mxu0 %v525
  %788 = vmatmul.mubr.bf16.gmra.mrb[0].mxu0 %v346
  %v789 = vpop.f32.mrb[0].mxu0
  %v790 = vadd.f32 0.0, %v789
  %v791 = vpop.f32.mrb[0].mxu0
  %v792 = vpop.f32.mrb[0].mxu0
  %v793 = vadd.f32 0.0, %v792
  %v794 = vpop.f32.mrb[0].mxu0
  %795 = vmatprep.mubr.bf16.mxu0 %v528
  %796 = vmatmul.mubr.bf16.gmra.mrb[0].mxu0 %v348
  %v797 = vpop.f32.mrb[0].mxu0
  %v798 = vadd.f32 0.0, %v797
  %v799 = vpop.f32.mrb[0].mxu0
  %v800 = vpop.f32.mrb[0].mxu0
  %v801 = vadd.f32 0.0, %v800
  %v802 = vpop.f32.mrb[0].mxu0
  %803 = vmatprep.mubr.bf16.mxu0 %v531
  %804 = vmatmul.mubr.bf16.gmra.mrb[0].mxu0 %v350
  %v805 = vpop.f32.mrb[0].mxu0
  %v806 = vadd.f32 0.0, %v805
  %v807 = vpop.f32.mrb[0].mxu0
  %v808 = vpop.f32.mrb[0].mxu0
  %v809 = vadd.f32 0.0, %v808
  %v810 = vpop.f32.mrb[0].mxu0
  %811 = vmatprep.mubr.bf16.mxu0 %v534
  %812 = vmatmul.mubr.bf16.gmra.mrb[0].mxu0 %v352
  %v813 = vpop.f32.mrb[0].mxu0
  %v814 = vadd.f32 0.0, %v813
  %v815 = vpop.f32.mrb[0].mxu0
  %v816 = vpop.f32.mrb[0].mxu0
  %v817 = vadd.f32 0.0, %v816
  %v818 = vpop.f32.mrb[0].mxu0
  %819 = vmatprep.mubr.bf16.mxu0 %v537
  %820 = vmatmul.mubr.bf16.gmra.mrb[0].mxu0 %v354
  %v821 = vpop.f32.mrb[0].mxu0
  %v822 = vadd.f32 0.0, %v821
  %v823 = vpop.f32.mrb[0].mxu0
  %v824 = vpop.f32.mrb[0].mxu0
  %v825 = vadd.f32 0.0, %v824
  %v826 = vpop.f32.mrb[0].mxu0
  %827 = vdwg.mxu0
  %v828 = vld [vmem:[%s2] sm:$0x1]
  %v830 = vlaneseq
  %v831 = vshrl.u32 %v830, 7
  %v832 = vsub.s32 0, %v831
  %v833 = vrot.slane %v828, %v832
  %v835 = vmul.f32 %v574, %v833
  %v836 = vmul.f32 %v577, %v833
  %v837 = vmul.f32 %v582, %v833
  %v838 = vmul.f32 %v585, %v833
  %v839 = vmul.f32 %v590, %v833
  %v840 = vmul.f32 %v593, %v833
  %v841 = vmul.f32 %v598, %v833
  %v842 = vmul.f32 %v601, %v833
  %v843 = vmul.f32 %v606, %v833
  %v844 = vmul.f32 %v609, %v833
  %v845 = vmul.f32 %v614, %v833
  %v846 = vmul.f32 %v617, %v833
  %v847 = vmul.f32 %v622, %v833
  %v848 = vmul.f32 %v625, %v833
  %v849 = vmul.f32 %v630, %v833
  %v850 = vmul.f32 %v633, %v833
  %v851 = vmul.f32 %v638, %v833
  %v852 = vmul.f32 %v641, %v833
  %v853 = vmul.f32 %v646, %v833
  %v854 = vmul.f32 %v649, %v833
  %v855 = vmul.f32 %v654, %v833
  %v856 = vmul.f32 %v657, %v833
  %v857 = vmul.f32 %v662, %v833
  %v858 = vmul.f32 %v665, %v833
  %v859 = vmul.f32 %v670, %v833
  %v860 = vmul.f32 %v673, %v833
  %v861 = vmul.f32 %v678, %v833
  %v862 = vmul.f32 %v681, %v833
  %v863 = vmul.f32 %v686, %v833
  %v864 = vmul.f32 %v689, %v833
  %v865 = vmul.f32 %v694, %v833
  %v866 = vmul.f32 %v697, %v833
  %v867 = vmul.f32 %v702, %v833
  %v868 = vmul.f32 %v705, %v833
  %v869 = vmul.f32 %v710, %v833
  %v870 = vmul.f32 %v713, %v833
  %v871 = vmul.f32 %v718, %v833
  %v872 = vmul.f32 %v721, %v833
  %v873 = vmul.f32 %v726, %v833
  %v874 = vmul.f32 %v729, %v833
  %v875 = vmul.f32 %v734, %v833
  %v876 = vmul.f32 %v737, %v833
  %v877 = vmul.f32 %v742, %v833
  %v878 = vmul.f32 %v745, %v833
  %v879 = vmul.f32 %v750, %v833
  %v880 = vmul.f32 %v753, %v833
  %v881 = vmul.f32 %v758, %v833
  %v882 = vmul.f32 %v761, %v833
  %v883 = vmul.f32 %v766, %v833
  %v884 = vmul.f32 %v769, %v833
  %v885 = vmul.f32 %v774, %v833
  %v886 = vmul.f32 %v777, %v833
  %v887 = vmul.f32 %v782, %v833
  %v888 = vmul.f32 %v785, %v833
  %v889 = vmul.f32 %v790, %v833
  %v890 = vmul.f32 %v793, %v833
  %v891 = vmul.f32 %v798, %v833
  %v892 = vmul.f32 %v801, %v833
  %v893 = vmul.f32 %v806, %v833
  %v894 = vmul.f32 %v809, %v833
  %v895 = vmul.f32 %v814, %v833
  %v896 = vmul.f32 %v817, %v833
  %v897 = vmul.f32 %v822, %v833
  %v898 = vmul.f32 %v825, %v833
  %v899 = vld [vmem:[%s3] sm:$0x1]
  %v901 = vlaneseq
  %v902 = vshrl.u32 %v901, 7
  %v903 = vsub.s32 0, %v902
  %v904 = vrot.slane %v899, %v903
  %v906 = vadd.f32 %v835, %v904
  %v907 = vadd.f32 %v836, %v904
  %v908 = vadd.f32 %v837, %v904
  %v909 = vadd.f32 %v838, %v904
  %v910 = vadd.f32 %v839, %v904
  %v911 = vadd.f32 %v840, %v904
  %v912 = vadd.f32 %v841, %v904
  %v913 = vadd.f32 %v842, %v904
  %v914 = vadd.f32 %v843, %v904
  %v915 = vadd.f32 %v844, %v904
  %v916 = vadd.f32 %v845, %v904
  %v917 = vadd.f32 %v846, %v904
  %v918 = vadd.f32 %v847, %v904
  %v919 = vadd.f32 %v848, %v904
  %v920 = vadd.f32 %v849, %v904
  %v921 = vadd.f32 %v850, %v904
  %v922 = vadd.f32 %v851, %v904
  %v923 = vadd.f32 %v852, %v904
  %v924 = vadd.f32 %v853, %v904
  %v925 = vadd.f32 %v854, %v904
  %v926 = vadd.f32 %v855, %v904
  %v927 = vadd.f32 %v856, %v904
  %v928 = vadd.f32 %v857, %v904
  %v929 = vadd.f32 %v858, %v904
  %v930 = vadd.f32 %v859, %v904
  %v931 = vadd.f32 %v860, %v904
  %v932 = vadd.f32 %v861, %v904
  %v933 = vadd.f32 %v862, %v904
  %v934 = vadd.f32 %v863, %v904
  %v935 = vadd.f32 %v864, %v904
  %v936 = vadd.f32 %v865, %v904
  %v937 = vadd.f32 %v866, %v904
  %v938 = vadd.f32 %v867, %v904
  %v939 = vadd.f32 %v868, %v904
  %v940 = vadd.f32 %v869, %v904
  %v941 = vadd.f32 %v870, %v904
  %v942 = vadd.f32 %v871, %v904
  %v943 = vadd.f32 %v872, %v904
  %v944 = vadd.f32 %v873, %v904
  %v945 = vadd.f32 %v874, %v904
  %v946 = vadd.f32 %v875, %v904
  %v947 = vadd.f32 %v876, %v904
  %v948 = vadd.f32 %v877, %v904
  %v949 = vadd.f32 %v878, %v904
  %v950 = vadd.f32 %v879, %v904
  %v951 = vadd.f32 %v880, %v904
  %v952 = vadd.f32 %v881, %v904
  %v953 = vadd.f32 %v882, %v904
  %v954 = vadd.f32 %v883, %v904
  %v955 = vadd.f32 %v884, %v904
  %v956 = vadd.f32 %v885, %v904
  %v957 = vadd.f32 %v886, %v904
  %v958 = vadd.f32 %v887, %v904
  %v959 = vadd.f32 %v888, %v904
  %v960 = vadd.f32 %v889, %v904
  %v961 = vadd.f32 %v890, %v904
  %v962 = vadd.f32 %v891, %v904
  %v963 = vadd.f32 %v892, %v904
  %v964 = vadd.f32 %v893, %v904
  %v965 = vadd.f32 %v894, %v904
  %v966 = vadd.f32 %v895, %v904
  %v967 = vadd.f32 %v896, %v904
  %v968 = vadd.f32 %v897, %v904
  %v969 = vadd.f32 %v898, %v904
  %v970 = vxor.u32 %v906, 2147483648
  %v971 = vxor.u32 %v907, 2147483648
  %v972 = vxor.u32 %v908, 2147483648
  %v973 = vxor.u32 %v909, 2147483648
  %v974 = vxor.u32 %v910, 2147483648
  %v975 = vxor.u32 %v911, 2147483648
  %v976 = vxor.u32 %v912, 2147483648
  %v977 = vxor.u32 %v913, 2147483648
  %v978 = vxor.u32 %v914, 2147483648
  %v979 = vxor.u32 %v915, 2147483648
  %v980 = vxor.u32 %v916, 2147483648
  %v981 = vxor.u32 %v917, 2147483648
  %v982 = vxor.u32 %v918, 2147483648
  %v983 = vxor.u32 %v919, 2147483648
  %v984 = vxor.u32 %v920, 2147483648
  %v985 = vxor.u32 %v921, 2147483648
  %v986 = vxor.u32 %v922, 2147483648
  %v987 = vxor.u32 %v923, 2147483648
  %v988 = vxor.u32 %v924, 2147483648
  %v989 = vxor.u32 %v925, 2147483648
  %v990 = vxor.u32 %v926, 2147483648
  %v991 = vxor.u32 %v927, 2147483648
  %v992 = vxor.u32 %v928, 2147483648
  %v993 = vxor.u32 %v929, 2147483648
  %v994 = vxor.u32 %v930, 2147483648
  %v995 = vxor.u32 %v931, 2147483648
  %v996 = vxor.u32 %v932, 2147483648
  %v997 = vxor.u32 %v933, 2147483648
  %v998 = vxor.u32 %v934, 2147483648
  %v999 = vxor.u32 %v935, 2147483648
  %v1000 = vxor.u32 %v936, 2147483648
  %v1001 = vxor.u32 %v937, 2147483648
  %v1002 = vxor.u32 %v938, 2147483648
  %v1003 = vxor.u32 %v939, 2147483648
  %v1004 = vxor.u32 %v940, 2147483648
  %v1005 = vxor.u32 %v941, 2147483648
  %v1006 = vxor.u32 %v942, 2147483648
  %v1007 = vxor.u32 %v943, 2147483648
  %v1008 = vxor.u32 %v944, 2147483648
  %v1009 = vxor.u32 %v945, 2147483648
  %v1010 = vxor.u32 %v946, 2147483648
  %v1011 = vxor.u32 %v947, 2147483648
  %v1012 = vxor.u32 %v948, 2147483648
  %v1013 = vxor.u32 %v949, 2147483648
  %v1014 = vxor.u32 %v950, 2147483648
  %v1015 = vxor.u32 %v951, 2147483648
  %v1016 = vxor.u32 %v952, 2147483648
  %v1017 = vxor.u32 %v953, 2147483648
  %v1018 = vxor.u32 %v954, 2147483648
  %v1019 = vxor.u32 %v955, 2147483648
  %v1020 = vxor.u32 %v956, 2147483648
  %v1021 = vxor.u32 %v957, 2147483648
  %v1022 = vxor.u32 %v958, 2147483648
  %v1023 = vxor.u32 %v959, 2147483648
  %v1024 = vxor.u32 %v960, 2147483648
  %v1025 = vxor.u32 %v961, 2147483648
  %v1026 = vxor.u32 %v962, 2147483648
  %v1027 = vxor.u32 %v963, 2147483648
  %v1028 = vxor.u32 %v964, 2147483648
  %v1029 = vxor.u32 %v965, 2147483648
  %v1030 = vxor.u32 %v966, 2147483648
  %v1031 = vxor.u32 %v967, 2147483648
  %v1032 = vxor.u32 %v968, 2147483648
  %v1033 = vxor.u32 %v969, 2147483648
  %v1034 = vmul.f32 %v970, 1.442695
  %v1035 = vpow.pop %v1034
  %v1036 = vmul.f32 %v971, 1.442695
  %v1037 = vpow.pop %v1036
  %v1038 = vmul.f32 %v972, 1.442695
  %v1039 = vpow.pop %v1038
  %v1040 = vmul.f32 %v973, 1.442695
  %v1041 = vpow.pop %v1040
  %v1042 = vmul.f32 %v974, 1.442695
  %v1043 = vpow.pop %v1042
  %v1044 = vmul.f32 %v975, 1.442695
  %v1045 = vpow.pop %v1044
  %v1046 = vmul.f32 %v976, 1.442695
  %v1047 = vpow.pop %v1046
  %v1048 = vmul.f32 %v977, 1.442695
  %v1049 = vpow.pop %v1048
  %v1050 = vmul.f32 %v978, 1.442695
  %v1051 = vpow.pop %v1050
  %v1052 = vmul.f32 %v979, 1.442695
  %v1053 = vpow.pop %v1052
  %v1054 = vmul.f32 %v980, 1.442695
  %v1055 = vpow.pop %v1054
  %v1056 = vmul.f32 %v981, 1.442695
  %v1057 = vpow.pop %v1056
  %v1058 = vmul.f32 %v982, 1.442695
  %v1059 = vpow.pop %v1058
  %v1060 = vmul.f32 %v983, 1.442695
  %v1061 = vpow.pop %v1060
  %v1062 = vmul.f32 %v984, 1.442695
  %v1063 = vpow.pop %v1062
  %v1064 = vmul.f32 %v985, 1.442695
  %v1065 = vpow.pop %v1064
  %v1066 = vmul.f32 %v986, 1.442695
  %v1067 = vpow.pop %v1066
  %v1068 = vmul.f32 %v987, 1.442695
  %v1069 = vpow.pop %v1068
  %v1070 = vmul.f32 %v988, 1.442695
  %v1071 = vpow.pop %v1070
  %v1072 = vmul.f32 %v989, 1.442695
  %v1073 = vpow.pop %v1072
  %v1074 = vmul.f32 %v990, 1.442695
  %v1075 = vpow.pop %v1074
  %v1076 = vmul.f32 %v991, 1.442695
  %v1077 = vpow.pop %v1076
  %v1078 = vmul.f32 %v992, 1.442695
  %v1079 = vpow.pop %v1078
  %v1080 = vmul.f32 %v993, 1.442695
  %v1081 = vpow.pop %v1080
  %v1082 = vmul.f32 %v994, 1.442695
  %v1083 = vpow.pop %v1082
  %v1084 = vmul.f32 %v995, 1.442695
  %v1085 = vpow.pop %v1084
  %v1086 = vmul.f32 %v996, 1.442695
  %v1087 = vpow.pop %v1086
  %v1088 = vmul.f32 %v997, 1.442695
  %v1089 = vpow.pop %v1088
  %v1090 = vmul.f32 %v998, 1.442695
  %v1091 = vpow.pop %v1090
  %v1092 = vmul.f32 %v999, 1.442695
  %v1093 = vpow.pop %v1092
  %v1094 = vmul.f32 %v1000, 1.442695
  %v1095 = vpow.pop %v1094
  %v1096 = vmul.f32 %v1001, 1.442695
  %v1097 = vpow.pop %v1096
  %v1098 = vmul.f32 %v1002, 1.442695
  %v1099 = vpow.pop %v1098
  %v1100 = vmul.f32 %v1003, 1.442695
  %v1101 = vpow.pop %v1100
  %v1102 = vmul.f32 %v1004, 1.442695
  %v1103 = vpow.pop %v1102
  %v1104 = vmul.f32 %v1005, 1.442695
  %v1105 = vpow.pop %v1104
  %v1106 = vmul.f32 %v1006, 1.442695
  %v1107 = vpow.pop %v1106
  %v1108 = vmul.f32 %v1007, 1.442695
  %v1109 = vpow.pop %v1108
  %v1110 = vmul.f32 %v1008, 1.442695
  %v1111 = vpow.pop %v1110
  %v1112 = vmul.f32 %v1009, 1.442695
  %v1113 = vpow.pop %v1112
  %v1114 = vmul.f32 %v1010, 1.442695
  %v1115 = vpow.pop %v1114
  %v1116 = vmul.f32 %v1011, 1.442695
  %v1117 = vpow.pop %v1116
  %v1118 = vmul.f32 %v1012, 1.442695
  %v1119 = vpow.pop %v1118
  %v1120 = vmul.f32 %v1013, 1.442695
  %v1121 = vpow.pop %v1120
  %v1122 = vmul.f32 %v1014, 1.442695
  %v1123 = vpow.pop %v1122
  %v1124 = vmul.f32 %v1015, 1.442695
  %v1125 = vpow.pop %v1124
  %v1126 = vmul.f32 %v1016, 1.442695
  %v1127 = vpow.pop %v1126
  %v1128 = vmul.f32 %v1017, 1.442695
  %v1129 = vpow.pop %v1128
  %v1130 = vmul.f32 %v1018, 1.442695
  %v1131 = vpow.pop %v1130
  %v1132 = vmul.f32 %v1019, 1.442695
  %v1133 = vpow.pop %v1132
  %v1134 = vmul.f32 %v1020, 1.442695
  %v1135 = vpow.pop %v1134
  %v1136 = vmul.f32 %v1021, 1.442695
  %v1137 = vpow.pop %v1136
  %v1138 = vmul.f32 %v1022, 1.442695
  %v1139 = vpow.pop %v1138
  %v1140 = vmul.f32 %v1023, 1.442695
  %v1141 = vpow.pop %v1140
  %v1142 = vmul.f32 %v1024, 1.442695
  %v1143 = vpow.pop %v1142
  %v1144 = vmul.f32 %v1025, 1.442695
  %v1145 = vpow.pop %v1144
  %v1146 = vmul.f32 %v1026, 1.442695
  %v1147 = vpow.pop %v1146
  %v1148 = vmul.f32 %v1027, 1.442695
  %v1149 = vpow.pop %v1148
  %v1150 = vmul.f32 %v1028, 1.442695
  %v1151 = vpow.pop %v1150
  %v1152 = vmul.f32 %v1029, 1.442695
  %v1153 = vpow.pop %v1152
  %v1154 = vmul.f32 %v1030, 1.442695
  %v1155 = vpow.pop %v1154
  %v1156 = vmul.f32 %v1031, 1.442695
  %v1157 = vpow.pop %v1156
  %v1158 = vmul.f32 %v1032, 1.442695
  %v1159 = vpow.pop %v1158
  %v1160 = vmul.f32 %v1033, 1.442695
  %v1161 = vpow.pop %v1160
  %v1162 = vadd.f32 %v1035, 1.0
  %v1163 = vadd.f32 %v1037, 1.0
  %v1164 = vadd.f32 %v1039, 1.0
  %v1165 = vadd.f32 %v1041, 1.0
  %v1166 = vadd.f32 %v1043, 1.0
  %v1167 = vadd.f32 %v1045, 1.0
  %v1168 = vadd.f32 %v1047, 1.0
  %v1169 = vadd.f32 %v1049, 1.0
  %v1170 = vadd.f32 %v1051, 1.0
  %v1171 = vadd.f32 %v1053, 1.0
  %v1172 = vadd.f32 %v1055, 1.0
  %v1173 = vadd.f32 %v1057, 1.0
  %v1174 = vadd.f32 %v1059, 1.0
  %v1175 = vadd.f32 %v1061, 1.0
  %v1176 = vadd.f32 %v1063, 1.0
  %v1177 = vadd.f32 %v1065, 1.0
  %v1178 = vadd.f32 %v1067, 1.0
  %v1179 = vadd.f32 %v1069, 1.0
  %v1180 = vadd.f32 %v1071, 1.0
  %v1181 = vadd.f32 %v1073, 1.0
  %v1182 = vadd.f32 %v1075, 1.0
  %v1183 = vadd.f32 %v1077, 1.0
  %v1184 = vadd.f32 %v1079, 1.0
  %v1185 = vadd.f32 %v1081, 1.0
  %v1186 = vadd.f32 %v1083, 1.0
  %v1187 = vadd.f32 %v1085, 1.0
  %v1188 = vadd.f32 %v1087, 1.0
  %v1189 = vadd.f32 %v1089, 1.0
  %v1190 = vadd.f32 %v1091, 1.0
  %v1191 = vadd.f32 %v1093, 1.0
  %v1192 = vadd.f32 %v1095, 1.0
  %v1193 = vadd.f32 %v1097, 1.0
  %v1194 = vadd.f32 %v1099, 1.0
  %v1195 = vadd.f32 %v1101, 1.0
  %v1196 = vadd.f32 %v1103, 1.0
  %v1197 = vadd.f32 %v1105, 1.0
  %v1198 = vadd.f32 %v1107, 1.0
  %v1199 = vadd.f32 %v1109, 1.0
  %v1200 = vadd.f32 %v1111, 1.0
  %v1201 = vadd.f32 %v1113, 1.0
  %v1202 = vadd.f32 %v1115, 1.0
  %v1203 = vadd.f32 %v1117, 1.0
  %v1204 = vadd.f32 %v1119, 1.0
  %v1205 = vadd.f32 %v1121, 1.0
  %v1206 = vadd.f32 %v1123, 1.0
  %v1207 = vadd.f32 %v1125, 1.0
  %v1208 = vadd.f32 %v1127, 1.0
  %v1209 = vadd.f32 %v1129, 1.0
  %v1210 = vadd.f32 %v1131, 1.0
  %v1211 = vadd.f32 %v1133, 1.0
  %v1212 = vadd.f32 %v1135, 1.0
  %v1213 = vadd.f32 %v1137, 1.0
  %v1214 = vadd.f32 %v1139, 1.0
  %v1215 = vadd.f32 %v1141, 1.0
  %v1216 = vadd.f32 %v1143, 1.0
  %v1217 = vadd.f32 %v1145, 1.0
  %v1218 = vadd.f32 %v1147, 1.0
  %v1219 = vadd.f32 %v1149, 1.0
  %v1220 = vadd.f32 %v1151, 1.0
  %v1221 = vadd.f32 %v1153, 1.0
  %v1222 = vadd.f32 %v1155, 1.0
  %v1223 = vadd.f32 %v1157, 1.0
  %v1224 = vadd.f32 %v1159, 1.0
  %v1225 = vadd.f32 %v1161, 1.0
  %v1226 = vrcp.pop %v1162
  %v1227 = vmul.f32 1.0, %v1226
  %v1228 = vrcp.pop %v1163
  %v1229 = vmul.f32 1.0, %v1228
  %v1230 = vrcp.pop %v1164
  %v1231 = vmul.f32 1.0, %v1230
  %v1232 = vrcp.pop %v1165
  %v1233 = vmul.f32 1.0, %v1232
  %v1234 = vrcp.pop %v1166
  %v1235 = vmul.f32 1.0, %v1234
  %v1236 = vrcp.pop %v1167
  %v1237 = vmul.f32 1.0, %v1236
  %v1238 = vrcp.pop %v1168
  %v1239 = vmul.f32 1.0, %v1238
  %v1240 = vrcp.pop %v1169
  %v1241 = vmul.f32 1.0, %v1240
  %v1242 = vrcp.pop %v1170
  %v1243 = vmul.f32 1.0, %v1242
  %v1244 = vrcp.pop %v1171
  %v1245 = vmul.f32 1.0, %v1244
  %v1246 = vrcp.pop %v1172
  %v1247 = vmul.f32 1.0, %v1246
  %v1248 = vrcp.pop %v1173
  %v1249 = vmul.f32 1.0, %v1248
  %v1250 = vrcp.pop %v1174
  %v1251 = vmul.f32 1.0, %v1250
  %v1252 = vrcp.pop %v1175
  %v1253 = vmul.f32 1.0, %v1252
  %v1254 = vrcp.pop %v1176
  %v1255 = vmul.f32 1.0, %v1254
  %v1256 = vrcp.pop %v1177
  %v1257 = vmul.f32 1.0, %v1256
  %v1258 = vrcp.pop %v1178
  %v1259 = vmul.f32 1.0, %v1258
  %v1260 = vrcp.pop %v1179
  %v1261 = vmul.f32 1.0, %v1260
  %v1262 = vrcp.pop %v1180
  %v1263 = vmul.f32 1.0, %v1262
  %v1264 = vrcp.pop %v1181
  %v1265 = vmul.f32 1.0, %v1264
  %v1266 = vrcp.pop %v1182
  %v1267 = vmul.f32 1.0, %v1266
  %v1268 = vrcp.pop %v1183
  %v1269 = vmul.f32 1.0, %v1268
  %v1270 = vrcp.pop %v1184
  %v1271 = vmul.f32 1.0, %v1270
  %v1272 = vrcp.pop %v1185
  %v1273 = vmul.f32 1.0, %v1272
  %v1274 = vrcp.pop %v1186
  %v1275 = vmul.f32 1.0, %v1274
  %v1276 = vrcp.pop %v1187
  %v1277 = vmul.f32 1.0, %v1276
  %v1278 = vrcp.pop %v1188
  %v1279 = vmul.f32 1.0, %v1278
  %v1280 = vrcp.pop %v1189
  %v1281 = vmul.f32 1.0, %v1280
  %v1282 = vrcp.pop %v1190
  %v1283 = vmul.f32 1.0, %v1282
  %v1284 = vrcp.pop %v1191
  %v1285 = vmul.f32 1.0, %v1284
  %v1286 = vrcp.pop %v1192
  %v1287 = vmul.f32 1.0, %v1286
  %v1288 = vrcp.pop %v1193
  %v1289 = vmul.f32 1.0, %v1288
  %v1290 = vrcp.pop %v1194
  %v1291 = vmul.f32 1.0, %v1290
  %v1292 = vrcp.pop %v1195
  %v1293 = vmul.f32 1.0, %v1292
  %v1294 = vrcp.pop %v1196
  %v1295 = vmul.f32 1.0, %v1294
  %v1296 = vrcp.pop %v1197
  %v1297 = vmul.f32 1.0, %v1296
  %v1298 = vrcp.pop %v1198
  %v1299 = vmul.f32 1.0, %v1298
  %v1300 = vrcp.pop %v1199
  %v1301 = vmul.f32 1.0, %v1300
  %v1302 = vrcp.pop %v1200
  %v1303 = vmul.f32 1.0, %v1302
  %v1304 = vrcp.pop %v1201
  %v1305 = vmul.f32 1.0, %v1304
  %v1306 = vrcp.pop %v1202
  %v1307 = vmul.f32 1.0, %v1306
  %v1308 = vrcp.pop %v1203
  %v1309 = vmul.f32 1.0, %v1308
  %v1310 = vrcp.pop %v1204
  %v1311 = vmul.f32 1.0, %v1310
  %v1312 = vrcp.pop %v1205
  %v1313 = vmul.f32 1.0, %v1312
  %v1314 = vrcp.pop %v1206
  %v1315 = vmul.f32 1.0, %v1314
  %v1316 = vrcp.pop %v1207
  %v1317 = vmul.f32 1.0, %v1316
  %v1318 = vrcp.pop %v1208
  %v1319 = vmul.f32 1.0, %v1318
  %v1320 = vrcp.pop %v1209
  %v1321 = vmul.f32 1.0, %v1320
  %v1322 = vrcp.pop %v1210
  %v1323 = vmul.f32 1.0, %v1322
  %v1324 = vrcp.pop %v1211
  %v1325 = vmul.f32 1.0, %v1324
  %v1326 = vrcp.pop %v1212
  %v1327 = vmul.f32 1.0, %v1326
  %v1328 = vrcp.pop %v1213
  %v1329 = vmul.f32 1.0, %v1328
  %v1330 = vrcp.pop %v1214
  %v1331 = vmul.f32 1.0, %v1330
  %v1332 = vrcp.pop %v1215
  %v1333 = vmul.f32 1.0, %v1332
  %v1334 = vrcp.pop %v1216
  %v1335 = vmul.f32 1.0, %v1334
  %v1336 = vrcp.pop %v1217
  %v1337 = vmul.f32 1.0, %v1336
  %v1338 = vrcp.pop %v1218
  %v1339 = vmul.f32 1.0, %v1338
  %v1340 = vrcp.pop %v1219
  %v1341 = vmul.f32 1.0, %v1340
  %v1342 = vrcp.pop %v1220
  %v1343 = vmul.f32 1.0, %v1342
  %v1344 = vrcp.pop %v1221
  %v1345 = vmul.f32 1.0, %v1344
  %v1346 = vrcp.pop %v1222
  %v1347 = vmul.f32 1.0, %v1346
  %v1348 = vrcp.pop %v1223
  %v1349 = vmul.f32 1.0, %v1348
  %v1350 = vrcp.pop %v1224
  %v1351 = vmul.f32 1.0, %v1350
  %v1352 = vrcp.pop %v1225
  %v1353 = vmul.f32 1.0, %v1352
  %1354 = vst [vmem:[%s4] sm:$0xff] %v1227
  %1355 = vst [vmem:[%s4 + $0x8] sm:$0xff] %v1229
  %1356 = vst [vmem:[%s4 + $0x10] sm:$0xff] %v1231
  %1357 = vst [vmem:[%s4 + $0x18] sm:$0xff] %v1233
  %1358 = vst [vmem:[%s4 + $0x20] sm:$0xff] %v1235
  %1359 = vst [vmem:[%s4 + $0x28] sm:$0xff] %v1237
  %1360 = vst [vmem:[%s4 + $0x30] sm:$0xff] %v1239
  %1361 = vst [vmem:[%s4 + $0x38] sm:$0xff] %v1241
  %1362 = vst [vmem:[%s4 + $0x40] sm:$0xff] %v1243
  %1363 = vst [vmem:[%s4 + $0x48] sm:$0xff] %v1245
  %1364 = vst [vmem:[%s4 + $0x50] sm:$0xff] %v1247
  %1365 = vst [vmem:[%s4 + $0x58] sm:$0xff] %v1249
  %1366 = vst [vmem:[%s4 + $0x60] sm:$0xff] %v1251
  %1367 = vst [vmem:[%s4 + $0x68] sm:$0xff] %v1253
  %1368 = vst [vmem:[%s4 + $0x70] sm:$0xff] %v1255
  %1369 = vst [vmem:[%s4 + $0x78] sm:$0xff] %v1257
  %1370 = vst [vmem:[%s4 + $0x80] sm:$0xff] %v1259
  %1371 = vst [vmem:[%s4 + $0x88] sm:$0xff] %v1261
  %1372 = vst [vmem:[%s4 + $0x90] sm:$0xff] %v1263
  %1373 = vst [vmem:[%s4 + $0x98] sm:$0xff] %v1265
  %1374 = vst [vmem:[%s4 + $0xa0] sm:$0xff] %v1267
  %1375 = vst [vmem:[%s4 + $0xa8] sm:$0xff] %v1269
  %1376 = vst [vmem:[%s4 + $0xb0] sm:$0xff] %v1271
  %1377 = vst [vmem:[%s4 + $0xb8] sm:$0xff] %v1273
  %1378 = vst [vmem:[%s4 + $0xc0] sm:$0xff] %v1275
  %1379 = vst [vmem:[%s4 + $0xc8] sm:$0xff] %v1277
  %1380 = vst [vmem:[%s4 + $0xd0] sm:$0xff] %v1279
  %1381 = vst [vmem:[%s4 + $0xd8] sm:$0xff] %v1281
  %1382 = vst [vmem:[%s4 + $0xe0] sm:$0xff] %v1283
  %1383 = vst [vmem:[%s4 + $0xe8] sm:$0xff] %v1285
  %1384 = vst [vmem:[%s4 + $0xf0] sm:$0xff] %v1287
  %1385 = vst [vmem:[%s4 + $0xf8] sm:$0xff] %v1289
  %1386 = vst [vmem:[%s4 + $0x100] sm:$0xff] %v1291
  %1387 = vst [vmem:[%s4 + $0x108] sm:$0xff] %v1293
  %1388 = vst [vmem:[%s4 + $0x110] sm:$0xff] %v1295
  %1389 = vst [vmem:[%s4 + $0x118] sm:$0xff] %v1297
  %1390 = vst [vmem:[%s4 + $0x120] sm:$0xff] %v1299
  %1391 = vst [vmem:[%s4 + $0x128] sm:$0xff] %v1301
  %1392 = vst [vmem:[%s4 + $0x130] sm:$0xff] %v1303
  %1393 = vst [vmem:[%s4 + $0x138] sm:$0xff] %v1305
  %1394 = vst [vmem:[%s4 + $0x140] sm:$0xff] %v1307
  %1395 = vst [vmem:[%s4 + $0x148] sm:$0xff] %v1309
  %1396 = vst [vmem:[%s4 + $0x150] sm:$0xff] %v1311
  %1397 = vst [vmem:[%s4 + $0x158] sm:$0xff] %v1313
  %1398 = vst [vmem:[%s4 + $0x160] sm:$0xff] %v1315
  %1399 = vst [vmem:[%s4 + $0x168] sm:$0xff] %v1317
  %1400 = vst [vmem:[%s4 + $0x170] sm:$0xff] %v1319
  %1401 = vst [vmem:[%s4 + $0x178] sm:$0xff] %v1321
  %1402 = vst [vmem:[%s4 + $0x180] sm:$0xff] %v1323
  %1403 = vst [vmem:[%s4 + $0x188] sm:$0xff] %v1325
  %1404 = vst [vmem:[%s4 + $0x190] sm:$0xff] %v1327
  %1405 = vst [vmem:[%s4 + $0x198] sm:$0xff] %v1329
  %1406 = vst [vmem:[%s4 + $0x1a0] sm:$0xff] %v1331
  %1407 = vst [vmem:[%s4 + $0x1a8] sm:$0xff] %v1333
  %1408 = vst [vmem:[%s4 + $0x1b0] sm:$0xff] %v1335
  %1409 = vst [vmem:[%s4 + $0x1b8] sm:$0xff] %v1337
  %1410 = vst [vmem:[%s4 + $0x1c0] sm:$0xff] %v1339
  %1411 = vst [vmem:[%s4 + $0x1c8] sm:$0xff] %v1341
  %1412 = vst [vmem:[%s4 + $0x1d0] sm:$0xff] %v1343
  %1413 = vst [vmem:[%s4 + $0x1d8] sm:$0xff] %v1345
  %1414 = vst [vmem:[%s4 + $0x1e0] sm:$0xff] %v1347
  %1415 = vst [vmem:[%s4 + $0x1e8] sm:$0xff] %v1349
  %1416 = vst [vmem:[%s4 + $0x1f0] sm:$0xff] %v1351
  %1417 = vst [vmem:[%s4 + $0x1f8] sm:$0xff] %v1353
  // Predicated region
  $region18: #{se_spp_net_forward.15} parent=0 // pred_check
    _
  $region19: #{se_spp_net_forward.15} parent=0 // pred_check_branch
    %1419 = sbr.rel (0) target = $region21
  $region20: #{se_spp_net_forward.15} parent=0 // pred_region
    _
  $region21: #{se_spp_net_forward.15} parent=0 // pred_fallthru
    _
  // Predicated region
  $region22: #{se_spp_net_forward.15} parent=0 // pred_check
    _
  $region23: #{se_spp_net_forward.15} parent=0 // pred_check_branch
    %1421 = sbr.rel (0) target = $region25
  $region24: #{se_spp_net_forward.15} parent=0 // pred_region
    _
  $region25: #{se_spp_net_forward.15} parent=0 // pred_fallthru
    _

</llo_original>
